<compile_context>
chip_gen: v6e
topology: v6e:2x2x1
jax: 0.10.0
libtpu: 0.0.40
codegen_flags: <defaults>
</compile_context>

<pallas_src>
import jax
import jax.numpy as jnp
from jax import lax
from jax.experimental import pallas as pl
from jax.experimental.pallas import tpu as pltpu


# ----------------------------- Pallas kernel -------------------------------

def _lucida_kernel(x_ref, w1c_ref, b1_ref, v2c_ref, b2_ref,
                   wf1_ref, bf1_ref, wf2_ref, bf2_ref, wf3_ref, bf3_ref,
                   o_ref):
    """Whole Lucida forward for one image.

    x_ref   : (1, 4, 8, 32) bf16 -- row-phase-split image; (phase p, row r)
              holds original image row 4*r + p.
    w1c_ref : (5, 32, 168) bf16  -- conv1, one (32 -> 168) matrix per kernel
              row kh; output lane j = b*84 + pw*6 + oc, conv column ow = 2*pw+b.
    b1_ref  : (1, 84) f32        -- conv1 bias tiled over pooled columns.
    v2c_ref : (3, 84, 192) bf16  -- conv2, one (84 -> 192) matrix per kernel
              row; input lane = w*6 + ic, output lane = b2*96 + pw2*16 + oc,
              conv column ow2 = 2*pw2 + b2.
    b2_ref  : (1, 96) f32        -- conv2 bias tiled over pooled columns.
    wf1_ref : (576, 120) bf16    -- fc1, rows permuted to the kernel's
              (row, pooled col, channel) flatten order.
    """
    f32 = jnp.float32
    dot = lambda a, b: jnp.dot(a, b, preferred_element_type=f32)

    x = x_ref[0]                                              # (4, 8, 32) bf16

    # ---- conv1 (5x5, 1->6) + ReLU + 2x2 max-pool ---------------------------
    # Output-row phase c2 produces conv1 output rows {4r + c2 : r = 0..6}.
    def conv1_rows(c2):
        acc = None
        for kh in range(5):
            p, s = (c2 + kh) % 4, (c2 + kh) // 4              # image row 4r+c2+kh
            t = dot(x[p, s:s + 7, :], w1c_ref[kh])            # (7, 168) f32
            acc = t if acc is None else acc + t
        return acc

    y0, y1, y2, y3 = (conv1_rows(c2) for c2 in range(4))
    hmax1 = lambda y: jnp.maximum(y[:, :84], y[:, 84:])       # pool over width parity
    b1 = b1_ref[...]
    # conv1 rows 4r / 4r+1 -> even pooled rows; rows 4r+2 / 4r+3 -> odd pooled rows.
    a1_e = jnp.maximum(jnp.maximum(hmax1(y0), hmax1(y1)) + b1, 0.0).astype(jnp.bfloat16)
    a1_o = jnp.maximum(jnp.maximum(hmax1(y2), hmax1(y3)) + b1, 0.0).astype(jnp.bfloat16)
    # a1_e / a1_o: (7, 84), lane = pooled_col*6 + channel.

    # ---- conv2 (3x3, 6->16) + ReLU + 2x2 max-pool --------------------------
    v0, v1, v2 = v2c_ref[0], v2c_ref[1], v2c_ref[2]
    z_e = dot(a1_e[0:6], v0) + dot(a1_o[0:6], v1) + dot(a1_e[1:7], v2)   # (6,192)
    z_o = dot(a1_o[0:6], v0) + dot(a1_e[1:7], v1) + dot(a1_o[1:7], v2)   # (6,192)
    hmax2 = lambda z: jnp.maximum(z[:, :96], z[:, 96:])
    a2 = jnp.maximum(jnp.maximum(hmax2(z_e), hmax2(z_o)) + b2_ref[...], 0.0
                     ).astype(jnp.bfloat16)                   # (6, 96)

    # ---- flatten (row-sliced, no in-kernel reshape) + fc1/fc2/fc3 ----------
    h = None
    for row in range(6):
        t = dot(a2[row:row + 1, :], wf1_ref[row * 96:(row + 1) * 96, :])  # (1,120)
        h = t if h is None else h + t
    h = jnp.maximum(h + bf1_ref[...], 0.0).astype(jnp.bfloat16)
    h = jnp.maximum(dot(h, wf2_ref[...]) + bf2_ref[...], 0.0).astype(jnp.bfloat16)
    logits = dot(h, wf3_ref[...]) + bf3_ref[...]              # (1, 10) f32

    # ---- softmax ------------------------------------------------------------
    zmax = jnp.max(logits, axis=-1, keepdims=True)
    e = jnp.exp(logits - zmax)
    s = jnp.sum(e, axis=-1, keepdims=True)
    inv = pl.reciprocal(s, approx=True)
    inv = inv * (2.0 - s * inv)          # one Newton step keeps sum(probs) == 1 tight
    o_ref[0] = e * inv


# ------------------------------ JAX wrappers --------------------------------

def _prepare_operands(params):
    """Host-side: fold the conv taps into per-kernel-row matmul weights whose
    output lanes are (parity branch, pooled column, channel), tile the biases to
    match, and permute fc1 to the kernel's flatten order.  Only *weights* are
    restructured -- activations are never inflated or written to HBM."""
    (c1w, c1b, c2w, c2b, f1w, f1b, f2w, f2b, f3w, f3b) = params
    f32, bf16 = jnp.float32, jnp.bfloat16

    # conv1: (5, 32, 168); lane j = b*84 + pw*6 + oc, conv column ow = 2*pw + b.
    kh = jnp.arange(5)[:, None, None]
    iw = jnp.arange(32)[None, :, None]
    j = jnp.arange(168)[None, None, :]
    oc, pw, b = j % 6, (j // 6) % 14, j // 84
    kw = iw - 2 * pw - b
    w1c = jnp.where((kw >= 0) & (kw <= 4),
                    c1w[:, 0, :, :].astype(f32)[oc, kh, jnp.clip(kw, 0, 4)],
                    0.0).astype(bf16)
    b1r = jnp.tile(c1b.astype(f32), 14).reshape(1, 84)

    # conv2: (3, 84, 192); row m = w*6 + ic, lane j2 = b2*96 + pw2*16 + oc,
    # conv column ow2 = 2*pw2 + b2.
    kh2 = jnp.arange(3)[:, None, None]
    m = jnp.arange(84)[None, :, None]
    j2 = jnp.arange(192)[None, None, :]
    ic, w = m % 6, m // 6
    oc2, pw2, b2 = j2 % 16, (j2 // 16) % 6, j2 // 96
    kw2 = w - 2 * pw2 - b2
    v2c = jnp.where((kw2 >= 0) & (kw2 <= 2),
                    c2w.astype(f32)[oc2, ic, kh2, jnp.clip(kw2, 0, 2)],
                    0.0).astype(bf16)
    b2r = jnp.tile(c2b.astype(f32), 6).reshape(1, 96)

    # fc1: torch flattens (16, 6, 6) channel-major (oc*36 + h*6 + w); the kernel
    # flattens its (6, 96) activation row-major (h*96 + w*16 + oc).
    f = jnp.arange(576)
    perm = (f % 16) * 36 + (f // 96) * 6 + ((f // 16) % 6)
    w1p = f1w[:, perm].T.astype(bf16)

    return (w1c, b1r, v2c, b2r,
            w1p, f1b.reshape(1, -1).astype(f32),
            f2w.T.astype(bf16), f2b.reshape(1, -1).astype(f32),
            f3w.T.astype(bf16), f3b.reshape(1, -1).astype(f32))


def lucida_forward(x_nchw, params):
    B, C, H, W = x_nchw.shape
    if (C, H, W) != (1, 32, 32):
        raise ValueError("Lucida expects (B, 1, 32, 32) inputs")
    ops = _prepare_operands(params)

    # Row-phase split of the raw image (pure permutation, no data inflation):
    # phase p, row r  <->  original image row 4*r + p.
    x = x_nchw[:, 0, :, :].astype(jnp.bfloat16)
    xp = jnp.stack([x[:, p::4, :] for p in range(4)], axis=1)      # (B, 4, 8, 32)

    def full(a):
        return pl.BlockSpec(a.shape, lambda i: (0,) * a.ndim)

    out = pl.pallas_call(
        _lucida_kernel,
        grid=(B,),
        in_specs=[pl.BlockSpec((1, 4, 8, 32), lambda i: (i, 0, 0, 0))]
                 + [full(a) for a in ops],
        out_specs=pl.BlockSpec((1, 1, 10), lambda i: (i, 0, 0)),
        out_shape=jax.ShapeDtypeStruct((B, 1, 10), jnp.float32),
        compiler_params=pltpu.CompilerParams(dimension_semantics=("parallel",)),
    )(xp, *ops)
    return out[:, 0, :]


# ----------------------- pure-JAX reference (f32) ---------------------------

def _reference_forward(x, params):
    (c1w, c1b, c2w, c2b, f1w, f1b, f2w, f2b, f3w, f3b) = params
    dn = ("NCHW", "OIHW", "NCHW")
    y = lax.conv_general_dilated(x, c1w, (1, 1), "VALID", dimension_numbers=dn)
    y = jnp.maximum(y + c1b[None, :, None, None], 0.0)
    y = lax.reduce_window(y, -jnp.inf, lax.max, (1, 1, 2, 2), (1, 1, 2, 2), "VALID")
    y = lax.conv_general_dilated(y, c2w, (1, 1), "VALID", dimension_numbers=dn)
    y = jnp.maximum(y + c2b[None, :, None, None], 0.0)
    y = lax.reduce_window(y, -jnp.inf, lax.max, (1, 1, 2, 2), (1, 1, 2, 2), "VALID")
    y = y.reshape(y.shape[0], -1)
    y = jnp.maximum(y @ f1w.T + f1b, 0.0)
    y = jnp.maximum(y @ f2w.T + f2b, 0.0)
    return jax.nn.softmax(y @ f3w.T + f3b, axis=-1)


# ------------------------- deterministic parameters -------------------------

def init_params(key):
    ks = jax.random.split(key, 10)

    def u(k, shape, fan_in):
        bound = 1.0 / (float(fan_in) ** 0.5)
        return jax.random.uniform(k, shape, jnp.float32, -bound, bound)

    c1w = u(ks[0], (6, 1, 5, 5), 25);   c1b = u(ks[1], (6,), 25)
    c2w = u(ks[2], (16, 6, 3, 3), 54);  c2b = u(ks[3], (16,), 54)
    f1w = u(ks[4], (120, 576), 576);    f1b = u(ks[5], (120,), 576)
    f2w = u(ks[6], (84, 120), 120);     f2b = u(ks[7], (84,), 120)
    f3w = u(ks[8], (10, 84), 84);       f3b = u(ks[9], (10,), 84)
    return (c1w, c1b, c2w, c2b, f1w, f1b, f2w, f2b, f3w, f3b)


if __name__ == "__main__":
    key = jax.random.PRNGKey(0)
    pkey, xkey = jax.random.split(key)
    params = init_params(pkey)
    # Input 32x32 so the flatten is exactly 16*6*6 as the module requires.
    x = jax.random.normal(xkey, (2, 1, 32, 32), jnp.float32)

    fwd = jax.jit(lucida_forward)
    out = jax.block_until_ready(fwd(x, params))

    ref = _reference_forward(x, params)
    assert out.shape == (2, 10)
    assert bool(jnp.all(jnp.isfinite(out)))
    assert bool(jnp.allclose(jnp.sum(out, axis=1), 1.0, atol=1e-3))
    assert float(jnp.max(jnp.abs(out - ref))) < 3e-2, float(jnp.max(jnp.abs(out - ref)))
    print("KERNEL_OK")
</pallas_src>

<mosaic_0001>
module attributes {stable_mosaic.version = 11 : i64} {
  func.func @_lucida_kernel(%arg0: i32, %arg1: memref<1x4x8x32xbf16, #tpu.memory_space<vmem>>, %arg2: memref<5x32x168xbf16, #tpu.memory_space<vmem>>, %arg3: memref<1x84xf32, #tpu.memory_space<vmem>>, %arg4: memref<3x84x192xbf16, #tpu.memory_space<vmem>>, %arg5: memref<1x96xf32, #tpu.memory_space<vmem>>, %arg6: memref<576x120xbf16, #tpu.memory_space<vmem>>, %arg7: memref<1x120xf32, #tpu.memory_space<vmem>>, %arg8: memref<120x84xbf16, #tpu.memory_space<vmem>>, %arg9: memref<1x84xf32, #tpu.memory_space<vmem>>, %arg10: memref<84x10xbf16, #tpu.memory_space<vmem>>, %arg11: memref<1x10xf32, #tpu.memory_space<vmem>>, %arg12: memref<1x1x10xf32, #tpu.memory_space<vmem>>) attributes {dimension_semantics = [#tpu.dimension_semantics<parallel>], iteration_bounds = array<i64: 2>, scalar_prefetch = 0 : i64, scratch_operands = 0 : i64, tpu.core_type = #tpu.core_type<tc>, window_params = [{transform_indices = @transform_0, window_bounds = array<i64: 1, 4, 8, 32>}, {pipeline_mode = #tpu.pipeline_mode<synchronous>, transform_indices = @transform_1, window_bounds = array<i64: 5, 32, 168>}, {pipeline_mode = #tpu.pipeline_mode<synchronous>, transform_indices = @transform_2, window_bounds = array<i64: 1, 84>}, {pipeline_mode = #tpu.pipeline_mode<synchronous>, transform_indices = @transform_3, window_bounds = array<i64: 3, 84, 192>}, {pipeline_mode = #tpu.pipeline_mode<synchronous>, transform_indices = @transform_4, window_bounds = array<i64: 1, 96>}, {pipeline_mode = #tpu.pipeline_mode<synchronous>, transform_indices = @transform_5, window_bounds = array<i64: 576, 120>}, {pipeline_mode = #tpu.pipeline_mode<synchronous>, transform_indices = @transform_6, window_bounds = array<i64: 1, 120>}, {pipeline_mode = #tpu.pipeline_mode<synchronous>, transform_indices = @transform_7, window_bounds = array<i64: 120, 84>}, {pipeline_mode = #tpu.pipeline_mode<synchronous>, transform_indices = @transform_8, window_bounds = array<i64: 1, 84>}, {pipeline_mode = #tpu.pipeline_mode<synchronous>, transform_indices = @transform_9, window_bounds = array<i64: 84, 10>}, {pipeline_mode = #tpu.pipeline_mode<synchronous>, transform_indices = @transform_10, window_bounds = array<i64: 1, 10>}, {transform_indices = @transform_11, window_bounds = array<i64: 1, 1, 10>}]} {
    %c0 = arith.constant 0 : index
    %c0_0 = arith.constant 0 : index
    %c0_1 = arith.constant 0 : index
    %c0_2 = arith.constant 0 : index
    %0 = vector.load %arg1[%c0, %c0_0, %c0_1, %c0_2] : memref<1x4x8x32xbf16, #tpu.memory_space<vmem>>, vector<1x4x8x32xbf16>
    %1 = vector.shape_cast %0 : vector<1x4x8x32xbf16> to vector<4x8x32xbf16>
    %2 = vector.extract_strided_slice %1 {offsets = [0, 0, 0], sizes = [1, 7, 32], strides = [1, 1, 1]} : vector<4x8x32xbf16> to vector<1x7x32xbf16>
    %3 = vector.shape_cast %2 : vector<1x7x32xbf16> to vector<7x32xbf16>
    %c0_3 = arith.constant 0 : index
    %c0_4 = arith.constant 0 : index
    %c0_5 = arith.constant 0 : index
    %4 = vector.load %arg2[%c0_3, %c0_4, %c0_5] : memref<5x32x168xbf16, #tpu.memory_space<vmem>>, vector<1x32x168xbf16>
    %5 = vector.shape_cast %4 : vector<1x32x168xbf16> to vector<32x168xbf16>
    %cst = arith.constant dense<0.000000e+00> : vector<7x168xf32>
    %6 = tpu.matmul %3, %5, %cst {dimension_numbers = #tpu.dot_dimension_numbers<[1], [0], [0], [1], [0, 0, 1, 1], [], []>} : vector<7x32xbf16>, vector<32x168xbf16>, vector<7x168xf32> -> vector<7x168xf32>
    %7 = vector.extract_strided_slice %1 {offsets = [1, 0, 0], sizes = [1, 7, 32], strides = [1, 1, 1]} : vector<4x8x32xbf16> to vector<1x7x32xbf16>
    %8 = vector.shape_cast %7 : vector<1x7x32xbf16> to vector<7x32xbf16>
    %c1 = arith.constant 1 : index
    %c0_6 = arith.constant 0 : index
    %c0_7 = arith.constant 0 : index
    %9 = vector.load %arg2[%c1, %c0_6, %c0_7] : memref<5x32x168xbf16, #tpu.memory_space<vmem>>, vector<1x32x168xbf16>
    %10 = vector.shape_cast %9 : vector<1x32x168xbf16> to vector<32x168xbf16>
    %cst_8 = arith.constant dense<0.000000e+00> : vector<7x168xf32>
    %11 = tpu.matmul %8, %10, %cst_8 {dimension_numbers = #tpu.dot_dimension_numbers<[1], [0], [0], [1], [0, 0, 1, 1], [], []>} : vector<7x32xbf16>, vector<32x168xbf16>, vector<7x168xf32> -> vector<7x168xf32>
    %12 = arith.addf %6, %11 : vector<7x168xf32>
    %13 = vector.extract_strided_slice %1 {offsets = [2, 0, 0], sizes = [1, 7, 32], strides = [1, 1, 1]} : vector<4x8x32xbf16> to vector<1x7x32xbf16>
    %14 = vector.shape_cast %13 : vector<1x7x32xbf16> to vector<7x32xbf16>
    %c2 = arith.constant 2 : index
    %c0_9 = arith.constant 0 : index
    %c0_10 = arith.constant 0 : index
    %15 = vector.load %arg2[%c2, %c0_9, %c0_10] : memref<5x32x168xbf16, #tpu.memory_space<vmem>>, vector<1x32x168xbf16>
    %16 = vector.shape_cast %15 : vector<1x32x168xbf16> to vector<32x168xbf16>
    %cst_11 = arith.constant dense<0.000000e+00> : vector<7x168xf32>
    %17 = tpu.matmul %14, %16, %cst_11 {dimension_numbers = #tpu.dot_dimension_numbers<[1], [0], [0], [1], [0, 0, 1, 1], [], []>} : vector<7x32xbf16>, vector<32x168xbf16>, vector<7x168xf32> -> vector<7x168xf32>
    %18 = arith.addf %12, %17 : vector<7x168xf32>
    %19 = vector.extract_strided_slice %1 {offsets = [3, 0, 0], sizes = [1, 7, 32], strides = [1, 1, 1]} : vector<4x8x32xbf16> to vector<1x7x32xbf16>
    %20 = vector.shape_cast %19 : vector<1x7x32xbf16> to vector<7x32xbf16>
    %c3 = arith.constant 3 : index
    %c0_12 = arith.constant 0 : index
    %c0_13 = arith.constant 0 : index
    %21 = vector.load %arg2[%c3, %c0_12, %c0_13] : memref<5x32x168xbf16, #tpu.memory_space<vmem>>, vector<1x32x168xbf16>
    %22 = vector.shape_cast %21 : vector<1x32x168xbf16> to vector<32x168xbf16>
    %cst_14 = arith.constant dense<0.000000e+00> : vector<7x168xf32>
    %23 = tpu.matmul %20, %22, %cst_14 {dimension_numbers = #tpu.dot_dimension_numbers<[1], [0], [0], [1], [0, 0, 1, 1], [], []>} : vector<7x32xbf16>, vector<32x168xbf16>, vector<7x168xf32> -> vector<7x168xf32>
    %24 = arith.addf %18, %23 : vector<7x168xf32>
    %25 = vector.extract_strided_slice %1 {offsets = [0, 1, 0], sizes = [1, 7, 32], strides = [1, 1, 1]} : vector<4x8x32xbf16> to vector<1x7x32xbf16>
    %26 = vector.shape_cast %25 : vector<1x7x32xbf16> to vector<7x32xbf16>
    %c4 = arith.constant 4 : index
    %c0_15 = arith.constant 0 : index
    %c0_16 = arith.constant 0 : index
    %27 = vector.load %arg2[%c4, %c0_15, %c0_16] : memref<5x32x168xbf16, #tpu.memory_space<vmem>>, vector<1x32x168xbf16>
    %28 = vector.shape_cast %27 : vector<1x32x168xbf16> to vector<32x168xbf16>
    %cst_17 = arith.constant dense<0.000000e+00> : vector<7x168xf32>
    %29 = tpu.matmul %26, %28, %cst_17 {dimension_numbers = #tpu.dot_dimension_numbers<[1], [0], [0], [1], [0, 0, 1, 1], [], []>} : vector<7x32xbf16>, vector<32x168xbf16>, vector<7x168xf32> -> vector<7x168xf32>
    %30 = arith.addf %24, %29 : vector<7x168xf32>
    %31 = vector.extract_strided_slice %1 {offsets = [1, 0, 0], sizes = [1, 7, 32], strides = [1, 1, 1]} : vector<4x8x32xbf16> to vector<1x7x32xbf16>
    %32 = vector.shape_cast %31 : vector<1x7x32xbf16> to vector<7x32xbf16>
    %c0_18 = arith.constant 0 : index
    %c0_19 = arith.constant 0 : index
    %c0_20 = arith.constant 0 : index
    %33 = vector.load %arg2[%c0_18, %c0_19, %c0_20] : memref<5x32x168xbf16, #tpu.memory_space<vmem>>, vector<1x32x168xbf16>
    %34 = vector.shape_cast %33 : vector<1x32x168xbf16> to vector<32x168xbf16>
    %cst_21 = arith.constant dense<0.000000e+00> : vector<7x168xf32>
    %35 = tpu.matmul %32, %34, %cst_21 {dimension_numbers = #tpu.dot_dimension_numbers<[1], [0], [0], [1], [0, 0, 1, 1], [], []>} : vector<7x32xbf16>, vector<32x168xbf16>, vector<7x168xf32> -> vector<7x168xf32>
    %36 = vector.extract_strided_slice %1 {offsets = [2, 0, 0], sizes = [1, 7, 32], strides = [1, 1, 1]} : vector<4x8x32xbf16> to vector<1x7x32xbf16>
    %37 = vector.shape_cast %36 : vector<1x7x32xbf16> to vector<7x32xbf16>
    %c1_22 = arith.constant 1 : index
    %c0_23 = arith.constant 0 : index
    %c0_24 = arith.constant 0 : index
    %38 = vector.load %arg2[%c1_22, %c0_23, %c0_24] : memref<5x32x168xbf16, #tpu.memory_space<vmem>>, vector<1x32x168xbf16>
    %39 = vector.shape_cast %38 : vector<1x32x168xbf16> to vector<32x168xbf16>
    %cst_25 = arith.constant dense<0.000000e+00> : vector<7x168xf32>
    %40 = tpu.matmul %37, %39, %cst_25 {dimension_numbers = #tpu.dot_dimension_numbers<[1], [0], [0], [1], [0, 0, 1, 1], [], []>} : vector<7x32xbf16>, vector<32x168xbf16>, vector<7x168xf32> -> vector<7x168xf32>
    %41 = arith.addf %35, %40 : vector<7x168xf32>
    %42 = vector.extract_strided_slice %1 {offsets = [3, 0, 0], sizes = [1, 7, 32], strides = [1, 1, 1]} : vector<4x8x32xbf16> to vector<1x7x32xbf16>
    %43 = vector.shape_cast %42 : vector<1x7x32xbf16> to vector<7x32xbf16>
    %c2_26 = arith.constant 2 : index
    %c0_27 = arith.constant 0 : index
    %c0_28 = arith.constant 0 : index
    %44 = vector.load %arg2[%c2_26, %c0_27, %c0_28] : memref<5x32x168xbf16, #tpu.memory_space<vmem>>, vector<1x32x168xbf16>
    %45 = vector.shape_cast %44 : vector<1x32x168xbf16> to vector<32x168xbf16>
    %cst_29 = arith.constant dense<0.000000e+00> : vector<7x168xf32>
    %46 = tpu.matmul %43, %45, %cst_29 {dimension_numbers = #tpu.dot_dimension_numbers<[1], [0], [0], [1], [0, 0, 1, 1], [], []>} : vector<7x32xbf16>, vector<32x168xbf16>, vector<7x168xf32> -> vector<7x168xf32>
    %47 = arith.addf %41, %46 : vector<7x168xf32>
    %48 = vector.extract_strided_slice %1 {offsets = [0, 1, 0], sizes = [1, 7, 32], strides = [1, 1, 1]} : vector<4x8x32xbf16> to vector<1x7x32xbf16>
    %49 = vector.shape_cast %48 : vector<1x7x32xbf16> to vector<7x32xbf16>
    %c3_30 = arith.constant 3 : index
    %c0_31 = arith.constant 0 : index
    %c0_32 = arith.constant 0 : index
    %50 = vector.load %arg2[%c3_30, %c0_31, %c0_32] : memref<5x32x168xbf16, #tpu.memory_space<vmem>>, vector<1x32x168xbf16>
    %51 = vector.shape_cast %50 : vector<1x32x168xbf16> to vector<32x168xbf16>
    %cst_33 = arith.constant dense<0.000000e+00> : vector<7x168xf32>
    %52 = tpu.matmul %49, %51, %cst_33 {dimension_numbers = #tpu.dot_dimension_numbers<[1], [0], [0], [1], [0, 0, 1, 1], [], []>} : vector<7x32xbf16>, vector<32x168xbf16>, vector<7x168xf32> -> vector<7x168xf32>
    %53 = arith.addf %47, %52 : vector<7x168xf32>
    %54 = vector.extract_strided_slice %1 {offsets = [1, 1, 0], sizes = [1, 7, 32], strides = [1, 1, 1]} : vector<4x8x32xbf16> to vector<1x7x32xbf16>
    %55 = vector.shape_cast %54 : vector<1x7x32xbf16> to vector<7x32xbf16>
    %c4_34 = arith.constant 4 : index
    %c0_35 = arith.constant 0 : index
    %c0_36 = arith.constant 0 : index
    %56 = vector.load %arg2[%c4_34, %c0_35, %c0_36] : memref<5x32x168xbf16, #tpu.memory_space<vmem>>, vector<1x32x168xbf16>
    %57 = vector.shape_cast %56 : vector<1x32x168xbf16> to vector<32x168xbf16>
    %cst_37 = arith.constant dense<0.000000e+00> : vector<7x168xf32>
    %58 = tpu.matmul %55, %57, %cst_37 {dimension_numbers = #tpu.dot_dimension_numbers<[1], [0], [0], [1], [0, 0, 1, 1], [], []>} : vector<7x32xbf16>, vector<32x168xbf16>, vector<7x168xf32> -> vector<7x168xf32>
    %59 = arith.addf %53, %58 : vector<7x168xf32>
    %60 = vector.extract_strided_slice %1 {offsets = [2, 0, 0], sizes = [1, 7, 32], strides = [1, 1, 1]} : vector<4x8x32xbf16> to vector<1x7x32xbf16>
    %61 = vector.shape_cast %60 : vector<1x7x32xbf16> to vector<7x32xbf16>
    %c0_38 = arith.constant 0 : index
    %c0_39 = arith.constant 0 : index
    %c0_40 = arith.constant 0 : index
    %62 = vector.load %arg2[%c0_38, %c0_39, %c0_40] : memref<5x32x168xbf16, #tpu.memory_space<vmem>>, vector<1x32x168xbf16>
    %63 = vector.shape_cast %62 : vector<1x32x168xbf16> to vector<32x168xbf16>
    %cst_41 = arith.constant dense<0.000000e+00> : vector<7x168xf32>
    %64 = tpu.matmul %61, %63, %cst_41 {dimension_numbers = #tpu.dot_dimension_numbers<[1], [0], [0], [1], [0, 0, 1, 1], [], []>} : vector<7x32xbf16>, vector<32x168xbf16>, vector<7x168xf32> -> vector<7x168xf32>
    %65 = vector.extract_strided_slice %1 {offsets = [3, 0, 0], sizes = [1, 7, 32], strides = [1, 1, 1]} : vector<4x8x32xbf16> to vector<1x7x32xbf16>
    %66 = vector.shape_cast %65 : vector<1x7x32xbf16> to vector<7x32xbf16>
    %c1_42 = arith.constant 1 : index
    %c0_43 = arith.constant 0 : index
    %c0_44 = arith.constant 0 : index
    %67 = vector.load %arg2[%c1_42, %c0_43, %c0_44] : memref<5x32x168xbf16, #tpu.memory_space<vmem>>, vector<1x32x168xbf16>
    %68 = vector.shape_cast %67 : vector<1x32x168xbf16> to vector<32x168xbf16>
    %cst_45 = arith.constant dense<0.000000e+00> : vector<7x168xf32>
    %69 = tpu.matmul %66, %68, %cst_45 {dimension_numbers = #tpu.dot_dimension_numbers<[1], [0], [0], [1], [0, 0, 1, 1], [], []>} : vector<7x32xbf16>, vector<32x168xbf16>, vector<7x168xf32> -> vector<7x168xf32>
    %70 = arith.addf %64, %69 : vector<7x168xf32>
    %71 = vector.extract_strided_slice %1 {offsets = [0, 1, 0], sizes = [1, 7, 32], strides = [1, 1, 1]} : vector<4x8x32xbf16> to vector<1x7x32xbf16>
    %72 = vector.shape_cast %71 : vector<1x7x32xbf16> to vector<7x32xbf16>
    %c2_46 = arith.constant 2 : index
    %c0_47 = arith.constant 0 : index
    %c0_48 = arith.constant 0 : index
    %73 = vector.load %arg2[%c2_46, %c0_47, %c0_48] : memref<5x32x168xbf16, #tpu.memory_space<vmem>>, vector<1x32x168xbf16>
    %74 = vector.shape_cast %73 : vector<1x32x168xbf16> to vector<32x168xbf16>
    %cst_49 = arith.constant dense<0.000000e+00> : vector<7x168xf32>
    %75 = tpu.matmul %72, %74, %cst_49 {dimension_numbers = #tpu.dot_dimension_numbers<[1], [0], [0], [1], [0, 0, 1, 1], [], []>} : vector<7x32xbf16>, vector<32x168xbf16>, vector<7x168xf32> -> vector<7x168xf32>
    %76 = arith.addf %70, %75 : vector<7x168xf32>
    %77 = vector.extract_strided_slice %1 {offsets = [1, 1, 0], sizes = [1, 7, 32], strides = [1, 1, 1]} : vector<4x8x32xbf16> to vector<1x7x32xbf16>
    %78 = vector.shape_cast %77 : vector<1x7x32xbf16> to vector<7x32xbf16>
    %c3_50 = arith.constant 3 : index
    %c0_51 = arith.constant 0 : index
    %c0_52 = arith.constant 0 : index
    %79 = vector.load %arg2[%c3_50, %c0_51, %c0_52] : memref<5x32x168xbf16, #tpu.memory_space<vmem>>, vector<1x32x168xbf16>
    %80 = vector.shape_cast %79 : vector<1x32x168xbf16> to vector<32x168xbf16>
    %cst_53 = arith.constant dense<0.000000e+00> : vector<7x168xf32>
    %81 = tpu.matmul %78, %80, %cst_53 {dimension_numbers = #tpu.dot_dimension_numbers<[1], [0], [0], [1], [0, 0, 1, 1], [], []>} : vector<7x32xbf16>, vector<32x168xbf16>, vector<7x168xf32> -> vector<7x168xf32>
    %82 = arith.addf %76, %81 : vector<7x168xf32>
    %83 = vector.extract_strided_slice %1 {offsets = [2, 1, 0], sizes = [1, 7, 32], strides = [1, 1, 1]} : vector<4x8x32xbf16> to vector<1x7x32xbf16>
    %84 = vector.shape_cast %83 : vector<1x7x32xbf16> to vector<7x32xbf16>
    %c4_54 = arith.constant 4 : index
    %c0_55 = arith.constant 0 : index
    %c0_56 = arith.constant 0 : index
    %85 = vector.load %arg2[%c4_54, %c0_55, %c0_56] : memref<5x32x168xbf16, #tpu.memory_space<vmem>>, vector<1x32x168xbf16>
    %86 = vector.shape_cast %85 : vector<1x32x168xbf16> to vector<32x168xbf16>
    %cst_57 = arith.constant dense<0.000000e+00> : vector<7x168xf32>
    %87 = tpu.matmul %84, %86, %cst_57 {dimension_numbers = #tpu.dot_dimension_numbers<[1], [0], [0], [1], [0, 0, 1, 1], [], []>} : vector<7x32xbf16>, vector<32x168xbf16>, vector<7x168xf32> -> vector<7x168xf32>
    %88 = arith.addf %82, %87 : vector<7x168xf32>
    %89 = vector.extract_strided_slice %1 {offsets = [3, 0, 0], sizes = [1, 7, 32], strides = [1, 1, 1]} : vector<4x8x32xbf16> to vector<1x7x32xbf16>
    %90 = vector.shape_cast %89 : vector<1x7x32xbf16> to vector<7x32xbf16>
    %c0_58 = arith.constant 0 : index
    %c0_59 = arith.constant 0 : index
    %c0_60 = arith.constant 0 : index
    %91 = vector.load %arg2[%c0_58, %c0_59, %c0_60] : memref<5x32x168xbf16, #tpu.memory_space<vmem>>, vector<1x32x168xbf16>
    %92 = vector.shape_cast %91 : vector<1x32x168xbf16> to vector<32x168xbf16>
    %cst_61 = arith.constant dense<0.000000e+00> : vector<7x168xf32>
    %93 = tpu.matmul %90, %92, %cst_61 {dimension_numbers = #tpu.dot_dimension_numbers<[1], [0], [0], [1], [0, 0, 1, 1], [], []>} : vector<7x32xbf16>, vector<32x168xbf16>, vector<7x168xf32> -> vector<7x168xf32>
    %94 = vector.extract_strided_slice %1 {offsets = [0, 1, 0], sizes = [1, 7, 32], strides = [1, 1, 1]} : vector<4x8x32xbf16> to vector<1x7x32xbf16>
    %95 = vector.shape_cast %94 : vector<1x7x32xbf16> to vector<7x32xbf16>
    %c1_62 = arith.constant 1 : index
    %c0_63 = arith.constant 0 : index
    %c0_64 = arith.constant 0 : index
    %96 = vector.load %arg2[%c1_62, %c0_63, %c0_64] : memref<5x32x168xbf16, #tpu.memory_space<vmem>>, vector<1x32x168xbf16>
    %97 = vector.shape_cast %96 : vector<1x32x168xbf16> to vector<32x168xbf16>
    %cst_65 = arith.constant dense<0.000000e+00> : vector<7x168xf32>
    %98 = tpu.matmul %95, %97, %cst_65 {dimension_numbers = #tpu.dot_dimension_numbers<[1], [0], [0], [1], [0, 0, 1, 1], [], []>} : vector<7x32xbf16>, vector<32x168xbf16>, vector<7x168xf32> -> vector<7x168xf32>
    %99 = arith.addf %93, %98 : vector<7x168xf32>
    %100 = vector.extract_strided_slice %1 {offsets = [1, 1, 0], sizes = [1, 7, 32], strides = [1, 1, 1]} : vector<4x8x32xbf16> to vector<1x7x32xbf16>
    %101 = vector.shape_cast %100 : vector<1x7x32xbf16> to vector<7x32xbf16>
    %c2_66 = arith.constant 2 : index
    %c0_67 = arith.constant 0 : index
    %c0_68 = arith.constant 0 : index
    %102 = vector.load %arg2[%c2_66, %c0_67, %c0_68] : memref<5x32x168xbf16, #tpu.memory_space<vmem>>, vector<1x32x168xbf16>
    %103 = vector.shape_cast %102 : vector<1x32x168xbf16> to vector<32x168xbf16>
    %cst_69 = arith.constant dense<0.000000e+00> : vector<7x168xf32>
    %104 = tpu.matmul %101, %103, %cst_69 {dimension_numbers = #tpu.dot_dimension_numbers<[1], [0], [0], [1], [0, 0, 1, 1], [], []>} : vector<7x32xbf16>, vector<32x168xbf16>, vector<7x168xf32> -> vector<7x168xf32>
    %105 = arith.addf %99, %104 : vector<7x168xf32>
    %106 = vector.extract_strided_slice %1 {offsets = [2, 1, 0], sizes = [1, 7, 32], strides = [1, 1, 1]} : vector<4x8x32xbf16> to vector<1x7x32xbf16>
    %107 = vector.shape_cast %106 : vector<1x7x32xbf16> to vector<7x32xbf16>
    %c3_70 = arith.constant 3 : index
    %c0_71 = arith.constant 0 : index
    %c0_72 = arith.constant 0 : index
    %108 = vector.load %arg2[%c3_70, %c0_71, %c0_72] : memref<5x32x168xbf16, #tpu.memory_space<vmem>>, vector<1x32x168xbf16>
    %109 = vector.shape_cast %108 : vector<1x32x168xbf16> to vector<32x168xbf16>
    %cst_73 = arith.constant dense<0.000000e+00> : vector<7x168xf32>
    %110 = tpu.matmul %107, %109, %cst_73 {dimension_numbers = #tpu.dot_dimension_numbers<[1], [0], [0], [1], [0, 0, 1, 1], [], []>} : vector<7x32xbf16>, vector<32x168xbf16>, vector<7x168xf32> -> vector<7x168xf32>
    %111 = arith.addf %105, %110 : vector<7x168xf32>
    %112 = vector.extract_strided_slice %1 {offsets = [3, 1, 0], sizes = [1, 7, 32], strides = [1, 1, 1]} : vector<4x8x32xbf16> to vector<1x7x32xbf16>
    %113 = vector.shape_cast %112 : vector<1x7x32xbf16> to vector<7x32xbf16>
    %c4_74 = arith.constant 4 : index
    %c0_75 = arith.constant 0 : index
    %c0_76 = arith.constant 0 : index
    %114 = vector.load %arg2[%c4_74, %c0_75, %c0_76] : memref<5x32x168xbf16, #tpu.memory_space<vmem>>, vector<1x32x168xbf16>
    %115 = vector.shape_cast %114 : vector<1x32x168xbf16> to vector<32x168xbf16>
    %cst_77 = arith.constant dense<0.000000e+00> : vector<7x168xf32>
    %116 = tpu.matmul %113, %115, %cst_77 {dimension_numbers = #tpu.dot_dimension_numbers<[1], [0], [0], [1], [0, 0, 1, 1], [], []>} : vector<7x32xbf16>, vector<32x168xbf16>, vector<7x168xf32> -> vector<7x168xf32>
    %117 = arith.addf %111, %116 : vector<7x168xf32>
    %c0_78 = arith.constant 0 : index
    %c0_79 = arith.constant 0 : index
    %118 = vector.load %arg3[%c0_78, %c0_79] : memref<1x84xf32, #tpu.memory_space<vmem>>, vector<1x84xf32>
    %119 = vector.extract_strided_slice %30 {offsets = [0, 0], sizes = [7, 84], strides = [1, 1]} : vector<7x168xf32> to vector<7x84xf32>
    %120 = vector.extract_strided_slice %30 {offsets = [0, 84], sizes = [7, 84], strides = [1, 1]} : vector<7x168xf32> to vector<7x84xf32>
    %121 = arith.maximumf %119, %120 : vector<7x84xf32>
    %122 = vector.extract_strided_slice %59 {offsets = [0, 0], sizes = [7, 84], strides = [1, 1]} : vector<7x168xf32> to vector<7x84xf32>
    %123 = vector.extract_strided_slice %59 {offsets = [0, 84], sizes = [7, 84], strides = [1, 1]} : vector<7x168xf32> to vector<7x84xf32>
    %124 = arith.maximumf %122, %123 : vector<7x84xf32>
    %125 = arith.maximumf %121, %124 : vector<7x84xf32>
    %126 = vector.broadcast %118 : vector<1x84xf32> to vector<7x84xf32>
    %127 = arith.addf %125, %126 : vector<7x84xf32>
    %cst_80 = arith.constant 0.000000e+00 : f32
    %128 = vector.broadcast %cst_80 : f32 to vector<7x84xf32>
    %129 = arith.maximumf %127, %128 : vector<7x84xf32>
    %130 = arith.truncf %129 : vector<7x84xf32> to vector<7x84xbf16>
    %131 = vector.extract_strided_slice %88 {offsets = [0, 0], sizes = [7, 84], strides = [1, 1]} : vector<7x168xf32> to vector<7x84xf32>
    %132 = vector.extract_strided_slice %88 {offsets = [0, 84], sizes = [7, 84], strides = [1, 1]} : vector<7x168xf32> to vector<7x84xf32>
    %133 = arith.maximumf %131, %132 : vector<7x84xf32>
    %134 = vector.extract_strided_slice %117 {offsets = [0, 0], sizes = [7, 84], strides = [1, 1]} : vector<7x168xf32> to vector<7x84xf32>
    %135 = vector.extract_strided_slice %117 {offsets = [0, 84], sizes = [7, 84], strides = [1, 1]} : vector<7x168xf32> to vector<7x84xf32>
    %136 = arith.maximumf %134, %135 : vector<7x84xf32>
    %137 = arith.maximumf %133, %136 : vector<7x84xf32>
    %138 = vector.broadcast %118 : vector<1x84xf32> to vector<7x84xf32>
    %139 = arith.addf %137, %138 : vector<7x84xf32>
    %cst_81 = arith.constant 0.000000e+00 : f32
    %140 = vector.broadcast %cst_81 : f32 to vector<7x84xf32>
    %141 = arith.maximumf %139, %140 : vector<7x84xf32>
    %142 = arith.truncf %141 : vector<7x84xf32> to vector<7x84xbf16>
    %c0_82 = arith.constant 0 : index
    %c0_83 = arith.constant 0 : index
    %c0_84 = arith.constant 0 : index
    %143 = vector.load %arg4[%c0_82, %c0_83, %c0_84] : memref<3x84x192xbf16, #tpu.memory_space<vmem>>, vector<1x84x192xbf16>
    %144 = vector.shape_cast %143 : vector<1x84x192xbf16> to vector<84x192xbf16>
    %c1_85 = arith.constant 1 : index
    %c0_86 = arith.constant 0 : index
    %c0_87 = arith.constant 0 : index
    %145 = vector.load %arg4[%c1_85, %c0_86, %c0_87] : memref<3x84x192xbf16, #tpu.memory_space<vmem>>, vector<1x84x192xbf16>
    %146 = vector.shape_cast %145 : vector<1x84x192xbf16> to vector<84x192xbf16>
    %c2_88 = arith.constant 2 : index
    %c0_89 = arith.constant 0 : index
    %c0_90 = arith.constant 0 : index
    %147 = vector.load %arg4[%c2_88, %c0_89, %c0_90] : memref<3x84x192xbf16, #tpu.memory_space<vmem>>, vector<1x84x192xbf16>
    %148 = vector.shape_cast %147 : vector<1x84x192xbf16> to vector<84x192xbf16>
    %149 = vector.extract_strided_slice %130 {offsets = [0, 0], sizes = [6, 84], strides = [1, 1]} : vector<7x84xbf16> to vector<6x84xbf16>
    %cst_91 = arith.constant dense<0.000000e+00> : vector<6x192xf32>
    %150 = tpu.matmul %149, %144, %cst_91 {dimension_numbers = #tpu.dot_dimension_numbers<[1], [0], [0], [1], [0, 0, 1, 1], [], []>} : vector<6x84xbf16>, vector<84x192xbf16>, vector<6x192xf32> -> vector<6x192xf32>
    %151 = vector.extract_strided_slice %142 {offsets = [0, 0], sizes = [6, 84], strides = [1, 1]} : vector<7x84xbf16> to vector<6x84xbf16>
    %cst_92 = arith.constant dense<0.000000e+00> : vector<6x192xf32>
    %152 = tpu.matmul %151, %146, %cst_92 {dimension_numbers = #tpu.dot_dimension_numbers<[1], [0], [0], [1], [0, 0, 1, 1], [], []>} : vector<6x84xbf16>, vector<84x192xbf16>, vector<6x192xf32> -> vector<6x192xf32>
    %153 = arith.addf %150, %152 : vector<6x192xf32>
    %154 = vector.extract_strided_slice %130 {offsets = [1, 0], sizes = [6, 84], strides = [1, 1]} : vector<7x84xbf16> to vector<6x84xbf16>
    %cst_93 = arith.constant dense<0.000000e+00> : vector<6x192xf32>
    %155 = tpu.matmul %154, %148, %cst_93 {dimension_numbers = #tpu.dot_dimension_numbers<[1], [0], [0], [1], [0, 0, 1, 1], [], []>} : vector<6x84xbf16>, vector<84x192xbf16>, vector<6x192xf32> -> vector<6x192xf32>
    %156 = arith.addf %153, %155 : vector<6x192xf32>
    %157 = vector.extract_strided_slice %142 {offsets = [0, 0], sizes = [6, 84], strides = [1, 1]} : vector<7x84xbf16> to vector<6x84xbf16>
    %cst_94 = arith.constant dense<0.000000e+00> : vector<6x192xf32>
    %158 = tpu.matmul %157, %144, %cst_94 {dimension_numbers = #tpu.dot_dimension_numbers<[1], [0], [0], [1], [0, 0, 1, 1], [], []>} : vector<6x84xbf16>, vector<84x192xbf16>, vector<6x192xf32> -> vector<6x192xf32>
    %159 = vector.extract_strided_slice %130 {offsets = [1, 0], sizes = [6, 84], strides = [1, 1]} : vector<7x84xbf16> to vector<6x84xbf16>
    %cst_95 = arith.constant dense<0.000000e+00> : vector<6x192xf32>
    %160 = tpu.matmul %159, %146, %cst_95 {dimension_numbers = #tpu.dot_dimension_numbers<[1], [0], [0], [1], [0, 0, 1, 1], [], []>} : vector<6x84xbf16>, vector<84x192xbf16>, vector<6x192xf32> -> vector<6x192xf32>
    %161 = arith.addf %158, %160 : vector<6x192xf32>
    %162 = vector.extract_strided_slice %142 {offsets = [1, 0], sizes = [6, 84], strides = [1, 1]} : vector<7x84xbf16> to vector<6x84xbf16>
    %cst_96 = arith.constant dense<0.000000e+00> : vector<6x192xf32>
    %163 = tpu.matmul %162, %148, %cst_96 {dimension_numbers = #tpu.dot_dimension_numbers<[1], [0], [0], [1], [0, 0, 1, 1], [], []>} : vector<6x84xbf16>, vector<84x192xbf16>, vector<6x192xf32> -> vector<6x192xf32>
    %164 = arith.addf %161, %163 : vector<6x192xf32>
    %165 = vector.extract_strided_slice %156 {offsets = [0, 0], sizes = [6, 96], strides = [1, 1]} : vector<6x192xf32> to vector<6x96xf32>
    %166 = vector.extract_strided_slice %156 {offsets = [0, 96], sizes = [6, 96], strides = [1, 1]} : vector<6x192xf32> to vector<6x96xf32>
    %167 = arith.maximumf %165, %166 : vector<6x96xf32>
    %168 = vector.extract_strided_slice %164 {offsets = [0, 0], sizes = [6, 96], strides = [1, 1]} : vector<6x192xf32> to vector<6x96xf32>
    %169 = vector.extract_strided_slice %164 {offsets = [0, 96], sizes = [6, 96], strides = [1, 1]} : vector<6x192xf32> to vector<6x96xf32>
    %170 = arith.maximumf %168, %169 : vector<6x96xf32>
    %171 = arith.maximumf %167, %170 : vector<6x96xf32>
    %c0_97 = arith.constant 0 : index
    %c0_98 = arith.constant 0 : index
    %172 = vector.load %arg5[%c0_97, %c0_98] : memref<1x96xf32, #tpu.memory_space<vmem>>, vector<1x96xf32>
    %173 = vector.broadcast %172 : vector<1x96xf32> to vector<6x96xf32>
    %174 = arith.addf %171, %173 : vector<6x96xf32>
    %cst_99 = arith.constant 0.000000e+00 : f32
    %175 = vector.broadcast %cst_99 : f32 to vector<6x96xf32>
    %176 = arith.maximumf %174, %175 : vector<6x96xf32>
    %177 = arith.truncf %176 : vector<6x96xf32> to vector<6x96xbf16>
    %178 = vector.extract_strided_slice %177 {offsets = [0, 0], sizes = [1, 96], strides = [1, 1]} : vector<6x96xbf16> to vector<1x96xbf16>
    %c0_100 = arith.constant 0 : index
    %c0_101 = arith.constant 0 : index
    %179 = vector.load %arg6[%c0_100, %c0_101] : memref<576x120xbf16, #tpu.memory_space<vmem>>, vector<96x120xbf16>
    %cst_102 = arith.constant dense<0.000000e+00> : vector<1x120xf32>
    %180 = tpu.matmul %178, %179, %cst_102 {dimension_numbers = #tpu.dot_dimension_numbers<[1], [0], [0], [1], [0, 0, 1, 1], [], []>} : vector<1x96xbf16>, vector<96x120xbf16>, vector<1x120xf32> -> vector<1x120xf32>
    %181 = vector.extract_strided_slice %177 {offsets = [1, 0], sizes = [1, 96], strides = [1, 1]} : vector<6x96xbf16> to vector<1x96xbf16>
    %c96 = arith.constant 96 : index
    %c0_103 = arith.constant 0 : index
    %182 = vector.load %arg6[%c96, %c0_103] : memref<576x120xbf16, #tpu.memory_space<vmem>>, vector<96x120xbf16>
    %cst_104 = arith.constant dense<0.000000e+00> : vector<1x120xf32>
    %183 = tpu.matmul %181, %182, %cst_104 {dimension_numbers = #tpu.dot_dimension_numbers<[1], [0], [0], [1], [0, 0, 1, 1], [], []>} : vector<1x96xbf16>, vector<96x120xbf16>, vector<1x120xf32> -> vector<1x120xf32>
    %184 = arith.addf %180, %183 : vector<1x120xf32>
    %185 = vector.extract_strided_slice %177 {offsets = [2, 0], sizes = [1, 96], strides = [1, 1]} : vector<6x96xbf16> to vector<1x96xbf16>
    %c192 = arith.constant 192 : index
    %c0_105 = arith.constant 0 : index
    %186 = vector.load %arg6[%c192, %c0_105] : memref<576x120xbf16, #tpu.memory_space<vmem>>, vector<96x120xbf16>
    %cst_106 = arith.constant dense<0.000000e+00> : vector<1x120xf32>
    %187 = tpu.matmul %185, %186, %cst_106 {dimension_numbers = #tpu.dot_dimension_numbers<[1], [0], [0], [1], [0, 0, 1, 1], [], []>} : vector<1x96xbf16>, vector<96x120xbf16>, vector<1x120xf32> -> vector<1x120xf32>
    %188 = arith.addf %184, %187 : vector<1x120xf32>
    %189 = vector.extract_strided_slice %177 {offsets = [3, 0], sizes = [1, 96], strides = [1, 1]} : vector<6x96xbf16> to vector<1x96xbf16>
    %c288 = arith.constant 288 : index
    %c0_107 = arith.constant 0 : index
    %190 = vector.load %arg6[%c288, %c0_107] : memref<576x120xbf16, #tpu.memory_space<vmem>>, vector<96x120xbf16>
    %cst_108 = arith.constant dense<0.000000e+00> : vector<1x120xf32>
    %191 = tpu.matmul %189, %190, %cst_108 {dimension_numbers = #tpu.dot_dimension_numbers<[1], [0], [0], [1], [0, 0, 1, 1], [], []>} : vector<1x96xbf16>, vector<96x120xbf16>, vector<1x120xf32> -> vector<1x120xf32>
    %192 = arith.addf %188, %191 : vector<1x120xf32>
    %193 = vector.extract_strided_slice %177 {offsets = [4, 0], sizes = [1, 96], strides = [1, 1]} : vector<6x96xbf16> to vector<1x96xbf16>
    %c384 = arith.constant 384 : index
    %c0_109 = arith.constant 0 : index
    %194 = vector.load %arg6[%c384, %c0_109] : memref<576x120xbf16, #tpu.memory_space<vmem>>, vector<96x120xbf16>
    %cst_110 = arith.constant dense<0.000000e+00> : vector<1x120xf32>
    %195 = tpu.matmul %193, %194, %cst_110 {dimension_numbers = #tpu.dot_dimension_numbers<[1], [0], [0], [1], [0, 0, 1, 1], [], []>} : vector<1x96xbf16>, vector<96x120xbf16>, vector<1x120xf32> -> vector<1x120xf32>
    %196 = arith.addf %192, %195 : vector<1x120xf32>
    %197 = vector.extract_strided_slice %177 {offsets = [5, 0], sizes = [1, 96], strides = [1, 1]} : vector<6x96xbf16> to vector<1x96xbf16>
    %c480 = arith.constant 480 : index
    %c0_111 = arith.constant 0 : index
    %198 = vector.load %arg6[%c480, %c0_111] : memref<576x120xbf16, #tpu.memory_space<vmem>>, vector<96x120xbf16>
    %cst_112 = arith.constant dense<0.000000e+00> : vector<1x120xf32>
    %199 = tpu.matmul %197, %198, %cst_112 {dimension_numbers = #tpu.dot_dimension_numbers<[1], [0], [0], [1], [0, 0, 1, 1], [], []>} : vector<1x96xbf16>, vector<96x120xbf16>, vector<1x120xf32> -> vector<1x120xf32>
    %200 = arith.addf %196, %199 : vector<1x120xf32>
    %c0_113 = arith.constant 0 : index
    %c0_114 = arith.constant 0 : index
    %201 = vector.load %arg7[%c0_113, %c0_114] : memref<1x120xf32, #tpu.memory_space<vmem>>, vector<1x120xf32>
    %202 = arith.addf %200, %201 : vector<1x120xf32>
    %cst_115 = arith.constant 0.000000e+00 : f32
    %203 = vector.broadcast %cst_115 : f32 to vector<1x120xf32>
    %204 = arith.maximumf %202, %203 : vector<1x120xf32>
    %205 = arith.truncf %204 : vector<1x120xf32> to vector<1x120xbf16>
    %c0_116 = arith.constant 0 : index
    %c0_117 = arith.constant 0 : index
    %206 = vector.load %arg8[%c0_116, %c0_117] : memref<120x84xbf16, #tpu.memory_space<vmem>>, vector<120x84xbf16>
    %cst_118 = arith.constant dense<0.000000e+00> : vector<1x84xf32>
    %207 = tpu.matmul %205, %206, %cst_118 {dimension_numbers = #tpu.dot_dimension_numbers<[1], [0], [0], [1], [0, 0, 1, 1], [], []>} : vector<1x120xbf16>, vector<120x84xbf16>, vector<1x84xf32> -> vector<1x84xf32>
    %c0_119 = arith.constant 0 : index
    %c0_120 = arith.constant 0 : index
    %208 = vector.load %arg9[%c0_119, %c0_120] : memref<1x84xf32, #tpu.memory_space<vmem>>, vector<1x84xf32>
    %209 = arith.addf %207, %208 : vector<1x84xf32>
    %cst_121 = arith.constant 0.000000e+00 : f32
    %210 = vector.broadcast %cst_121 : f32 to vector<1x84xf32>
    %211 = arith.maximumf %209, %210 : vector<1x84xf32>
    %212 = arith.truncf %211 : vector<1x84xf32> to vector<1x84xbf16>
    %c0_122 = arith.constant 0 : index
    %c0_123 = arith.constant 0 : index
    %213 = vector.load %arg10[%c0_122, %c0_123] : memref<84x10xbf16, #tpu.memory_space<vmem>>, vector<84x10xbf16>
    %cst_124 = arith.constant dense<0.000000e+00> : vector<1x10xf32>
    %214 = tpu.matmul %212, %213, %cst_124 {dimension_numbers = #tpu.dot_dimension_numbers<[1], [0], [0], [1], [0, 0, 1, 1], [], []>} : vector<1x84xbf16>, vector<84x10xbf16>, vector<1x10xf32> -> vector<1x10xf32>
    %c0_125 = arith.constant 0 : index
    %c0_126 = arith.constant 0 : index
    %215 = vector.load %arg11[%c0_125, %c0_126] : memref<1x10xf32, #tpu.memory_space<vmem>>, vector<1x10xf32>
    %216 = arith.addf %214, %215 : vector<1x10xf32>
    %cst_127 = arith.constant dense<0xFF800000> : vector<1xf32>
    %217 = vector.multi_reduction <maximumf>, %216, %cst_127 [1] : vector<1x10xf32> to vector<1xf32>
    %218 = vector.shape_cast %217 : vector<1xf32> to vector<1x1xf32>
    %219 = vector.broadcast %218 : vector<1x1xf32> to vector<1x10xf32>
    %220 = arith.subf %216, %219 : vector<1x10xf32>
    %221 = math.exp %220 : vector<1x10xf32>
    %cst_128 = arith.constant dense<0.000000e+00> : vector<1xf32>
    %222 = vector.multi_reduction <add>, %221, %cst_128 [1] : vector<1x10xf32> to vector<1xf32>
    %223 = vector.shape_cast %222 : vector<1xf32> to vector<1x1xf32>
    %224 = tpu.reciprocal %223 {approx = true} : vector<1x1xf32> -> vector<1x1xf32>
    %225 = arith.mulf %223, %224 : vector<1x1xf32>
    %cst_129 = arith.constant 2.000000e+00 : f32
    %226 = vector.broadcast %cst_129 : f32 to vector<1x1xf32>
    %227 = arith.subf %226, %225 : vector<1x1xf32>
    %228 = arith.mulf %224, %227 : vector<1x1xf32>
    %229 = vector.broadcast %228 : vector<1x1xf32> to vector<1x10xf32>
    %230 = arith.mulf %221, %229 : vector<1x10xf32>
    %c0_130 = arith.constant 0 : index
    %c0_131 = arith.constant 0 : index
    %c0_132 = arith.constant 0 : index
    %231 = vector.load %arg12[%c0_130, %c0_131, %c0_132] : memref<1x1x10xf32, #tpu.memory_space<vmem>>, vector<1x1x10xf32>
    %232 = vector.shape_cast %231 : vector<1x1x10xf32> to vector<1x10xf32>
    %233 = vector.shape_cast %230 : vector<1x10xf32> to vector<1x1x10xf32>
    tpu.vector_store %arg12[%c0_130, %c0_131, %c0_132], %233 {strides = array<i32>} : memref<1x1x10xf32, #tpu.memory_space<vmem>>, vector<1x1x10xf32>,
    return
  }
  func.func @transform_0(%arg0: i32) -> (i32, i32, i32, i32) {
    %c0_i32 = arith.constant 0 : i32
    %c0_i32_0 = arith.constant 0 : i32
    %c0_i32_1 = arith.constant 0 : i32
    %c0_i32_2 = arith.constant 0 : i32
    return %arg0, %c0_i32, %c0_i32_0, %c0_i32_1 : i32, i32, i32, i32
  }
  func.func @transform_1(%arg0: i32) -> (i32, i32, i32) {
    %c0_i32 = arith.constant 0 : i32
    %c0_i32_0 = arith.constant 0 : i32
    %c0_i32_1 = arith.constant 0 : i32
    %c0_i32_2 = arith.constant 0 : i32
    return %c0_i32, %c0_i32_0, %c0_i32_1 : i32, i32, i32
  }
  func.func @transform_2(%arg0: i32) -> (i32, i32) {
    %c0_i32 = arith.constant 0 : i32
    %c0_i32_0 = arith.constant 0 : i32
    %c0_i32_1 = arith.constant 0 : i32
    return %c0_i32, %c0_i32_0 : i32, i32
  }
  func.func @transform_3(%arg0: i32) -> (i32, i32, i32) {
    %c0_i32 = arith.constant 0 : i32
    %c0_i32_0 = arith.constant 0 : i32
    %c0_i32_1 = arith.constant 0 : i32
    %c0_i32_2 = arith.constant 0 : i32
    return %c0_i32, %c0_i32_0, %c0_i32_1 : i32, i32, i32
  }
  func.func @transform_4(%arg0: i32) -> (i32, i32) {
    %c0_i32 = arith.constant 0 : i32
    %c0_i32_0 = arith.constant 0 : i32
    %c0_i32_1 = arith.constant 0 : i32
    return %c0_i32, %c0_i32_0 : i32, i32
  }
  func.func @transform_5(%arg0: i32) -> (i32, i32) {
    %c0_i32 = arith.constant 0 : i32
    %c0_i32_0 = arith.constant 0 : i32
    %c0_i32_1 = arith.constant 0 : i32
    return %c0_i32, %c0_i32_0 : i32, i32
  }
  func.func @transform_6(%arg0: i32) -> (i32, i32) {
    %c0_i32 = arith.constant 0 : i32
    %c0_i32_0 = arith.constant 0 : i32
    %c0_i32_1 = arith.constant 0 : i32
    return %c0_i32, %c0_i32_0 : i32, i32
  }
  func.func @transform_7(%arg0: i32) -> (i32, i32) {
    %c0_i32 = arith.constant 0 : i32
    %c0_i32_0 = arith.constant 0 : i32
    %c0_i32_1 = arith.constant 0 : i32
    return %c0_i32, %c0_i32_0 : i32, i32
  }
  func.func @transform_8(%arg0: i32) -> (i32, i32) {
    %c0_i32 = arith.constant 0 : i32
    %c0_i32_0 = arith.constant 0 : i32
    %c0_i32_1 = arith.constant 0 : i32
    return %c0_i32, %c0_i32_0 : i32, i32
  }
  func.func @transform_9(%arg0: i32) -> (i32, i32) {
    %c0_i32 = arith.constant 0 : i32
    %c0_i32_0 = arith.constant 0 : i32
    %c0_i32_1 = arith.constant 0 : i32
    return %c0_i32, %c0_i32_0 : i32, i32
  }
  func.func @transform_10(%arg0: i32) -> (i32, i32) {
    %c0_i32 = arith.constant 0 : i32
    %c0_i32_0 = arith.constant 0 : i32
    %c0_i32_1 = arith.constant 0 : i32
    return %c0_i32, %c0_i32_0 : i32, i32
  }
  func.func @transform_11(%arg0: i32) -> (i32, i32, i32) {
    %c0_i32 = arith.constant 0 : i32
    %c0_i32_0 = arith.constant 0 : i32
    %c0_i32_1 = arith.constant 0 : i32
    return %arg0, %c0_i32, %c0_i32_0 : i32, i32, i32
  }
}

</mosaic_0001>

<llo_original>
// kernel: tile.13
$region0: #{tile.13}
  #allocation0 [shape = 's32[1]{0}', space=sflag, size = 0x4, scoped, tag = 'scoped memory for tile.13']
  %s0 = inlined_call_operand.vmem [shape: f32[6], index: 0, kind: input, shape index: {}]
  %s1 = inlined_call_operand.vmem [shape: f32[14,6], index: 1, kind: output, shape index: {}]
  // Predicated region
  $region2: #{tile.13} parent=0 // pred_check
    _
  $region3: #{tile.13} parent=0 // pred_check_branch
    %3 = sbr.rel (0) target = $region5
  $region4: #{tile.13} parent=0 // pred_region
    _
  $region5: #{tile.13} parent=0 // pred_fallthru
    _
  %v4 = vld [vmem:[%s0] ss:$0 sm:$0xff]
  %5 = vst [vmem:[%s1] sm:$0xff] %v4
  %s6 = scalar_lea.vmem %s1, 8
  %7 = vst [vmem:[%s6] sm:$0xff] %v4

// kernel: tile.14
$region0: #{tile.14}
  %s0 = inlined_call_operand.vmem [shape: f32[14,6], index: 0, kind: input, shape index: {}]
  %s1 = inlined_call_operand.vmem [shape: f32[1,84], index: 1, kind: output, shape index: {}]
  $region1: #{tile.14} parent=0
    #allocation0 [shape = 'u8[4096]{0}', space=vmem, size = 0x1000, scoped, tag = 'scoped mem for output reshape']
    %v2 = vld [vmem:[%s0] sm:$0x1]
    %vm3 = vcmask 48128
    %4 = vst.msk [vmem:[#allocation0] sm:$0x1] %vm3, %v2
    %s5 = scalar_lea.vmem %s0, 13
    %v6 = vld [vmem:[%s5] sm:$0x1]
    %7 = vrot.lane.b32.xlu0 %v6, 78
    %v8 = vpop.permute.xlu0 %7
    %vm9 = vcmask 687728
    %10 = vst.msk [vmem:[#allocation0] sm:$0x1] %vm9, %v8
    %s11 = scalar_lea.vmem %s0, 12
    %v12 = vld [vmem:[%s11] sm:$0x1]
    %13 = vrot.lane.b32.xlu0 %v12, 72
    %v14 = vpop.permute.xlu0 %13
    %vm15 = vcmask 638528
    %16 = vst.msk [vmem:[#allocation0] sm:$0x1] %vm15, %v14
    %s17 = scalar_lea.vmem %s0, 11
    %v18 = vld [vmem:[%s17] sm:$0x1]
    %19 = vrot.lane.b32.xlu0 %v18, 66
    %v20 = vpop.permute.xlu0 %19
    %vm21 = vcmask 589328
    %22 = vst.msk [vmem:[#allocation0] sm:$0x1] %vm21, %v20
    %s23 = scalar_lea.vmem %s0, 10
    %v24 = vld [vmem:[%s23] sm:$0x1]
    %25 = vrot.lane.b32.xlu0 %v24, 60
    %v26 = vpop.permute.xlu0 %25
    %vm27 = vcmask 540128
    %28 = vst.msk [vmem:[#allocation0] sm:$0x1] %vm27, %v26
    %s29 = scalar_lea.vmem %s0, 9
    %v30 = vld [vmem:[%s29] sm:$0x1]
    %31 = vrot.lane.b32.xlu0 %v30, 54
    %v32 = vpop.permute.xlu0 %31
    %vm33 = vcmask 490928
    %34 = vst.msk [vmem:[#allocation0] sm:$0x1] %vm33, %v32
    %s35 = scalar_lea.vmem %s0, 8
    %v36 = vld [vmem:[%s35] sm:$0x1]
    %37 = vrot.lane.b32.xlu0 %v36, 48
    %v38 = vpop.permute.xlu0 %37
    %vm39 = vcmask 441728
    %40 = vst.msk [vmem:[#allocation0] sm:$0x1] %vm39, %v38
    %s41 = scalar_lea.vmem %s0, 7
    %v42 = vld [vmem:[%s41] sm:$0x1]
    %43 = vrot.lane.b32.xlu0 %v42, 42
    %v44 = vpop.permute.xlu0 %43
    %vm45 = vcmask 392528
    %46 = vst.msk [vmem:[#allocation0] sm:$0x1] %vm45, %v44
    %s47 = scalar_lea.vmem %s0, 6
    %v48 = vld [vmem:[%s47] sm:$0x1]
    %49 = vrot.lane.b32.xlu0 %v48, 36
    %v50 = vpop.permute.xlu0 %49
    %vm51 = vcmask 343328
    %52 = vst.msk [vmem:[#allocation0] sm:$0x1] %vm51, %v50
    %s53 = scalar_lea.vmem %s0, 5
    %v54 = vld [vmem:[%s53] sm:$0x1]
    %55 = vrot.lane.b32.xlu0 %v54, 30
    %v56 = vpop.permute.xlu0 %55
    %vm57 = vcmask 294128
    %58 = vst.msk [vmem:[#allocation0] sm:$0x1] %vm57, %v56
    %s59 = scalar_lea.vmem %s0, 4
    %v60 = vld [vmem:[%s59] sm:$0x1]
    %61 = vrot.lane.b32.xlu0 %v60, 24
    %v62 = vpop.permute.xlu0 %61
    %vm63 = vcmask 244928
    %64 = vst.msk [vmem:[#allocation0] sm:$0x1] %vm63, %v62
    %s65 = scalar_lea.vmem %s0, 3
    %v66 = vld [vmem:[%s65] sm:$0x1]
    %67 = vrot.lane.b32.xlu0 %v66, 18
    %v68 = vpop.permute.xlu0 %67
    %vm69 = vcmask 195728
    %70 = vst.msk [vmem:[#allocation0] sm:$0x1] %vm69, %v68
    %s71 = scalar_lea.vmem %s0, 2
    %v72 = vld [vmem:[%s71] sm:$0x1]
    %73 = vrot.lane.b32.xlu0 %v72, 12
    %v74 = vpop.permute.xlu0 %73
    %vm75 = vcmask 146528
    %76 = vst.msk [vmem:[#allocation0] sm:$0x1] %vm75, %v74
    %s77 = scalar_lea.vmem %s0, 1
    %v78 = vld [vmem:[%s77] sm:$0x1]
    %79 = vrot.lane.b32.xlu0 %v78, 6
    %v80 = vpop.permute.xlu0 %79
    %vm81 = vcmask 97328
    %82 = vst.msk [vmem:[#allocation0] sm:$0x1] %vm81, %v80
    %s84 = sshll.u32 1, 1
    %s85 = ssub.s32 %s84, 1
    %v87 = vld [vmem:[#allocation0] sm:%s85]
    %s88 = sshll.u32 1, 1
    %s89 = ssub.s32 %s88, 1
    %90 = vst [vmem:[%s1] sm:%s89] %v87

// kernel: tile.18
$region0: #{tile.18}
  #allocation0 [shape = 's32[1]{0}', space=sflag, size = 0x4, scoped, tag = 'scoped memory for tile.18']
  %s0 = inlined_call_operand.vmem [shape: f32[16], index: 0, kind: input, shape index: {}]
  %s1 = inlined_call_operand.vmem [shape: f32[6,16], index: 1, kind: output, shape index: {}]
  // Predicated region
  $region2: #{tile.18} parent=0 // pred_check
    _
  $region3: #{tile.18} parent=0 // pred_check_branch
    %3 = sbr.rel (0) target = $region5
  $region4: #{tile.18} parent=0 // pred_region
    _
  $region5: #{tile.18} parent=0 // pred_fallthru
    _
  %v4 = vld [vmem:[%s0] ss:$0 sm:$0xff]
  %5 = vst [vmem:[%s1] sm:$0xff] %v4

// kernel: tile.19
$region0: #{tile.19}
  %s0 = inlined_call_operand.vmem [shape: f32[6,16], index: 0, kind: input, shape index: {}]
  %s1 = inlined_call_operand.vmem [shape: f32[1,96], index: 1, kind: output, shape index: {}]
  $region1: #{tile.19} parent=0
    #allocation0 [shape = 'u8[4096]{0}', space=vmem, size = 0x1000, scoped, tag = 'scoped mem for output reshape']
    %v2 = vld [vmem:[%s0] sm:$0x1]
    %vm3 = vcmask 130048
    %4 = vst.msk [vmem:[#allocation0] sm:$0x1] %vm3, %v2
    %s5 = scalar_lea.vmem %s0, 5
    %v6 = vld [vmem:[%s5] sm:$0x1]
    %7 = vrot.lane.b32.xlu0 %v6, 80
    %v8 = vpop.permute.xlu0 %7
    %vm9 = vcmask 786048
    %10 = vst.msk [vmem:[#allocation0] sm:$0x1] %vm9, %v8
    %s11 = scalar_lea.vmem %s0, 4
    %v12 = vld [vmem:[%s11] sm:$0x1]
    %13 = vrot.lane.b32.xlu0 %v12, 64
    %v14 = vpop.permute.xlu0 %13
    %vm15 = vcmask 654848
    %16 = vst.msk [vmem:[#allocation0] sm:$0x1] %vm15, %v14
    %s17 = scalar_lea.vmem %s0, 3
    %v18 = vld [vmem:[%s17] sm:$0x1]
    %19 = vrot.lane.b32.xlu0 %v18, 48
    %v20 = vpop.permute.xlu0 %19
    %vm21 = vcmask 523648
    %22 = vst.msk [vmem:[#allocation0] sm:$0x1] %vm21, %v20
    %s23 = scalar_lea.vmem %s0, 2
    %v24 = vld [vmem:[%s23] sm:$0x1]
    %25 = vrot.lane.b32.xlu0 %v24, 32
    %v26 = vpop.permute.xlu0 %25
    %vm27 = vcmask 392448
    %28 = vst.msk [vmem:[#allocation0] sm:$0x1] %vm27, %v26
    %s29 = scalar_lea.vmem %s0, 1
    %v30 = vld [vmem:[%s29] sm:$0x1]
    %31 = vrot.lane.b32.xlu0 %v30, 16
    %v32 = vpop.permute.xlu0 %31
    %vm33 = vcmask 261248
    %34 = vst.msk [vmem:[#allocation0] sm:$0x1] %vm33, %v32
    %s36 = sshll.u32 1, 1
    %s37 = ssub.s32 %s36, 1
    %v39 = vld [vmem:[#allocation0] sm:%s37]
    %s40 = sshll.u32 1, 1
    %s41 = ssub.s32 %s40, 1
    %42 = vst [vmem:[%s1] sm:%s41] %v39

// kernel: lucida_forward.1
$region0: #{lucida_forward.1}
  #allocation0 [shape = 'u32[]', space=smem, size = 0x4, offset = 0x4, fixed_abs, tag = 'smem constant byte address 0x4 - core index']
  #allocation1 [shape = 'u32[144,128]{1,0:T(1,128)}', space=vmem, size = 0x12000, scoped, tag = 'internal scratch']
  %s0 = inlined_call_operand.vmem [shape: bf16[2,4,8,32], index: 0, kind: input, shape index: {}]
  %s1 = inlined_call_operand.vmem [shape: bf16[5,32,168], index: 1, kind: input, shape index: {}]
  %s2 = inlined_call_operand.vmem [shape: f32[1,84], index: 2, kind: input, shape index: {}]
  %s3 = inlined_call_operand.vmem [shape: bf16[3,84,192], index: 3, kind: input, shape index: {}]
  %s4 = inlined_call_operand.vmem [shape: f32[1,96], index: 4, kind: input, shape index: {}]
  %s5 = inlined_call_operand.vmem [shape: bf16[576,120], index: 5, kind: input, shape index: {}]
  %s6 = inlined_call_operand.vmem [shape: f32[1,120], index: 6, kind: input, shape index: {}]
  %s7 = inlined_call_operand.vmem [shape: bf16[120,84], index: 7, kind: input, shape index: {}]
  %s8 = inlined_call_operand.vmem [shape: f32[1,84], index: 8, kind: input, shape index: {}]
  %s9 = inlined_call_operand.vmem [shape: bf16[84,10], index: 9, kind: input, shape index: {}]
  %s10 = inlined_call_operand.vmem [shape: f32[1,10], index: 10, kind: input, shape index: {}]
  %s11 = inlined_call_operand.hbm [shape: f32[2,1,10], index: 11, kind: output, shape index: {}]
  %s12 = sld [smem:[#allocation0]]
  $region77: #{lucida_forward.1} parent=0
    _
  %s14 = ssub.s32 1, %s12
  %s15 = scalar_select 0, %s14, %s12
  $region1: #{lucida_forward.1} parent=0
    #allocation2 [shape = 'u8[1024]{0}', space=vmem, size = 0x400, scoped, tag = 'output window, operand 0']
    #allocation3 [shape = 's32[2]{0}', space=sflag, size = 0x8, scoped, tag = 'scoped memory for lucida_forward.1']
    %16 = vsyncpa [#allocation3], 0
    %s17 = scalar_lea.sflag [#allocation3], 1
    %18 = vsyncpa %s17, 0
    loop: start=0, step=1, limit=4
    $region2: #{lucida_forward.1} parent=1 // loop_pre_header
      _
    $region3: #{lucida_forward.1} parent=1 // loop_header
      %s20 = sphi 0, %s24
      %p21 = scmp.ge.s32.totalorder %s20, 4
      %s30 = sphi 0, %s32
      %s33 = sphi 0, %s30
      %s34 = sphi 0, %s33
      %s50 = sphi 0, %s34
      %s54 = sphi 0, %s54
      %s56 = sphi 0, %s54
      %s57 = sphi 0, %s56
      %s71 = sphi 0, %s57
      %s75 = sphi 0, %s75
      %s77 = sphi 0, %s75
      %s78 = sphi 0, %s77
      %s92 = sphi 0, %s78
      %s96 = sphi 0, %s96
      %s98 = sphi 0, %s96
      %s99 = sphi 0, %s98
      %s113 = sphi 0, %s99
      %s117 = sphi 0, %s117
      %s119 = sphi 0, %s117
      %s120 = sphi 0, %s119
      %s134 = sphi 0, %s120
      %s138 = sphi 0, %s138
      %s140 = sphi 0, %s138
      %s141 = sphi 0, %s140
      %s155 = sphi 0, %s141
      %s159 = sphi 0, %s159
      %s161 = sphi 0, %s159
      %s162 = sphi 0, %s161
      %s176 = sphi 0, %s162
      %s180 = sphi 0, %s180
      %s182 = sphi 0, %s180
      %s183 = sphi 0, %s182
      %s197 = sphi 0, %s183
      %s201 = sphi 0, %s201
      %s203 = sphi 0, %s201
      %s204 = sphi 0, %s203
      %s218 = sphi 0, %s204
      %s222 = sphi 0, %s222
      %s224 = sphi 0, %s222
      %s225 = sphi 0, %s224
      %s239 = sphi 0, %s225
      %s243 = sphi 0, %s243
      %s245 = sphi 0, %s243
      %s246 = sphi 0, %s245
      %s260 = sphi 0, %s246
      %s266 = sphi 0, %s268
      %s269 = sphi 0, %s266
      %s270 = sphi 0, %s269
      %s286 = sphi 0, %s270
    $region4: #{lucida_forward.1} parent=1 // loop_header_branch
      %23 = sbr.rel (%p21) target = $region8
    $region5: #{lucida_forward.1} parent=1 // loop_body
      %s25 = ssub.s32 %s20, 1
      %s26 = ssub.s32 %s20, 2
      %s27 = sadd.s32 %s20, 1
      %s28 = ssub.s32 %s20, %s27
      %p29 = scmp.eq.s32.totalorder %s28, 0
      %s31 = sadd.s32 %s30, 1
      %s32 = scalar_select %p29, %s30, %s31
      %p35 = pneg %p29
      %p36 = scmp.eq.s32.totalorder %s20, 1
      %p37 = por %p35, %p36
      %p38 = scmp.ne.s32.totalorder %s30, %s33
      %p39 = scmp.eq.s32.totalorder %s20, 0
      %p40 = por %p38, %p39
      %p41 = scmp.ne.s32.totalorder %s30, %s33
      %p42 = scmp.eq.s32.totalorder %s25, 1
      %p43 = por %p41, %p42
      %p44 = scmp.ne.s32.totalorder %s33, %s34
      %p45 = scmp.eq.s32.totalorder %s25, 0
      %p46 = por %p44, %p45
      %p47 = scmp.ne.s32.totalorder %s33, %s34
      %p48 = scmp.eq.s32.totalorder %s26, 1
      %p49 = por %p47, %p48
      %p51 = scmp.ne.s32.totalorder %s34, %s50
      %p52 = scmp.eq.s32.totalorder %s26, 0
      %p53 = por %p51, %p52
      %s55 = sadd.s32 %s54, 1
      %p58 = scmp.eq.s32.totalorder %s20, 1
      %p59 = scmp.ne.s32.totalorder %s54, %s56
      %p60 = scmp.eq.s32.totalorder %s20, 0
      %p61 = por %p59, %p60
      %p62 = scmp.ne.s32.totalorder %s54, %s56
      %p63 = scmp.eq.s32.totalorder %s25, 1
      %p64 = por %p62, %p63
      %p65 = scmp.ne.s32.totalorder %s56, %s57
      %p66 = scmp.eq.s32.totalorder %s25, 0
      %p67 = por %p65, %p66
      %p68 = scmp.ne.s32.totalorder %s56, %s57
      %p69 = scmp.eq.s32.totalorder %s26, 1
      %p70 = por %p68, %p69
      %p72 = scmp.ne.s32.totalorder %s57, %s71
      %p73 = scmp.eq.s32.totalorder %s26, 0
      %p74 = por %p72, %p73
      %s76 = sadd.s32 %s75, 1
      %p79 = scmp.eq.s32.totalorder %s20, 1
      %p80 = scmp.ne.s32.totalorder %s75, %s77
      %p81 = scmp.eq.s32.totalorder %s20, 0
      %p82 = por %p80, %p81
      %p83 = scmp.ne.s32.totalorder %s75, %s77
      %p84 = scmp.eq.s32.totalorder %s25, 1
      %p85 = por %p83, %p84
      %p86 = scmp.ne.s32.totalorder %s77, %s78
      %p87 = scmp.eq.s32.totalorder %s25, 0
      %p88 = por %p86, %p87
      %p89 = scmp.ne.s32.totalorder %s77, %s78
      %p90 = scmp.eq.s32.totalorder %s26, 1
      %p91 = por %p89, %p90
      %p93 = scmp.ne.s32.totalorder %s78, %s92
      %p94 = scmp.eq.s32.totalorder %s26, 0
      %p95 = por %p93, %p94
      %s97 = sadd.s32 %s96, 1
      %p100 = scmp.eq.s32.totalorder %s20, 1
      %p101 = scmp.ne.s32.totalorder %s96, %s98
      %p102 = scmp.eq.s32.totalorder %s20, 0
      %p103 = por %p101, %p102
      %p104 = scmp.ne.s32.totalorder %s96, %s98
      %p105 = scmp.eq.s32.totalorder %s25, 1
      %p106 = por %p104, %p105
      %p107 = scmp.ne.s32.totalorder %s98, %s99
      %p108 = scmp.eq.s32.totalorder %s25, 0
      %p109 = por %p107, %p108
      %p110 = scmp.ne.s32.totalorder %s98, %s99
      %p111 = scmp.eq.s32.totalorder %s26, 1
      %p112 = por %p110, %p111
      %p114 = scmp.ne.s32.totalorder %s99, %s113
      %p115 = scmp.eq.s32.totalorder %s26, 0
      %p116 = por %p114, %p115
      %s118 = sadd.s32 %s117, 1
      %p121 = scmp.eq.s32.totalorder %s20, 1
      %p122 = scmp.ne.s32.totalorder %s117, %s119
      %p123 = scmp.eq.s32.totalorder %s20, 0
      %p124 = por %p122, %p123
      %p125 = scmp.ne.s32.totalorder %s117, %s119
      %p126 = scmp.eq.s32.totalorder %s25, 1
      %p127 = por %p125, %p126
      %p128 = scmp.ne.s32.totalorder %s119, %s120
      %p129 = scmp.eq.s32.totalorder %s25, 0
      %p130 = por %p128, %p129
      %p131 = scmp.ne.s32.totalorder %s119, %s120
      %p132 = scmp.eq.s32.totalorder %s26, 1
      %p133 = por %p131, %p132
      %p135 = scmp.ne.s32.totalorder %s120, %s134
      %p136 = scmp.eq.s32.totalorder %s26, 0
      %p137 = por %p135, %p136
      %s139 = sadd.s32 %s138, 1
      %p142 = scmp.eq.s32.totalorder %s20, 1
      %p143 = scmp.ne.s32.totalorder %s138, %s140
      %p144 = scmp.eq.s32.totalorder %s20, 0
      %p145 = por %p143, %p144
      %p146 = scmp.ne.s32.totalorder %s138, %s140
      %p147 = scmp.eq.s32.totalorder %s25, 1
      %p148 = por %p146, %p147
      %p149 = scmp.ne.s32.totalorder %s140, %s141
      %p150 = scmp.eq.s32.totalorder %s25, 0
      %p151 = por %p149, %p150
      %p152 = scmp.ne.s32.totalorder %s140, %s141
      %p153 = scmp.eq.s32.totalorder %s26, 1
      %p154 = por %p152, %p153
      %p156 = scmp.ne.s32.totalorder %s141, %s155
      %p157 = scmp.eq.s32.totalorder %s26, 0
      %p158 = por %p156, %p157
      %s160 = sadd.s32 %s159, 1
      %p163 = scmp.eq.s32.totalorder %s20, 1
      %p164 = scmp.ne.s32.totalorder %s159, %s161
      %p165 = scmp.eq.s32.totalorder %s20, 0
      %p166 = por %p164, %p165
      %p167 = scmp.ne.s32.totalorder %s159, %s161
      %p168 = scmp.eq.s32.totalorder %s25, 1
      %p169 = por %p167, %p168
      %p170 = scmp.ne.s32.totalorder %s161, %s162
      %p171 = scmp.eq.s32.totalorder %s25, 0
      %p172 = por %p170, %p171
      %p173 = scmp.ne.s32.totalorder %s161, %s162
      %p174 = scmp.eq.s32.totalorder %s26, 1
      %p175 = por %p173, %p174
      %p177 = scmp.ne.s32.totalorder %s162, %s176
      %p178 = scmp.eq.s32.totalorder %s26, 0
      %p179 = por %p177, %p178
      %s181 = sadd.s32 %s180, 1
      %p184 = scmp.eq.s32.totalorder %s20, 1
      %p185 = scmp.ne.s32.totalorder %s180, %s182
      %p186 = scmp.eq.s32.totalorder %s20, 0
      %p187 = por %p185, %p186
      %p188 = scmp.ne.s32.totalorder %s180, %s182
      %p189 = scmp.eq.s32.totalorder %s25, 1
      %p190 = por %p188, %p189
      %p191 = scmp.ne.s32.totalorder %s182, %s183
      %p192 = scmp.eq.s32.totalorder %s25, 0
      %p193 = por %p191, %p192
      %p194 = scmp.ne.s32.totalorder %s182, %s183
      %p195 = scmp.eq.s32.totalorder %s26, 1
      %p196 = por %p194, %p195
      %p198 = scmp.ne.s32.totalorder %s183, %s197
      %p199 = scmp.eq.s32.totalorder %s26, 0
      %p200 = por %p198, %p199
      %s202 = sadd.s32 %s201, 1
      %p205 = scmp.eq.s32.totalorder %s20, 1
      %p206 = scmp.ne.s32.totalorder %s201, %s203
      %p207 = scmp.eq.s32.totalorder %s20, 0
      %p208 = por %p206, %p207
      %p209 = scmp.ne.s32.totalorder %s201, %s203
      %p210 = scmp.eq.s32.totalorder %s25, 1
      %p211 = por %p209, %p210
      %p212 = scmp.ne.s32.totalorder %s203, %s204
      %p213 = scmp.eq.s32.totalorder %s25, 0
      %p214 = por %p212, %p213
      %p215 = scmp.ne.s32.totalorder %s203, %s204
      %p216 = scmp.eq.s32.totalorder %s26, 1
      %p217 = por %p215, %p216
      %p219 = scmp.ne.s32.totalorder %s204, %s218
      %p220 = scmp.eq.s32.totalorder %s26, 0
      %p221 = por %p219, %p220
      %s223 = sadd.s32 %s222, 1
      %p226 = scmp.eq.s32.totalorder %s20, 1
      %p227 = scmp.ne.s32.totalorder %s222, %s224
      %p228 = scmp.eq.s32.totalorder %s20, 0
      %p229 = por %p227, %p228
      %p230 = scmp.ne.s32.totalorder %s222, %s224
      %p231 = scmp.eq.s32.totalorder %s25, 1
      %p232 = por %p230, %p231
      %p233 = scmp.ne.s32.totalorder %s224, %s225
      %p234 = scmp.eq.s32.totalorder %s25, 0
      %p235 = por %p233, %p234
      %p236 = scmp.ne.s32.totalorder %s224, %s225
      %p237 = scmp.eq.s32.totalorder %s26, 1
      %p238 = por %p236, %p237
      %p240 = scmp.ne.s32.totalorder %s225, %s239
      %p241 = scmp.eq.s32.totalorder %s26, 0
      %p242 = por %p240, %p241
      %s244 = sadd.s32 %s243, 1
      %p247 = scmp.eq.s32.totalorder %s20, 1
      %p248 = scmp.ne.s32.totalorder %s243, %s245
      %p249 = scmp.eq.s32.totalorder %s20, 0
      %p250 = por %p248, %p249
      %p251 = scmp.ne.s32.totalorder %s243, %s245
      %p252 = scmp.eq.s32.totalorder %s25, 1
      %p253 = por %p251, %p252
      %p254 = scmp.ne.s32.totalorder %s245, %s246
      %p255 = scmp.eq.s32.totalorder %s25, 0
      %p256 = por %p254, %p255
      %p257 = scmp.ne.s32.totalorder %s245, %s246
      %p258 = scmp.eq.s32.totalorder %s26, 1
      %p259 = por %p257, %p258
      %p261 = scmp.ne.s32.totalorder %s246, %s260
      %p262 = scmp.eq.s32.totalorder %s26, 0
      %p263 = por %p261, %p262
      %s264 = ssub.s32 %s20, %s27
      %p265 = scmp.eq.s32.totalorder %s264, 0
      %s267 = sadd.s32 %s266, 1
      %s268 = scalar_select %p265, %s266, %s267
      %p271 = pneg %p265
      %p272 = scmp.eq.s32.totalorder %s20, 1
      %p273 = por %p271, %p272
      %p274 = scmp.ne.s32.totalorder %s266, %s269
      %p275 = scmp.eq.s32.totalorder %s20, 0
      %p276 = por %p274, %p275
      %p277 = scmp.ne.s32.totalorder %s266, %s269
      %p278 = scmp.eq.s32.totalorder %s25, 1
      %p279 = por %p277, %p278
      %p280 = scmp.ne.s32.totalorder %s269, %s270
      %p281 = scmp.eq.s32.totalorder %s25, 0
      %p282 = por %p280, %p281
      %p283 = scmp.ne.s32.totalorder %s269, %s270
      %p284 = scmp.eq.s32.totalorder %s26, 1
      %p285 = por %p283, %p284
      %p287 = scmp.ne.s32.totalorder %s270, %s286
      %p288 = scmp.eq.s32.totalorder %s26, 0
      %p289 = por %p287, %p288
      %p290 = scmp.le.s32.totalorder 1, %s20
      %p291 = scmp.lt.s32.totalorder %s20, 3
      %p292 = pnand %p290, %p291
      %p293 = pneg %p292
      // Predicated region
      $region9: #{lucida_forward.1} parent=5 // pred_check
        _
      $region10: #{lucida_forward.1} parent=5 // pred_check_branch
        %295 = sbr.rel (%p292) target = $region12
      $region11: #{lucida_forward.1} parent=5 // pred_region
        %s296 = ssub.s32 %s20, 1
        // Predicated region
        $region13: #{lucida_forward.1} parent=11 // pred_check
          %p297 = pneg %p67
        $region14: #{lucida_forward.1} parent=11 // pred_check_branch
          %299 = sbr.rel (%p297) target = $region16
        $region15: #{lucida_forward.1} parent=11 // pred_region
          _
        $region16: #{lucida_forward.1} parent=11 // pred_fallthru
          _
        // Predicated region
        $region17: #{lucida_forward.1} parent=11 // pred_check
          %p300 = pneg %p88
        $region18: #{lucida_forward.1} parent=11 // pred_check_branch
          %302 = sbr.rel (%p300) target = $region20
        $region19: #{lucida_forward.1} parent=11 // pred_region
          _
        $region20: #{lucida_forward.1} parent=11 // pred_fallthru
          _
        // Predicated region
        $region21: #{lucida_forward.1} parent=11 // pred_check
          %p303 = pneg %p109
        $region22: #{lucida_forward.1} parent=11 // pred_check_branch
          %305 = sbr.rel (%p303) target = $region24
        $region23: #{lucida_forward.1} parent=11 // pred_region
          _
        $region24: #{lucida_forward.1} parent=11 // pred_fallthru
          _
        // Predicated region
        $region25: #{lucida_forward.1} parent=11 // pred_check
          %p306 = pneg %p130
        $region26: #{lucida_forward.1} parent=11 // pred_check_branch
          %308 = sbr.rel (%p306) target = $region28
        $region27: #{lucida_forward.1} parent=11 // pred_region
          _
        $region28: #{lucida_forward.1} parent=11 // pred_fallthru
          _
        // Predicated region
        $region29: #{lucida_forward.1} parent=11 // pred_check
          %p309 = pneg %p151
        $region30: #{lucida_forward.1} parent=11 // pred_check_branch
          %311 = sbr.rel (%p309) target = $region32
        $region31: #{lucida_forward.1} parent=11 // pred_region
          _
        $region32: #{lucida_forward.1} parent=11 // pred_fallthru
          _
        // Predicated region
        $region33: #{lucida_forward.1} parent=11 // pred_check
          %p312 = pneg %p172
        $region34: #{lucida_forward.1} parent=11 // pred_check_branch
          %314 = sbr.rel (%p312) target = $region36
        $region35: #{lucida_forward.1} parent=11 // pred_region
          _
        $region36: #{lucida_forward.1} parent=11 // pred_fallthru
          _
        // Predicated region
        $region37: #{lucida_forward.1} parent=11 // pred_check
          %p315 = pneg %p193
        $region38: #{lucida_forward.1} parent=11 // pred_check_branch
          %317 = sbr.rel (%p315) target = $region40
        $region39: #{lucida_forward.1} parent=11 // pred_region
          _
        $region40: #{lucida_forward.1} parent=11 // pred_fallthru
          _
        // Predicated region
        $region41: #{lucida_forward.1} parent=11 // pred_check
          %p318 = pneg %p214
        $region42: #{lucida_forward.1} parent=11 // pred_check_branch
          %320 = sbr.rel (%p318) target = $region44
        $region43: #{lucida_forward.1} parent=11 // pred_region
          _
        $region44: #{lucida_forward.1} parent=11 // pred_fallthru
          _
        // Predicated region
        $region45: #{lucida_forward.1} parent=11 // pred_check
          %p321 = pneg %p235
        $region46: #{lucida_forward.1} parent=11 // pred_check_branch
          %323 = sbr.rel (%p321) target = $region48
        $region47: #{lucida_forward.1} parent=11 // pred_region
          _
        $region48: #{lucida_forward.1} parent=11 // pred_fallthru
          _
        // Predicated region
        $region49: #{lucida_forward.1} parent=11 // pred_check
          %p324 = pneg %p256
        $region50: #{lucida_forward.1} parent=11 // pred_check_branch
          %326 = sbr.rel (%p324) target = $region52
        $region51: #{lucida_forward.1} parent=11 // pred_region
          _
        $region52: #{lucida_forward.1} parent=11 // pred_fallthru
          _
      $region12: #{lucida_forward.1} parent=5 // pred_fallthru
        _
      %p327 = scmp.lt.s32.totalorder %s20, 2
      // Predicated region
      $region53: #{lucida_forward.1} parent=5 // pred_check
        %p328 = pneg %p327
      $region54: #{lucida_forward.1} parent=5 // pred_check_branch
        %330 = sbr.rel (%p328) target = $region56
      $region55: #{lucida_forward.1} parent=5 // pred_region
        // Predicated region
        $region57: #{lucida_forward.1} parent=55 // pred_check
          %p331 = pneg %p40
        $region58: #{lucida_forward.1} parent=55 // pred_check_branch
          %333 = sbr.rel (%p331) target = $region60
        $region59: #{lucida_forward.1} parent=55 // pred_region
          %p334 = scmp.lt.s32.totalorder %s20, 1
          %s335 = scalar_select %p334, %s20, 1
          %s336 = smul.addr %s335, 4
          %s337 = smul.addr %s336, 4
          %s338 = scalar_lea.vmem %s0, %s337
        $region60: #{lucida_forward.1} parent=55 // pred_fallthru
          _
      $region56: #{lucida_forward.1} parent=5 // pred_fallthru
        _
      %p339 = scmp.le.s32.totalorder 1, %s20
      %p340 = scmp.lt.s32.totalorder %s20, 3
      %p341 = pnand %p339, %p340
      %p342 = pneg %p341
      // Predicated region
      $region61: #{lucida_forward.1} parent=5 // pred_check
        _
      $region62: #{lucida_forward.1} parent=5 // pred_check_branch
        %344 = sbr.rel (%p341) target = $region64
      $region63: #{lucida_forward.1} parent=5 // pred_region
        %s345 = ssub.s32 %s20, 1
        %p346 = scmp.lt.s32.totalorder %s25, 1
        %s347 = scalar_select %p346, %s25, 1
        %s348 = smul.addr %s347, 4
        %s349 = smul.addr %s348, 4
        %s350 = scalar_lea.vmem %s0, %s349
        %p351 = pneg %p46
        %p352 = pneg %p43
        %p353 = pneg %p67
        %p354 = pneg %p64
        %p355 = pneg %p88
        %p356 = pneg %p85
        %p357 = pneg %p109
        %p358 = pneg %p106
        %p359 = pneg %p130
        %p360 = pneg %p127
        %p361 = pneg %p151
        %p362 = pneg %p148
        %p363 = pneg %p172
        %p364 = pneg %p169
        %p365 = pneg %p193
        %p366 = pneg %p190
        %p367 = pneg %p214
        %p368 = pneg %p211
        %p369 = pneg %p235
        %p370 = pneg %p232
        %p371 = pneg %p256
        %p372 = pneg %p253
        %p373 = pneg %p282
        %p374 = pneg %p279
        %s375 = sand.u32 %s269, 1
        %s376 = scalar_lea.sflag [#allocation3], %s375
        %s377 = sand.u32 %s269, 1
        %s378 = scalar_lea.vmem [#allocation2], %s377
        %p379 = scmp.lt.s32.totalorder %s25, 1
        %s380 = scalar_select %p379, %s25, 1
        %s381 = smul.addr %s380, 4
        %s382 = smul.addr %s381, 4
        %s383 = scalar_lea.vmem %s0, %s382
        %v385 = vld [vmem:[%s383] sm:$0xf]
        %v386 = vld [vmem:[%s383 + $0x4] sm:$0xf]
        %v387 = vld [vmem:[%s383 + $0x8] sm:$0xf]
        %v388 = vld [vmem:[%s383 + $0xc] sm:$0xf]
        %v389 = vld [vmem:[%s1] sm:$0xff]
        %v390 = vld [vmem:[%s1 + $0x8] sm:$0xff]
        %v391 = vld [vmem:[%s1 + $0x10] sm:$0xff]
        %v392 = vld [vmem:[%s1 + $0x18] sm:$0xff]
        %s393 = scalar_lea.vmem %s1, 32
        %v394 = vld [vmem:[%s393] sm:$0xff]
        %v395 = vld [vmem:[%s393 + $0x8] sm:$0xff]
        %v396 = vld [vmem:[%s393 + $0x10] sm:$0xff]
        %v397 = vld [vmem:[%s393 + $0x18] sm:$0xff]
        %v402 = vunpack.c.l.b16 %v394
        %v403 = vunpack.c.h.b16 %v394
        %v404 = vunpack.c.l.b16 %v395
        %v405 = vunpack.c.h.b16 %v395
        %v406 = vunpack.c.l.b16 %v396
        %v407 = vunpack.c.h.b16 %v396
        %v408 = vunpack.c.l.b16 %v397
        %v409 = vunpack.c.h.b16 %v397
        %v410 = vpack.c.b16 %v404, %v402
        %v411 = vpack.c.b16 %v405, %v403
        %v412 = vpack.c.b16 %v408, %v406
        %v413 = vpack.c.b16 %v409, %v407
        %vm418 = vcmask 261120
        %v420 = vsel %vm418, %v386, 0
        %422 = vmatprep.subr.bf16.mxu0 0
        %423 = vmatpush1.bf16.msra.mxu0 0
        %424 = vmatprep.subr.bf16.mxu0 0
        %425 = vmatpush1.bf16.msra.mxu0 0
        %426 = vmatprep.subr.bf16.mxu0 0
        %427 = vmatpush1.bf16.msra.mxu0 0
        %428 = vmatprep.subr.bf16.mxu0 0
        %429 = vmatpush1.bf16.msra.mxu0 0
        %430 = vmatprep.subr.bf16.mxu0 0
        %431 = vmatpush1.bf16.msra.mxu0 0
        %432 = vmatprep.subr.bf16.mxu0 0
        %433 = vmatpush1.bf16.msra.mxu0 0
        %434 = vmatprep.subr.bf16.mxu0 %v413
        %435 = vmatpush1.bf16.msra.mxu0 %v412
        %436 = vmatprep.subr.bf16.mxu0 %v411
        %437 = vmatpush1.bf16.msra.mxu0 %v410
        %438 = vmatprep.subr.bf16.mxu0 0
        %439 = vmatpush2.bf16.msra.mxu0 0
        %440 = vmatprep.subr.bf16.mxu0 0
        %441 = vmatpush2.bf16.msra.mxu0 0
        %442 = vmatprep.subr.bf16.mxu0 0
        %443 = vmatpush2.bf16.msra.mxu0 0
        %444 = vmatprep.subr.bf16.mxu0 0
        %445 = vmatpush2.bf16.msra.mxu0 0
        %446 = vmatprep.subr.bf16.mxu0 0
        %447 = vmatpush2.bf16.msra.mxu0 0
        %448 = vmatprep.subr.bf16.mxu0 0
        %449 = vmatpush2.bf16.msra.mxu0 0
        %450 = vmatprep.subr.bf16.mxu0 0
        %451 = vmatpush2.bf16.msra.mxu0 0
        %452 = vmatprep.subr.bf16.mxu0 0
        %453 = vmatpush2.bf16.msra.mxu0 0
        %454 = vmatprep.mubr.bf16.mxu0 0
        %455 = vmatmul.mubr.bf16.gmra.mxu0 %v420
        %v456 = vpop.f32.mrf.mxu0
        %v457 = vadd.f32 0.0, %v456
        %v458 = vpop.f32.mrf.mxu0
        %v459 = vadd.f32 0.0, %v458
        %v460 = vpop.f32.mrf.mxu0
        %v461 = vpop.f32.mrf.mxu0
        %462 = vdwg.mxu0
        %v467 = vunpack.c.l.b16 %v389
        %v468 = vunpack.c.h.b16 %v389
        %v469 = vunpack.c.l.b16 %v390
        %v470 = vunpack.c.h.b16 %v390
        %v471 = vunpack.c.l.b16 %v391
        %v472 = vunpack.c.h.b16 %v391
        %v473 = vunpack.c.l.b16 %v392
        %v474 = vunpack.c.h.b16 %v392
        %v475 = vpack.c.b16 %v469, %v467
        %v476 = vpack.c.b16 %v470, %v468
        %v477 = vpack.c.b16 %v473, %v471
        %v478 = vpack.c.b16 %v474, %v472
        %v484 = vsel %vm418, %v385, 0
        %486 = vmatprep.subr.bf16.mxu0 0
        %487 = vmatpush1.bf16.msra.mxu0 0
        %488 = vmatprep.subr.bf16.mxu0 0
        %489 = vmatpush1.bf16.msra.mxu0 0
        %490 = vmatprep.subr.bf16.mxu0 0
        %491 = vmatpush1.bf16.msra.mxu0 0
        %492 = vmatprep.subr.bf16.mxu0 0
        %493 = vmatpush1.bf16.msra.mxu0 0
        %494 = vmatprep.subr.bf16.mxu0 0
        %495 = vmatpush1.bf16.msra.mxu0 0
        %496 = vmatprep.subr.bf16.mxu0 0
        %497 = vmatpush1.bf16.msra.mxu0 0
        %498 = vmatprep.subr.bf16.mxu0 %v478
        %499 = vmatpush1.bf16.msra.mxu0 %v477
        %500 = vmatprep.subr.bf16.mxu0 %v476
        %501 = vmatpush1.bf16.msra.mxu0 %v475
        %502 = vmatprep.subr.bf16.mxu0 0
        %503 = vmatpush2.bf16.msra.mxu0 0
        %504 = vmatprep.subr.bf16.mxu0 0
        %505 = vmatpush2.bf16.msra.mxu0 0
        %506 = vmatprep.subr.bf16.mxu0 0
        %507 = vmatpush2.bf16.msra.mxu0 0
        %508 = vmatprep.subr.bf16.mxu0 0
        %509 = vmatpush2.bf16.msra.mxu0 0
        %510 = vmatprep.subr.bf16.mxu0 0
        %511 = vmatpush2.bf16.msra.mxu0 0
        %512 = vmatprep.subr.bf16.mxu0 0
        %513 = vmatpush2.bf16.msra.mxu0 0
        %514 = vmatprep.subr.bf16.mxu0 0
        %515 = vmatpush2.bf16.msra.mxu0 0
        %516 = vmatprep.subr.bf16.mxu0 0
        %517 = vmatpush2.bf16.msra.mxu0 0
        %518 = vmatprep.mubr.bf16.mxu0 0
        %519 = vmatmul.mubr.bf16.gmra.mxu0 %v484
        %v520 = vpop.f32.mrf.mxu0
        %v521 = vadd.f32 %v457, %v520
        %v522 = vpop.f32.mrf.mxu0
        %v523 = vadd.f32 %v459, %v522
        %v524 = vpop.f32.mrf.mxu0
        %v525 = vpop.f32.mrf.mxu0
        %526 = vdwg.mxu0
        %s527 = scalar_lea.vmem %s1, 64
        %v528 = vld [vmem:[%s527] sm:$0xff]
        %v529 = vld [vmem:[%s527 + $0x8] sm:$0xff]
        %v530 = vld [vmem:[%s527 + $0x10] sm:$0xff]
        %v531 = vld [vmem:[%s527 + $0x18] sm:$0xff]
        %v536 = vunpack.c.l.b16 %v528
        %v537 = vunpack.c.h.b16 %v528
        %v538 = vunpack.c.l.b16 %v529
        %v539 = vunpack.c.h.b16 %v529
        %v540 = vunpack.c.l.b16 %v530
        %v541 = vunpack.c.h.b16 %v530
        %v542 = vunpack.c.l.b16 %v531
        %v543 = vunpack.c.h.b16 %v531
        %v544 = vpack.c.b16 %v538, %v536
        %v545 = vpack.c.b16 %v539, %v537
        %v546 = vpack.c.b16 %v542, %v540
        %v547 = vpack.c.b16 %v543, %v541
        %v553 = vsel %vm418, %v387, 0
        %555 = vmatprep.subr.bf16.mxu0 0
        %556 = vmatpush1.bf16.msra.mxu0 0
        %557 = vmatprep.subr.bf16.mxu0 0
        %558 = vmatpush1.bf16.msra.mxu0 0
        %559 = vmatprep.subr.bf16.mxu0 0
        %560 = vmatpush1.bf16.msra.mxu0 0
        %561 = vmatprep.subr.bf16.mxu0 0
        %562 = vmatpush1.bf16.msra.mxu0 0
        %563 = vmatprep.subr.bf16.mxu0 0
        %564 = vmatpush1.bf16.msra.mxu0 0
        %565 = vmatprep.subr.bf16.mxu0 0
        %566 = vmatpush1.bf16.msra.mxu0 0
        %567 = vmatprep.subr.bf16.mxu0 %v547
        %568 = vmatpush1.bf16.msra.mxu0 %v546
        %569 = vmatprep.subr.bf16.mxu0 %v545
        %570 = vmatpush1.bf16.msra.mxu0 %v544
        %571 = vmatprep.subr.bf16.mxu0 0
        %572 = vmatpush2.bf16.msra.mxu0 0
        %573 = vmatprep.subr.bf16.mxu0 0
        %574 = vmatpush2.bf16.msra.mxu0 0
        %575 = vmatprep.subr.bf16.mxu0 0
        %576 = vmatpush2.bf16.msra.mxu0 0
        %577 = vmatprep.subr.bf16.mxu0 0
        %578 = vmatpush2.bf16.msra.mxu0 0
        %579 = vmatprep.subr.bf16.mxu0 0
        %580 = vmatpush2.bf16.msra.mxu0 0
        %581 = vmatprep.subr.bf16.mxu0 0
        %582 = vmatpush2.bf16.msra.mxu0 0
        %583 = vmatprep.subr.bf16.mxu0 0
        %584 = vmatpush2.bf16.msra.mxu0 0
        %585 = vmatprep.subr.bf16.mxu0 0
        %586 = vmatpush2.bf16.msra.mxu0 0
        %587 = vmatprep.mubr.bf16.mxu0 0
        %588 = vmatmul.mubr.bf16.gmra.mxu0 %v553
        %v589 = vpop.f32.mrf.mxu0
        %v590 = vadd.f32 0.0, %v589
        %v591 = vpop.f32.mrf.mxu0
        %v592 = vadd.f32 0.0, %v591
        %v593 = vpop.f32.mrf.mxu0
        %v594 = vpop.f32.mrf.mxu0
        %595 = vdwg.mxu0
        %v596 = vadd.f32 %v521, %v590
        %v597 = vadd.f32 %v523, %v592
        %s598 = scalar_lea.vmem %s1, 96
        %v599 = vld [vmem:[%s598] sm:$0xff]
        %v600 = vld [vmem:[%s598 + $0x8] sm:$0xff]
        %v601 = vld [vmem:[%s598 + $0x10] sm:$0xff]
        %v602 = vld [vmem:[%s598 + $0x18] sm:$0xff]
        %v607 = vunpack.c.l.b16 %v599
        %v608 = vunpack.c.h.b16 %v599
        %v609 = vunpack.c.l.b16 %v600
        %v610 = vunpack.c.h.b16 %v600
        %v611 = vunpack.c.l.b16 %v601
        %v612 = vunpack.c.h.b16 %v601
        %v613 = vunpack.c.l.b16 %v602
        %v614 = vunpack.c.h.b16 %v602
        %v615 = vpack.c.b16 %v609, %v607
        %v616 = vpack.c.b16 %v610, %v608
        %v617 = vpack.c.b16 %v613, %v611
        %v618 = vpack.c.b16 %v614, %v612
        %v624 = vsel %vm418, %v388, 0
        %626 = vmatprep.subr.bf16.mxu0 0
        %627 = vmatpush1.bf16.msra.mxu0 0
        %628 = vmatprep.subr.bf16.mxu0 0
        %629 = vmatpush1.bf16.msra.mxu0 0
        %630 = vmatprep.subr.bf16.mxu0 0
        %631 = vmatpush1.bf16.msra.mxu0 0
        %632 = vmatprep.subr.bf16.mxu0 0
        %633 = vmatpush1.bf16.msra.mxu0 0
        %634 = vmatprep.subr.bf16.mxu0 0
        %635 = vmatpush1.bf16.msra.mxu0 0
        %636 = vmatprep.subr.bf16.mxu0 0
        %637 = vmatpush1.bf16.msra.mxu0 0
        %638 = vmatprep.subr.bf16.mxu0 %v618
        %639 = vmatpush1.bf16.msra.mxu0 %v617
        %640 = vmatprep.subr.bf16.mxu0 %v616
        %641 = vmatpush1.bf16.msra.mxu0 %v615
        %642 = vmatprep.subr.bf16.mxu0 0
        %643 = vmatpush2.bf16.msra.mxu0 0
        %644 = vmatprep.subr.bf16.mxu0 0
        %645 = vmatpush2.bf16.msra.mxu0 0
        %646 = vmatprep.subr.bf16.mxu0 0
        %647 = vmatpush2.bf16.msra.mxu0 0
        %648 = vmatprep.subr.bf16.mxu0 0
        %649 = vmatpush2.bf16.msra.mxu0 0
        %650 = vmatprep.subr.bf16.mxu0 0
        %651 = vmatpush2.bf16.msra.mxu0 0
        %652 = vmatprep.subr.bf16.mxu0 0
        %653 = vmatpush2.bf16.msra.mxu0 0
        %654 = vmatprep.subr.bf16.mxu0 0
        %655 = vmatpush2.bf16.msra.mxu0 0
        %656 = vmatprep.subr.bf16.mxu0 0
        %657 = vmatpush2.bf16.msra.mxu0 0
        %658 = vmatprep.mubr.bf16.mxu0 0
        %659 = vmatmul.mubr.bf16.gmra.mxu0 %v624
        %v660 = vpop.f32.mrf.mxu0
        %v661 = vadd.f32 0.0, %v660
        %v662 = vpop.f32.mrf.mxu0
        %v663 = vadd.f32 0.0, %v662
        %v664 = vpop.f32.mrf.mxu0
        %v665 = vpop.f32.mrf.mxu0
        %666 = vdwg.mxu0
        %v667 = vadd.f32 %v596, %v661
        %v668 = vadd.f32 %v597, %v663
        %s669 = scalar_lea.vmem %s1, 128
        %v670 = vld [vmem:[%s669] sm:$0xff]
        %v671 = vld [vmem:[%s669 + $0x8] sm:$0xff]
        %v672 = vld [vmem:[%s669 + $0x10] sm:$0xff]
        %v673 = vld [vmem:[%s669 + $0x18] sm:$0xff]
        %v675 = vunpack.c.l.b16 %v385
        %v676 = vpack.c.b16 %v675, %v675
        %v678 = vshrl.u32 %v676, 16
        %v680 = vshll.u32 %v676, 16
        %v682 = vrot.slane %v680, 1
        %v683 = vor.u32 %v678, %v682
        %v688 = vunpack.c.l.b16 %v670
        %v689 = vunpack.c.h.b16 %v670
        %v690 = vunpack.c.l.b16 %v671
        %v691 = vunpack.c.h.b16 %v671
        %v692 = vunpack.c.l.b16 %v672
        %v693 = vunpack.c.h.b16 %v672
        %v694 = vunpack.c.l.b16 %v673
        %v695 = vunpack.c.h.b16 %v673
        %v696 = vpack.c.b16 %v690, %v688
        %v697 = vpack.c.b16 %v691, %v689
        %v698 = vpack.c.b16 %v694, %v692
        %v699 = vpack.c.b16 %v695, %v693
        %v705 = vsel %vm418, %v683, 0
        %707 = vmatprep.subr.bf16.mxu0 0
        %708 = vmatpush1.bf16.msra.mxu0 0
        %709 = vmatprep.subr.bf16.mxu0 0
        %710 = vmatpush1.bf16.msra.mxu0 0
        %711 = vmatprep.subr.bf16.mxu0 0
        %712 = vmatpush1.bf16.msra.mxu0 0
        %713 = vmatprep.subr.bf16.mxu0 0
        %714 = vmatpush1.bf16.msra.mxu0 0
        %715 = vmatprep.subr.bf16.mxu0 0
        %716 = vmatpush1.bf16.msra.mxu0 0
        %717 = vmatprep.subr.bf16.mxu0 0
        %718 = vmatpush1.bf16.msra.mxu0 0
        %719 = vmatprep.subr.bf16.mxu0 %v699
        %720 = vmatpush1.bf16.msra.mxu0 %v698
        %721 = vmatprep.subr.bf16.mxu0 %v697
        %722 = vmatpush1.bf16.msra.mxu0 %v696
        %723 = vmatprep.subr.bf16.mxu0 0
        %724 = vmatpush2.bf16.msra.mxu0 0
        %725 = vmatprep.subr.bf16.mxu0 0
        %726 = vmatpush2.bf16.msra.mxu0 0
        %727 = vmatprep.subr.bf16.mxu0 0
        %728 = vmatpush2.bf16.msra.mxu0 0
        %729 = vmatprep.subr.bf16.mxu0 0
        %730 = vmatpush2.bf16.msra.mxu0 0
        %731 = vmatprep.subr.bf16.mxu0 0
        %732 = vmatpush2.bf16.msra.mxu0 0
        %733 = vmatprep.subr.bf16.mxu0 0
        %734 = vmatpush2.bf16.msra.mxu0 0
        %735 = vmatprep.subr.bf16.mxu0 0
        %736 = vmatpush2.bf16.msra.mxu0 0
        %737 = vmatprep.subr.bf16.mxu0 0
        %738 = vmatpush2.bf16.msra.mxu0 0
        %739 = vmatprep.mubr.bf16.mxu0 0
        %740 = vmatmul.mubr.bf16.gmra.mxu0 %v705
        %v741 = vpop.f32.mrf.mxu0
        %v742 = vadd.f32 0.0, %v741
        %v743 = vpop.f32.mrf.mxu0
        %v744 = vadd.f32 0.0, %v743
        %v745 = vpop.f32.mrf.mxu0
        %v746 = vpop.f32.mrf.mxu0
        %747 = vdwg.mxu0
        %v748 = vadd.f32 %v667, %v742
        %v749 = vadd.f32 %v668, %v744
        %750 = vmatprep.subr.bf16.mxu0 0
        %751 = vmatpush1.bf16.msra.mxu0 0
        %752 = vmatprep.subr.bf16.mxu0 0
        %753 = vmatpush1.bf16.msra.mxu0 0
        %754 = vmatprep.subr.bf16.mxu0 0
        %755 = vmatpush1.bf16.msra.mxu0 0
        %756 = vmatprep.subr.bf16.mxu0 0
        %757 = vmatpush1.bf16.msra.mxu0 0
        %758 = vmatprep.subr.bf16.mxu0 0
        %759 = vmatpush1.bf16.msra.mxu0 0
        %760 = vmatprep.subr.bf16.mxu0 0
        %761 = vmatpush1.bf16.msra.mxu0 0
        %762 = vmatprep.subr.bf16.mxu0 %v413
        %763 = vmatpush1.bf16.msra.mxu0 %v412
        %764 = vmatprep.subr.bf16.mxu0 %v411
        %765 = vmatpush1.bf16.msra.mxu0 %v410
        %766 = vmatprep.subr.bf16.mxu0 0
        %767 = vmatpush2.bf16.msra.mxu0 0
        %768 = vmatprep.subr.bf16.mxu0 0
        %769 = vmatpush2.bf16.msra.mxu0 0
        %770 = vmatprep.subr.bf16.mxu0 0
        %771 = vmatpush2.bf16.msra.mxu0 0
        %772 = vmatprep.subr.bf16.mxu0 0
        %773 = vmatpush2.bf16.msra.mxu0 0
        %774 = vmatprep.subr.bf16.mxu0 0
        %775 = vmatpush2.bf16.msra.mxu0 0
        %776 = vmatprep.subr.bf16.mxu0 0
        %777 = vmatpush2.bf16.msra.mxu0 0
        %778 = vmatprep.subr.bf16.mxu0 0
        %779 = vmatpush2.bf16.msra.mxu0 0
        %780 = vmatprep.subr.bf16.mxu0 0
        %781 = vmatpush2.bf16.msra.mxu0 0
        %782 = vmatprep.mubr.bf16.mxu0 0
        %783 = vmatmul.mubr.bf16.gmra.mxu0 %v553
        %v784 = vpop.f32.mrf.mxu0
        %v785 = vadd.f32 0.0, %v784
        %v786 = vpop.f32.mrf.mxu0
        %v787 = vadd.f32 0.0, %v786
        %v788 = vpop.f32.mrf.mxu0
        %v789 = vpop.f32.mrf.mxu0
        %790 = vdwg.mxu0
        %791 = vmatprep.subr.bf16.mxu0 0
        %792 = vmatpush1.bf16.msra.mxu0 0
        %793 = vmatprep.subr.bf16.mxu0 0
        %794 = vmatpush1.bf16.msra.mxu0 0
        %795 = vmatprep.subr.bf16.mxu0 0
        %796 = vmatpush1.bf16.msra.mxu0 0
        %797 = vmatprep.subr.bf16.mxu0 0
        %798 = vmatpush1.bf16.msra.mxu0 0
        %799 = vmatprep.subr.bf16.mxu0 0
        %800 = vmatpush1.bf16.msra.mxu0 0
        %801 = vmatprep.subr.bf16.mxu0 0
        %802 = vmatpush1.bf16.msra.mxu0 0
        %803 = vmatprep.subr.bf16.mxu0 %v478
        %804 = vmatpush1.bf16.msra.mxu0 %v477
        %805 = vmatprep.subr.bf16.mxu0 %v476
        %806 = vmatpush1.bf16.msra.mxu0 %v475
        %807 = vmatprep.subr.bf16.mxu0 0
        %808 = vmatpush2.bf16.msra.mxu0 0
        %809 = vmatprep.subr.bf16.mxu0 0
        %810 = vmatpush2.bf16.msra.mxu0 0
        %811 = vmatprep.subr.bf16.mxu0 0
        %812 = vmatpush2.bf16.msra.mxu0 0
        %813 = vmatprep.subr.bf16.mxu0 0
        %814 = vmatpush2.bf16.msra.mxu0 0
        %815 = vmatprep.subr.bf16.mxu0 0
        %816 = vmatpush2.bf16.msra.mxu0 0
        %817 = vmatprep.subr.bf16.mxu0 0
        %818 = vmatpush2.bf16.msra.mxu0 0
        %819 = vmatprep.subr.bf16.mxu0 0
        %820 = vmatpush2.bf16.msra.mxu0 0
        %821 = vmatprep.subr.bf16.mxu0 0
        %822 = vmatpush2.bf16.msra.mxu0 0
        %823 = vmatprep.mubr.bf16.mxu0 0
        %824 = vmatmul.mubr.bf16.gmra.mxu0 %v420
        %v825 = vpop.f32.mrf.mxu0
        %v826 = vadd.f32 %v785, %v825
        %v827 = vpop.f32.mrf.mxu0
        %v828 = vadd.f32 %v787, %v827
        %v829 = vpop.f32.mrf.mxu0
        %v830 = vpop.f32.mrf.mxu0
        %831 = vdwg.mxu0
        %832 = vmatprep.subr.bf16.mxu0 0
        %833 = vmatpush1.bf16.msra.mxu0 0
        %834 = vmatprep.subr.bf16.mxu0 0
        %835 = vmatpush1.bf16.msra.mxu0 0
        %836 = vmatprep.subr.bf16.mxu0 0
        %837 = vmatpush1.bf16.msra.mxu0 0
        %838 = vmatprep.subr.bf16.mxu0 0
        %839 = vmatpush1.bf16.msra.mxu0 0
        %840 = vmatprep.subr.bf16.mxu0 0
        %841 = vmatpush1.bf16.msra.mxu0 0
        %842 = vmatprep.subr.bf16.mxu0 0
        %843 = vmatpush1.bf16.msra.mxu0 0
        %844 = vmatprep.subr.bf16.mxu0 %v547
        %845 = vmatpush1.bf16.msra.mxu0 %v546
        %846 = vmatprep.subr.bf16.mxu0 %v545
        %847 = vmatpush1.bf16.msra.mxu0 %v544
        %848 = vmatprep.subr.bf16.mxu0 0
        %849 = vmatpush2.bf16.msra.mxu0 0
        %850 = vmatprep.subr.bf16.mxu0 0
        %851 = vmatpush2.bf16.msra.mxu0 0
        %852 = vmatprep.subr.bf16.mxu0 0
        %853 = vmatpush2.bf16.msra.mxu0 0
        %854 = vmatprep.subr.bf16.mxu0 0
        %855 = vmatpush2.bf16.msra.mxu0 0
        %856 = vmatprep.subr.bf16.mxu0 0
        %857 = vmatpush2.bf16.msra.mxu0 0
        %858 = vmatprep.subr.bf16.mxu0 0
        %859 = vmatpush2.bf16.msra.mxu0 0
        %860 = vmatprep.subr.bf16.mxu0 0
        %861 = vmatpush2.bf16.msra.mxu0 0
        %862 = vmatprep.subr.bf16.mxu0 0
        %863 = vmatpush2.bf16.msra.mxu0 0
        %864 = vmatprep.mubr.bf16.mxu0 0
        %865 = vmatmul.mubr.bf16.gmra.mxu0 %v624
        %v866 = vpop.f32.mrf.mxu0
        %v867 = vadd.f32 0.0, %v866
        %v868 = vpop.f32.mrf.mxu0
        %v869 = vadd.f32 0.0, %v868
        %v870 = vpop.f32.mrf.mxu0
        %v871 = vpop.f32.mrf.mxu0
        %872 = vdwg.mxu0
        %v873 = vadd.f32 %v826, %v867
        %v874 = vadd.f32 %v828, %v869
        %875 = vmatprep.subr.bf16.mxu0 0
        %876 = vmatpush1.bf16.msra.mxu0 0
        %877 = vmatprep.subr.bf16.mxu0 0
        %878 = vmatpush1.bf16.msra.mxu0 0
        %879 = vmatprep.subr.bf16.mxu0 0
        %880 = vmatpush1.bf16.msra.mxu0 0
        %881 = vmatprep.subr.bf16.mxu0 0
        %882 = vmatpush1.bf16.msra.mxu0 0
        %883 = vmatprep.subr.bf16.mxu0 0
        %884 = vmatpush1.bf16.msra.mxu0 0
        %885 = vmatprep.subr.bf16.mxu0 0
        %886 = vmatpush1.bf16.msra.mxu0 0
        %887 = vmatprep.subr.bf16.mxu0 %v618
        %888 = vmatpush1.bf16.msra.mxu0 %v617
        %889 = vmatprep.subr.bf16.mxu0 %v616
        %890 = vmatpush1.bf16.msra.mxu0 %v615
        %891 = vmatprep.subr.bf16.mxu0 0
        %892 = vmatpush2.bf16.msra.mxu0 0
        %893 = vmatprep.subr.bf16.mxu0 0
        %894 = vmatpush2.bf16.msra.mxu0 0
        %895 = vmatprep.subr.bf16.mxu0 0
        %896 = vmatpush2.bf16.msra.mxu0 0
        %897 = vmatprep.subr.bf16.mxu0 0
        %898 = vmatpush2.bf16.msra.mxu0 0
        %899 = vmatprep.subr.bf16.mxu0 0
        %900 = vmatpush2.bf16.msra.mxu0 0
        %901 = vmatprep.subr.bf16.mxu0 0
        %902 = vmatpush2.bf16.msra.mxu0 0
        %903 = vmatprep.subr.bf16.mxu0 0
        %904 = vmatpush2.bf16.msra.mxu0 0
        %905 = vmatprep.subr.bf16.mxu0 0
        %906 = vmatpush2.bf16.msra.mxu0 0
        %907 = vmatprep.mubr.bf16.mxu0 0
        %908 = vmatmul.mubr.bf16.gmra.mxu0 %v705
        %v909 = vpop.f32.mrf.mxu0
        %v910 = vadd.f32 0.0, %v909
        %v911 = vpop.f32.mrf.mxu0
        %v912 = vadd.f32 0.0, %v911
        %v913 = vpop.f32.mrf.mxu0
        %v914 = vpop.f32.mrf.mxu0
        %915 = vdwg.mxu0
        %v916 = vadd.f32 %v873, %v910
        %v917 = vadd.f32 %v874, %v912
        %v919 = vunpack.c.l.b16 %v386
        %v920 = vpack.c.b16 %v919, %v919
        %v922 = vshrl.u32 %v920, 16
        %v924 = vshll.u32 %v920, 16
        %v926 = vrot.slane %v924, 1
        %v927 = vor.u32 %v922, %v926
        %v929 = vsel %vm418, %v927, 0
        %931 = vmatprep.subr.bf16.mxu0 0
        %932 = vmatpush1.bf16.msra.mxu0 0
        %933 = vmatprep.subr.bf16.mxu0 0
        %934 = vmatpush1.bf16.msra.mxu0 0
        %935 = vmatprep.subr.bf16.mxu0 0
        %936 = vmatpush1.bf16.msra.mxu0 0
        %937 = vmatprep.subr.bf16.mxu0 0
        %938 = vmatpush1.bf16.msra.mxu0 0
        %939 = vmatprep.subr.bf16.mxu0 0
        %940 = vmatpush1.bf16.msra.mxu0 0
        %941 = vmatprep.subr.bf16.mxu0 0
        %942 = vmatpush1.bf16.msra.mxu0 0
        %943 = vmatprep.subr.bf16.mxu0 %v699
        %944 = vmatpush1.bf16.msra.mxu0 %v698
        %945 = vmatprep.subr.bf16.mxu0 %v697
        %946 = vmatpush1.bf16.msra.mxu0 %v696
        %947 = vmatprep.subr.bf16.mxu0 0
        %948 = vmatpush2.bf16.msra.mxu0 0
        %949 = vmatprep.subr.bf16.mxu0 0
        %950 = vmatpush2.bf16.msra.mxu0 0
        %951 = vmatprep.subr.bf16.mxu0 0
        %952 = vmatpush2.bf16.msra.mxu0 0
        %953 = vmatprep.subr.bf16.mxu0 0
        %954 = vmatpush2.bf16.msra.mxu0 0
        %955 = vmatprep.subr.bf16.mxu0 0
        %956 = vmatpush2.bf16.msra.mxu0 0
        %957 = vmatprep.subr.bf16.mxu0 0
        %958 = vmatpush2.bf16.msra.mxu0 0
        %959 = vmatprep.subr.bf16.mxu0 0
        %960 = vmatpush2.bf16.msra.mxu0 0
        %961 = vmatprep.subr.bf16.mxu0 0
        %962 = vmatpush2.bf16.msra.mxu0 0
        %963 = vmatprep.mubr.bf16.mxu0 0
        %964 = vmatmul.mubr.bf16.gmra.mxu0 %v929
        %v965 = vpop.f32.mrf.mxu0
        %v966 = vadd.f32 0.0, %v965
        %v967 = vpop.f32.mrf.mxu0
        %v968 = vadd.f32 0.0, %v967
        %v969 = vpop.f32.mrf.mxu0
        %v970 = vpop.f32.mrf.mxu0
        %971 = vdwg.mxu0
        %v972 = vadd.f32 %v916, %v966
        %v973 = vadd.f32 %v917, %v968
        %974 = vmatprep.subr.bf16.mxu0 0
        %975 = vmatpush1.bf16.msra.mxu0 0
        %976 = vmatprep.subr.bf16.mxu0 0
        %977 = vmatpush1.bf16.msra.mxu0 0
        %978 = vmatprep.subr.bf16.mxu0 0
        %979 = vmatpush1.bf16.msra.mxu0 0
        %980 = vmatprep.subr.bf16.mxu0 0
        %981 = vmatpush1.bf16.msra.mxu0 0
        %982 = vmatprep.subr.bf16.mxu0 0
        %983 = vmatpush1.bf16.msra.mxu0 0
        %984 = vmatprep.subr.bf16.mxu0 0
        %985 = vmatpush1.bf16.msra.mxu0 0
        %986 = vmatprep.subr.bf16.mxu0 %v413
        %987 = vmatpush1.bf16.msra.mxu0 %v412
        %988 = vmatprep.subr.bf16.mxu0 %v411
        %989 = vmatpush1.bf16.msra.mxu0 %v410
        %990 = vmatprep.subr.bf16.mxu0 0
        %991 = vmatpush2.bf16.msra.mxu0 0
        %992 = vmatprep.subr.bf16.mxu0 0
        %993 = vmatpush2.bf16.msra.mxu0 0
        %994 = vmatprep.subr.bf16.mxu0 0
        %995 = vmatpush2.bf16.msra.mxu0 0
        %996 = vmatprep.subr.bf16.mxu0 0
        %997 = vmatpush2.bf16.msra.mxu0 0
        %998 = vmatprep.subr.bf16.mxu0 0
        %999 = vmatpush2.bf16.msra.mxu0 0
        %1000 = vmatprep.subr.bf16.mxu0 0
        %1001 = vmatpush2.bf16.msra.mxu0 0
        %1002 = vmatprep.subr.bf16.mxu0 0
        %1003 = vmatpush2.bf16.msra.mxu0 0
        %1004 = vmatprep.subr.bf16.mxu0 0
        %1005 = vmatpush2.bf16.msra.mxu0 0
        %1006 = vmatprep.mubr.bf16.mxu0 0
        %1007 = vmatmul.mubr.bf16.gmra.mxu0 %v624
        %v1008 = vpop.f32.mrf.mxu0
        %v1009 = vadd.f32 0.0, %v1008
        %v1010 = vpop.f32.mrf.mxu0
        %v1011 = vadd.f32 0.0, %v1010
        %v1012 = vpop.f32.mrf.mxu0
        %v1013 = vpop.f32.mrf.mxu0
        %1014 = vdwg.mxu0
        %1015 = vmatprep.subr.bf16.mxu0 0
        %1016 = vmatpush1.bf16.msra.mxu0 0
        %1017 = vmatprep.subr.bf16.mxu0 0
        %1018 = vmatpush1.bf16.msra.mxu0 0
        %1019 = vmatprep.subr.bf16.mxu0 0
        %1020 = vmatpush1.bf16.msra.mxu0 0
        %1021 = vmatprep.subr.bf16.mxu0 0
        %1022 = vmatpush1.bf16.msra.mxu0 0
        %1023 = vmatprep.subr.bf16.mxu0 0
        %1024 = vmatpush1.bf16.msra.mxu0 0
        %1025 = vmatprep.subr.bf16.mxu0 0
        %1026 = vmatpush1.bf16.msra.mxu0 0
        %1027 = vmatprep.subr.bf16.mxu0 %v478
        %1028 = vmatpush1.bf16.msra.mxu0 %v477
        %1029 = vmatprep.subr.bf16.mxu0 %v476
        %1030 = vmatpush1.bf16.msra.mxu0 %v475
        %1031 = vmatprep.subr.bf16.mxu0 0
        %1032 = vmatpush2.bf16.msra.mxu0 0
        %1033 = vmatprep.subr.bf16.mxu0 0
        %1034 = vmatpush2.bf16.msra.mxu0 0
        %1035 = vmatprep.subr.bf16.mxu0 0
        %1036 = vmatpush2.bf16.msra.mxu0 0
        %1037 = vmatprep.subr.bf16.mxu0 0
        %1038 = vmatpush2.bf16.msra.mxu0 0
        %1039 = vmatprep.subr.bf16.mxu0 0
        %1040 = vmatpush2.bf16.msra.mxu0 0
        %1041 = vmatprep.subr.bf16.mxu0 0
        %1042 = vmatpush2.bf16.msra.mxu0 0
        %1043 = vmatprep.subr.bf16.mxu0 0
        %1044 = vmatpush2.bf16.msra.mxu0 0
        %1045 = vmatprep.subr.bf16.mxu0 0
        %1046 = vmatpush2.bf16.msra.mxu0 0
        %1047 = vmatprep.mubr.bf16.mxu0 0
        %1048 = vmatmul.mubr.bf16.gmra.mxu0 %v553
        %v1049 = vpop.f32.mrf.mxu0
        %v1050 = vadd.f32 %v1009, %v1049
        %v1051 = vpop.f32.mrf.mxu0
        %v1052 = vadd.f32 %v1011, %v1051
        %v1053 = vpop.f32.mrf.mxu0
        %v1054 = vpop.f32.mrf.mxu0
        %1055 = vdwg.mxu0
        %1056 = vmatprep.subr.bf16.mxu0 0
        %1057 = vmatpush1.bf16.msra.mxu0 0
        %1058 = vmatprep.subr.bf16.mxu0 0
        %1059 = vmatpush1.bf16.msra.mxu0 0
        %1060 = vmatprep.subr.bf16.mxu0 0
        %1061 = vmatpush1.bf16.msra.mxu0 0
        %1062 = vmatprep.subr.bf16.mxu0 0
        %1063 = vmatpush1.bf16.msra.mxu0 0
        %1064 = vmatprep.subr.bf16.mxu0 0
        %1065 = vmatpush1.bf16.msra.mxu0 0
        %1066 = vmatprep.subr.bf16.mxu0 0
        %1067 = vmatpush1.bf16.msra.mxu0 0
        %1068 = vmatprep.subr.bf16.mxu0 %v547
        %1069 = vmatpush1.bf16.msra.mxu0 %v546
        %1070 = vmatprep.subr.bf16.mxu0 %v545
        %1071 = vmatpush1.bf16.msra.mxu0 %v544
        %1072 = vmatprep.subr.bf16.mxu0 0
        %1073 = vmatpush2.bf16.msra.mxu0 0
        %1074 = vmatprep.subr.bf16.mxu0 0
        %1075 = vmatpush2.bf16.msra.mxu0 0
        %1076 = vmatprep.subr.bf16.mxu0 0
        %1077 = vmatpush2.bf16.msra.mxu0 0
        %1078 = vmatprep.subr.bf16.mxu0 0
        %1079 = vmatpush2.bf16.msra.mxu0 0
        %1080 = vmatprep.subr.bf16.mxu0 0
        %1081 = vmatpush2.bf16.msra.mxu0 0
        %1082 = vmatprep.subr.bf16.mxu0 0
        %1083 = vmatpush2.bf16.msra.mxu0 0
        %1084 = vmatprep.subr.bf16.mxu0 0
        %1085 = vmatpush2.bf16.msra.mxu0 0
        %1086 = vmatprep.subr.bf16.mxu0 0
        %1087 = vmatpush2.bf16.msra.mxu0 0
        %1088 = vmatprep.mubr.bf16.mxu0 0
        %1089 = vmatmul.mubr.bf16.gmra.mxu0 %v705
        %v1090 = vpop.f32.mrf.mxu0
        %v1091 = vadd.f32 0.0, %v1090
        %v1092 = vpop.f32.mrf.mxu0
        %v1093 = vadd.f32 0.0, %v1092
        %v1094 = vpop.f32.mrf.mxu0
        %v1095 = vpop.f32.mrf.mxu0
        %1096 = vdwg.mxu0
        %v1097 = vadd.f32 %v1050, %v1091
        %v1098 = vadd.f32 %v1052, %v1093
        %1099 = vmatprep.subr.bf16.mxu0 0
        %1100 = vmatpush1.bf16.msra.mxu0 0
        %1101 = vmatprep.subr.bf16.mxu0 0
        %1102 = vmatpush1.bf16.msra.mxu0 0
        %1103 = vmatprep.subr.bf16.mxu0 0
        %1104 = vmatpush1.bf16.msra.mxu0 0
        %1105 = vmatprep.subr.bf16.mxu0 0
        %1106 = vmatpush1.bf16.msra.mxu0 0
        %1107 = vmatprep.subr.bf16.mxu0 0
        %1108 = vmatpush1.bf16.msra.mxu0 0
        %1109 = vmatprep.subr.bf16.mxu0 0
        %1110 = vmatpush1.bf16.msra.mxu0 0
        %1111 = vmatprep.subr.bf16.mxu0 %v618
        %1112 = vmatpush1.bf16.msra.mxu0 %v617
        %1113 = vmatprep.subr.bf16.mxu0 %v616
        %1114 = vmatpush1.bf16.msra.mxu0 %v615
        %1115 = vmatprep.subr.bf16.mxu0 0
        %1116 = vmatpush2.bf16.msra.mxu0 0
        %1117 = vmatprep.subr.bf16.mxu0 0
        %1118 = vmatpush2.bf16.msra.mxu0 0
        %1119 = vmatprep.subr.bf16.mxu0 0
        %1120 = vmatpush2.bf16.msra.mxu0 0
        %1121 = vmatprep.subr.bf16.mxu0 0
        %1122 = vmatpush2.bf16.msra.mxu0 0
        %1123 = vmatprep.subr.bf16.mxu0 0
        %1124 = vmatpush2.bf16.msra.mxu0 0
        %1125 = vmatprep.subr.bf16.mxu0 0
        %1126 = vmatpush2.bf16.msra.mxu0 0
        %1127 = vmatprep.subr.bf16.mxu0 0
        %1128 = vmatpush2.bf16.msra.mxu0 0
        %1129 = vmatprep.subr.bf16.mxu0 0
        %1130 = vmatpush2.bf16.msra.mxu0 0
        %1131 = vmatprep.mubr.bf16.mxu0 0
        %1132 = vmatmul.mubr.bf16.gmra.mxu0 %v929
        %v1133 = vpop.f32.mrf.mxu0
        %v1134 = vadd.f32 0.0, %v1133
        %v1135 = vpop.f32.mrf.mxu0
        %v1136 = vadd.f32 0.0, %v1135
        %v1137 = vpop.f32.mrf.mxu0
        %v1138 = vpop.f32.mrf.mxu0
        %1139 = vdwg.mxu0
        %v1140 = vadd.f32 %v1097, %v1134
        %v1141 = vadd.f32 %v1098, %v1136
        %v1143 = vunpack.c.l.b16 %v387
        %v1144 = vpack.c.b16 %v1143, %v1143
        %v1146 = vshrl.u32 %v1144, 16
        %v1148 = vshll.u32 %v1144, 16
        %v1150 = vrot.slane %v1148, 1
        %v1151 = vor.u32 %v1146, %v1150
        %v1153 = vsel %vm418, %v1151, 0
        %1155 = vmatprep.subr.bf16.mxu0 0
        %1156 = vmatpush1.bf16.msra.mxu0 0
        %1157 = vmatprep.subr.bf16.mxu0 0
        %1158 = vmatpush1.bf16.msra.mxu0 0
        %1159 = vmatprep.subr.bf16.mxu0 0
        %1160 = vmatpush1.bf16.msra.mxu0 0
        %1161 = vmatprep.subr.bf16.mxu0 0
        %1162 = vmatpush1.bf16.msra.mxu0 0
        %1163 = vmatprep.subr.bf16.mxu0 0
        %1164 = vmatpush1.bf16.msra.mxu0 0
        %1165 = vmatprep.subr.bf16.mxu0 0
        %1166 = vmatpush1.bf16.msra.mxu0 0
        %1167 = vmatprep.subr.bf16.mxu0 %v699
        %1168 = vmatpush1.bf16.msra.mxu0 %v698
        %1169 = vmatprep.subr.bf16.mxu0 %v697
        %1170 = vmatpush1.bf16.msra.mxu0 %v696
        %1171 = vmatprep.subr.bf16.mxu0 0
        %1172 = vmatpush2.bf16.msra.mxu0 0
        %1173 = vmatprep.subr.bf16.mxu0 0
        %1174 = vmatpush2.bf16.msra.mxu0 0
        %1175 = vmatprep.subr.bf16.mxu0 0
        %1176 = vmatpush2.bf16.msra.mxu0 0
        %1177 = vmatprep.subr.bf16.mxu0 0
        %1178 = vmatpush2.bf16.msra.mxu0 0
        %1179 = vmatprep.subr.bf16.mxu0 0
        %1180 = vmatpush2.bf16.msra.mxu0 0
        %1181 = vmatprep.subr.bf16.mxu0 0
        %1182 = vmatpush2.bf16.msra.mxu0 0
        %1183 = vmatprep.subr.bf16.mxu0 0
        %1184 = vmatpush2.bf16.msra.mxu0 0
        %1185 = vmatprep.subr.bf16.mxu0 0
        %1186 = vmatpush2.bf16.msra.mxu0 0
        %1187 = vmatprep.mubr.bf16.mxu0 0
        %1188 = vmatmul.mubr.bf16.gmra.mxu0 %v1153
        %v1189 = vpop.f32.mrf.mxu0
        %v1190 = vadd.f32 0.0, %v1189
        %v1191 = vpop.f32.mrf.mxu0
        %v1192 = vadd.f32 0.0, %v1191
        %v1193 = vpop.f32.mrf.mxu0
        %v1194 = vpop.f32.mrf.mxu0
        %1195 = vdwg.mxu0
        %v1196 = vadd.f32 %v1140, %v1190
        %v1197 = vadd.f32 %v1141, %v1192
        %1198 = vmatprep.subr.bf16.mxu0 0
        %1199 = vmatpush1.bf16.msra.mxu0 0
        %1200 = vmatprep.subr.bf16.mxu0 0
        %1201 = vmatpush1.bf16.msra.mxu0 0
        %1202 = vmatprep.subr.bf16.mxu0 0
        %1203 = vmatpush1.bf16.msra.mxu0 0
        %1204 = vmatprep.subr.bf16.mxu0 0
        %1205 = vmatpush1.bf16.msra.mxu0 0
        %1206 = vmatprep.subr.bf16.mxu0 0
        %1207 = vmatpush1.bf16.msra.mxu0 0
        %1208 = vmatprep.subr.bf16.mxu0 0
        %1209 = vmatpush1.bf16.msra.mxu0 0
        %1210 = vmatprep.subr.bf16.mxu0 %v413
        %1211 = vmatpush1.bf16.msra.mxu0 %v412
        %1212 = vmatprep.subr.bf16.mxu0 %v411
        %1213 = vmatpush1.bf16.msra.mxu0 %v410
        %1214 = vmatprep.subr.bf16.mxu0 0
        %1215 = vmatpush2.bf16.msra.mxu0 0
        %1216 = vmatprep.subr.bf16.mxu0 0
        %1217 = vmatpush2.bf16.msra.mxu0 0
        %1218 = vmatprep.subr.bf16.mxu0 0
        %1219 = vmatpush2.bf16.msra.mxu0 0
        %1220 = vmatprep.subr.bf16.mxu0 0
        %1221 = vmatpush2.bf16.msra.mxu0 0
        %1222 = vmatprep.subr.bf16.mxu0 0
        %1223 = vmatpush2.bf16.msra.mxu0 0
        %1224 = vmatprep.subr.bf16.mxu0 0
        %1225 = vmatpush2.bf16.msra.mxu0 0
        %1226 = vmatprep.subr.bf16.mxu0 0
        %1227 = vmatpush2.bf16.msra.mxu0 0
        %1228 = vmatprep.subr.bf16.mxu0 0
        %1229 = vmatpush2.bf16.msra.mxu0 0
        %1230 = vmatprep.mubr.bf16.mxu0 0
        %1231 = vmatmul.mubr.bf16.gmra.mxu0 %v705
        %v1232 = vpop.f32.mrf.mxu0
        %v1233 = vadd.f32 0.0, %v1232
        %v1234 = vpop.f32.mrf.mxu0
        %v1235 = vadd.f32 0.0, %v1234
        %v1236 = vpop.f32.mrf.mxu0
        %v1237 = vpop.f32.mrf.mxu0
        %1238 = vdwg.mxu0
        %1239 = vmatprep.subr.bf16.mxu0 0
        %1240 = vmatpush1.bf16.msra.mxu0 0
        %1241 = vmatprep.subr.bf16.mxu0 0
        %1242 = vmatpush1.bf16.msra.mxu0 0
        %1243 = vmatprep.subr.bf16.mxu0 0
        %1244 = vmatpush1.bf16.msra.mxu0 0
        %1245 = vmatprep.subr.bf16.mxu0 0
        %1246 = vmatpush1.bf16.msra.mxu0 0
        %1247 = vmatprep.subr.bf16.mxu0 0
        %1248 = vmatpush1.bf16.msra.mxu0 0
        %1249 = vmatprep.subr.bf16.mxu0 0
        %1250 = vmatpush1.bf16.msra.mxu0 0
        %1251 = vmatprep.subr.bf16.mxu0 %v478
        %1252 = vmatpush1.bf16.msra.mxu0 %v477
        %1253 = vmatprep.subr.bf16.mxu0 %v476
        %1254 = vmatpush1.bf16.msra.mxu0 %v475
        %1255 = vmatprep.subr.bf16.mxu0 0
        %1256 = vmatpush2.bf16.msra.mxu0 0
        %1257 = vmatprep.subr.bf16.mxu0 0
        %1258 = vmatpush2.bf16.msra.mxu0 0
        %1259 = vmatprep.subr.bf16.mxu0 0
        %1260 = vmatpush2.bf16.msra.mxu0 0
        %1261 = vmatprep.subr.bf16.mxu0 0
        %1262 = vmatpush2.bf16.msra.mxu0 0
        %1263 = vmatprep.subr.bf16.mxu0 0
        %1264 = vmatpush2.bf16.msra.mxu0 0
        %1265 = vmatprep.subr.bf16.mxu0 0
        %1266 = vmatpush2.bf16.msra.mxu0 0
        %1267 = vmatprep.subr.bf16.mxu0 0
        %1268 = vmatpush2.bf16.msra.mxu0 0
        %1269 = vmatprep.subr.bf16.mxu0 0
        %1270 = vmatpush2.bf16.msra.mxu0 0
        %1271 = vmatprep.mubr.bf16.mxu0 0
        %1272 = vmatmul.mubr.bf16.gmra.mxu0 %v624
        %v1273 = vpop.f32.mrf.mxu0
        %v1274 = vadd.f32 %v1233, %v1273
        %v1275 = vpop.f32.mrf.mxu0
        %v1276 = vadd.f32 %v1235, %v1275
        %v1277 = vpop.f32.mrf.mxu0
        %v1278 = vpop.f32.mrf.mxu0
        %1279 = vdwg.mxu0
        %1280 = vmatprep.subr.bf16.mxu0 0
        %1281 = vmatpush1.bf16.msra.mxu0 0
        %1282 = vmatprep.subr.bf16.mxu0 0
        %1283 = vmatpush1.bf16.msra.mxu0 0
        %1284 = vmatprep.subr.bf16.mxu0 0
        %1285 = vmatpush1.bf16.msra.mxu0 0
        %1286 = vmatprep.subr.bf16.mxu0 0
        %1287 = vmatpush1.bf16.msra.mxu0 0
        %1288 = vmatprep.subr.bf16.mxu0 0
        %1289 = vmatpush1.bf16.msra.mxu0 0
        %1290 = vmatprep.subr.bf16.mxu0 0
        %1291 = vmatpush1.bf16.msra.mxu0 0
        %1292 = vmatprep.subr.bf16.mxu0 %v547
        %1293 = vmatpush1.bf16.msra.mxu0 %v546
        %1294 = vmatprep.subr.bf16.mxu0 %v545
        %1295 = vmatpush1.bf16.msra.mxu0 %v544
        %1296 = vmatprep.subr.bf16.mxu0 0
        %1297 = vmatpush2.bf16.msra.mxu0 0
        %1298 = vmatprep.subr.bf16.mxu0 0
        %1299 = vmatpush2.bf16.msra.mxu0 0
        %1300 = vmatprep.subr.bf16.mxu0 0
        %1301 = vmatpush2.bf16.msra.mxu0 0
        %1302 = vmatprep.subr.bf16.mxu0 0
        %1303 = vmatpush2.bf16.msra.mxu0 0
        %1304 = vmatprep.subr.bf16.mxu0 0
        %1305 = vmatpush2.bf16.msra.mxu0 0
        %1306 = vmatprep.subr.bf16.mxu0 0
        %1307 = vmatpush2.bf16.msra.mxu0 0
        %1308 = vmatprep.subr.bf16.mxu0 0
        %1309 = vmatpush2.bf16.msra.mxu0 0
        %1310 = vmatprep.subr.bf16.mxu0 0
        %1311 = vmatpush2.bf16.msra.mxu0 0
        %1312 = vmatprep.mubr.bf16.mxu0 0
        %1313 = vmatmul.mubr.bf16.gmra.mxu0 %v929
        %v1314 = vpop.f32.mrf.mxu0
        %v1315 = vadd.f32 0.0, %v1314
        %v1316 = vpop.f32.mrf.mxu0
        %v1317 = vadd.f32 0.0, %v1316
        %v1318 = vpop.f32.mrf.mxu0
        %v1319 = vpop.f32.mrf.mxu0
        %1320 = vdwg.mxu0
        %v1321 = vadd.f32 %v1274, %v1315
        %v1322 = vadd.f32 %v1276, %v1317
        %1323 = vmatprep.subr.bf16.mxu0 0
        %1324 = vmatpush1.bf16.msra.mxu0 0
        %1325 = vmatprep.subr.bf16.mxu0 0
        %1326 = vmatpush1.bf16.msra.mxu0 0
        %1327 = vmatprep.subr.bf16.mxu0 0
        %1328 = vmatpush1.bf16.msra.mxu0 0
        %1329 = vmatprep.subr.bf16.mxu0 0
        %1330 = vmatpush1.bf16.msra.mxu0 0
        %1331 = vmatprep.subr.bf16.mxu0 0
        %1332 = vmatpush1.bf16.msra.mxu0 0
        %1333 = vmatprep.subr.bf16.mxu0 0
        %1334 = vmatpush1.bf16.msra.mxu0 0
        %1335 = vmatprep.subr.bf16.mxu0 %v618
        %1336 = vmatpush1.bf16.msra.mxu0 %v617
        %1337 = vmatprep.subr.bf16.mxu0 %v616
        %1338 = vmatpush1.bf16.msra.mxu0 %v615
        %1339 = vmatprep.subr.bf16.mxu0 0
        %1340 = vmatpush2.bf16.msra.mxu0 0
        %1341 = vmatprep.subr.bf16.mxu0 0
        %1342 = vmatpush2.bf16.msra.mxu0 0
        %1343 = vmatprep.subr.bf16.mxu0 0
        %1344 = vmatpush2.bf16.msra.mxu0 0
        %1345 = vmatprep.subr.bf16.mxu0 0
        %1346 = vmatpush2.bf16.msra.mxu0 0
        %1347 = vmatprep.subr.bf16.mxu0 0
        %1348 = vmatpush2.bf16.msra.mxu0 0
        %1349 = vmatprep.subr.bf16.mxu0 0
        %1350 = vmatpush2.bf16.msra.mxu0 0
        %1351 = vmatprep.subr.bf16.mxu0 0
        %1352 = vmatpush2.bf16.msra.mxu0 0
        %1353 = vmatprep.subr.bf16.mxu0 0
        %1354 = vmatpush2.bf16.msra.mxu0 0
        %1355 = vmatprep.mubr.bf16.mxu0 0
        %1356 = vmatmul.mubr.bf16.gmra.mxu0 %v1153
        %v1357 = vpop.f32.mrf.mxu0
        %v1358 = vadd.f32 0.0, %v1357
        %v1359 = vpop.f32.mrf.mxu0
        %v1360 = vadd.f32 0.0, %v1359
        %v1361 = vpop.f32.mrf.mxu0
        %v1362 = vpop.f32.mrf.mxu0
        %1363 = vdwg.mxu0
        %v1364 = vadd.f32 %v1321, %v1358
        %v1365 = vadd.f32 %v1322, %v1360
        %v1367 = vunpack.c.l.b16 %v388
        %v1368 = vpack.c.b16 %v1367, %v1367
        %v1370 = vshrl.u32 %v1368, 16
        %v1372 = vshll.u32 %v1368, 16
        %v1374 = vrot.slane %v1372, 1
        %v1375 = vor.u32 %v1370, %v1374
        %v1377 = vsel %vm418, %v1375, 0
        %1379 = vmatprep.subr.bf16.mxu0 0
        %1380 = vmatpush1.bf16.msra.mxu0 0
        %1381 = vmatprep.subr.bf16.mxu0 0
        %1382 = vmatpush1.bf16.msra.mxu0 0
        %1383 = vmatprep.subr.bf16.mxu0 0
        %1384 = vmatpush1.bf16.msra.mxu0 0
        %1385 = vmatprep.subr.bf16.mxu0 0
        %1386 = vmatpush1.bf16.msra.mxu0 0
        %1387 = vmatprep.subr.bf16.mxu0 0
        %1388 = vmatpush1.bf16.msra.mxu0 0
        %1389 = vmatprep.subr.bf16.mxu0 0
        %1390 = vmatpush1.bf16.msra.mxu0 0
        %1391 = vmatprep.subr.bf16.mxu0 %v699
        %1392 = vmatpush1.bf16.msra.mxu0 %v698
        %1393 = vmatprep.subr.bf16.mxu0 %v697
        %1394 = vmatpush1.bf16.msra.mxu0 %v696
        %1395 = vmatprep.subr.bf16.mxu0 0
        %1396 = vmatpush2.bf16.msra.mxu0 0
        %1397 = vmatprep.subr.bf16.mxu0 0
        %1398 = vmatpush2.bf16.msra.mxu0 0
        %1399 = vmatprep.subr.bf16.mxu0 0
        %1400 = vmatpush2.bf16.msra.mxu0 0
        %1401 = vmatprep.subr.bf16.mxu0 0
        %1402 = vmatpush2.bf16.msra.mxu0 0
        %1403 = vmatprep.subr.bf16.mxu0 0
        %1404 = vmatpush2.bf16.msra.mxu0 0
        %1405 = vmatprep.subr.bf16.mxu0 0
        %1406 = vmatpush2.bf16.msra.mxu0 0
        %1407 = vmatprep.subr.bf16.mxu0 0
        %1408 = vmatpush2.bf16.msra.mxu0 0
        %1409 = vmatprep.subr.bf16.mxu0 0
        %1410 = vmatpush2.bf16.msra.mxu0 0
        %1411 = vmatprep.mubr.bf16.mxu0 0
        %1412 = vmatmul.mubr.bf16.gmra.mxu0 %v1377
        %v1413 = vpop.f32.mrf.mxu0
        %v1414 = vadd.f32 0.0, %v1413
        %v1415 = vpop.f32.mrf.mxu0
        %v1416 = vadd.f32 0.0, %v1415
        %v1417 = vpop.f32.mrf.mxu0
        %v1418 = vpop.f32.mrf.mxu0
        %1419 = vdwg.mxu0
        %v1420 = vadd.f32 %v1364, %v1414
        %v1421 = vadd.f32 %v1365, %v1416
        %v1422 = vld [vmem:[%s2] sm:$0x1]
        %1425 = vrot.lane.b32.xlu0 %v748, 44
        %v1426 = vpop.permute.xlu0 %1425
        %1427 = vrot.lane.b32.xlu0 %v749, 44
        %v1428 = vpop.permute.xlu0 %1427
        %vm1429 = vcmask 359424
        %v1430 = vsel %vm1429, %v1426, %v1428
        %v1432 = vmax.f32 %v748, %v1430
        %1435 = vrot.lane.b32.xlu0 %v972, 44
        %v1436 = vpop.permute.xlu0 %1435
        %1437 = vrot.lane.b32.xlu0 %v973, 44
        %v1438 = vpop.permute.xlu0 %1437
        %v1439 = vsel %vm1429, %v1436, %v1438
        %v1441 = vmax.f32 %v972, %v1439
        %v1442 = vmax.f32 %v1432, %v1441
        %v1444 = vlaneseq
        %v1445 = vshrl.u32 %v1444, 7
        %v1446 = vsub.s32 0, %v1445
        %v1447 = vrot.slane %v1422, %v1446
        %v1449 = vadd.f32 %v1442, %v1447
        %v1450 = vmax.f32 %v1449, 0.0
        %v1451 = vpack.c.bf16 %v1450, %v1450
        %1454 = vrot.lane.b32.xlu0 %v1196, 44
        %v1455 = vpop.permute.xlu0 %1454
        %1456 = vrot.lane.b32.xlu0 %v1197, 44
        %v1457 = vpop.permute.xlu0 %1456
        %v1458 = vsel %vm1429, %v1455, %v1457
        %v1460 = vmax.f32 %v1196, %v1458
        %1463 = vrot.lane.b32.xlu0 %v1420, 44
        %v1464 = vpop.permute.xlu0 %1463
        %1465 = vrot.lane.b32.xlu0 %v1421, 44
        %v1466 = vpop.permute.xlu0 %1465
        %v1467 = vsel %vm1429, %v1464, %v1466
        %v1469 = vmax.f32 %v1420, %v1467
        %v1470 = vmax.f32 %v1460, %v1469
        %v1471 = vadd.f32 %v1470, %v1447
        %v1472 = vmax.f32 %v1471, 0.0
        %v1473 = vpack.c.bf16 %v1472, %v1472
        %v1474 = vld [vmem:[%s3] sm:$0xff]
        %v1475 = vld [vmem:[%s3 + $0x8] sm:$0xff]
        %v1476 = vld [vmem:[%s3 + $0x10] sm:$0xff]
        %v1477 = vld [vmem:[%s3 + $0x18] sm:$0xff]
        %v1478 = vld [vmem:[%s3 + $0x20] sm:$0xff]
        %v1479 = vld [vmem:[%s3 + $0x28] sm:$0xff]
        %v1480 = vld [vmem:[%s3 + $0x30] sm:$0xff]
        %v1481 = vld [vmem:[%s3 + $0x38] sm:$0xff]
        %v1482 = vld [vmem:[%s3 + $0x40] sm:$0xff]
        %v1483 = vld [vmem:[%s3 + $0x48] sm:$0xff]
        %v1484 = vld [vmem:[%s3 + $0x50] sm:$0x33]
        %s1485 = scalar_lea.vmem %s3, 88
        %v1486 = vld [vmem:[%s1485] sm:$0xff]
        %v1487 = vld [vmem:[%s1485 + $0x8] sm:$0xff]
        %v1488 = vld [vmem:[%s1485 + $0x10] sm:$0xff]
        %v1489 = vld [vmem:[%s1485 + $0x18] sm:$0xff]
        %v1490 = vld [vmem:[%s1485 + $0x20] sm:$0xff]
        %v1491 = vld [vmem:[%s1485 + $0x28] sm:$0xff]
        %v1492 = vld [vmem:[%s1485 + $0x30] sm:$0xff]
        %v1493 = vld [vmem:[%s1485 + $0x38] sm:$0xff]
        %v1494 = vld [vmem:[%s1485 + $0x40] sm:$0xff]
        %v1495 = vld [vmem:[%s1485 + $0x48] sm:$0xff]
        %v1496 = vld [vmem:[%s1485 + $0x50] sm:$0x33]
        %s1497 = scalar_lea.vmem %s3, 176
        %v1498 = vld [vmem:[%s1497] sm:$0xff]
        %v1499 = vld [vmem:[%s1497 + $0x8] sm:$0xff]
        %v1500 = vld [vmem:[%s1497 + $0x10] sm:$0xff]
        %v1501 = vld [vmem:[%s1497 + $0x18] sm:$0xff]
        %v1502 = vld [vmem:[%s1497 + $0x20] sm:$0xff]
        %v1503 = vld [vmem:[%s1497 + $0x28] sm:$0xff]
        %v1504 = vld [vmem:[%s1497 + $0x30] sm:$0xff]
        %v1505 = vld [vmem:[%s1497 + $0x38] sm:$0xff]
        %v1506 = vld [vmem:[%s1497 + $0x40] sm:$0xff]
        %v1507 = vld [vmem:[%s1497 + $0x48] sm:$0xff]
        %v1508 = vld [vmem:[%s1497 + $0x50] sm:$0x33]
        %v1520 = vunpack.c.l.b16 %v1486
        %v1521 = vunpack.c.h.b16 %v1486
        %v1522 = vunpack.c.l.b16 %v1487
        %v1523 = vunpack.c.h.b16 %v1487
        %v1524 = vunpack.c.l.b16 %v1488
        %v1525 = vunpack.c.h.b16 %v1488
        %v1526 = vunpack.c.l.b16 %v1489
        %v1527 = vunpack.c.h.b16 %v1489
        %v1528 = vunpack.c.l.b16 %v1490
        %v1529 = vunpack.c.h.b16 %v1490
        %v1530 = vunpack.c.l.b16 %v1491
        %v1531 = vunpack.c.h.b16 %v1491
        %v1532 = vunpack.c.l.b16 %v1492
        %v1533 = vunpack.c.h.b16 %v1492
        %v1534 = vunpack.c.l.b16 %v1493
        %v1535 = vunpack.c.h.b16 %v1493
        %v1536 = vunpack.c.l.b16 %v1494
        %v1537 = vunpack.c.h.b16 %v1494
        %v1538 = vunpack.c.l.b16 %v1495
        %v1539 = vunpack.c.h.b16 %v1495
        %v1540 = vunpack.c.l.b16 %v1496
        %v1541 = vunpack.c.h.b16 %v1496
        %v1542 = vpack.c.b16 %v1522, %v1520
        %v1543 = vpack.c.b16 %v1523, %v1521
        %v1544 = vpack.c.b16 %v1526, %v1524
        %v1545 = vpack.c.b16 %v1527, %v1525
        %v1546 = vpack.c.b16 %v1530, %v1528
        %v1547 = vpack.c.b16 %v1531, %v1529
        %v1548 = vpack.c.b16 %v1534, %v1532
        %v1549 = vpack.c.b16 %v1535, %v1533
        %v1550 = vpack.c.b16 %v1538, %v1536
        %v1551 = vpack.c.b16 %v1539, %v1537
        %v1552 = vpack.c.b16 %v1540, %v1540
        %v1553 = vpack.c.b16 %v1541, %v1541
        %vm1564 = vcmask 687104
        %v1566 = vsel %vm1564, %v1473, 0
        %vm1568 = vcmask 1041408
        %v1570 = vsel %vm1568, %v1552, 0
        %v1573 = vsel %vm1568, %v1553, 0
        %1575 = vmatprep.subr.bf16.mxu0 0
        %1576 = vmatpush1.bf16.msra.mxu0 0
        %1577 = vmatprep.subr.bf16.mxu0 0
        %1578 = vmatpush1.bf16.msra.mxu0 0
        %1579 = vmatprep.subr.bf16.mxu0 %v1573
        %1580 = vmatpush1.bf16.msra.mxu0 %v1570
        %1581 = vmatprep.subr.bf16.mxu0 %v1551
        %1582 = vmatpush1.bf16.msra.mxu0 %v1550
        %1583 = vmatprep.subr.bf16.mxu0 %v1549
        %1584 = vmatpush1.bf16.msra.mxu0 %v1548
        %1585 = vmatprep.subr.bf16.mxu0 %v1547
        %1586 = vmatpush1.bf16.msra.mxu0 %v1546
        %1587 = vmatprep.subr.bf16.mxu0 %v1545
        %1588 = vmatpush1.bf16.msra.mxu0 %v1544
        %1589 = vmatprep.subr.bf16.mxu0 %v1543
        %1590 = vmatpush1.bf16.msra.mxu0 %v1542
        %1591 = vmatprep.subr.bf16.mxu0 0
        %1592 = vmatpush2.bf16.msra.mxu0 0
        %1593 = vmatprep.subr.bf16.mxu0 0
        %1594 = vmatpush2.bf16.msra.mxu0 0
        %1595 = vmatprep.subr.bf16.mxu0 0
        %1596 = vmatpush2.bf16.msra.mxu0 0
        %1597 = vmatprep.subr.bf16.mxu0 0
        %1598 = vmatpush2.bf16.msra.mxu0 0
        %1599 = vmatprep.subr.bf16.mxu0 0
        %1600 = vmatpush2.bf16.msra.mxu0 0
        %1601 = vmatprep.subr.bf16.mxu0 0
        %1602 = vmatpush2.bf16.msra.mxu0 0
        %1603 = vmatprep.subr.bf16.mxu0 0
        %1604 = vmatpush2.bf16.msra.mxu0 0
        %1605 = vmatprep.subr.bf16.mxu0 0
        %1606 = vmatpush2.bf16.msra.mxu0 0
        %1607 = vmatprep.mubr.bf16.mxu0 0
        %1608 = vmatmul.mubr.bf16.gmra.mxu0 %v1566
        %v1609 = vpop.f32.mrf.mxu0
        %v1610 = vadd.f32 0.0, %v1609
        %v1611 = vpop.f32.mrf.mxu0
        %v1612 = vadd.f32 0.0, %v1611
        %v1613 = vpop.f32.mrf.mxu0
        %v1614 = vpop.f32.mrf.mxu0
        %1615 = vdwg.mxu0
        %v1627 = vunpack.c.l.b16 %v1474
        %v1628 = vunpack.c.h.b16 %v1474
        %v1629 = vunpack.c.l.b16 %v1475
        %v1630 = vunpack.c.h.b16 %v1475
        %v1631 = vunpack.c.l.b16 %v1476
        %v1632 = vunpack.c.h.b16 %v1476
        %v1633 = vunpack.c.l.b16 %v1477
        %v1634 = vunpack.c.h.b16 %v1477
        %v1635 = vunpack.c.l.b16 %v1478
        %v1636 = vunpack.c.h.b16 %v1478
        %v1637 = vunpack.c.l.b16 %v1479
        %v1638 = vunpack.c.h.b16 %v1479
        %v1639 = vunpack.c.l.b16 %v1480
        %v1640 = vunpack.c.h.b16 %v1480
        %v1641 = vunpack.c.l.b16 %v1481
        %v1642 = vunpack.c.h.b16 %v1481
        %v1643 = vunpack.c.l.b16 %v1482
        %v1644 = vunpack.c.h.b16 %v1482
        %v1645 = vunpack.c.l.b16 %v1483
        %v1646 = vunpack.c.h.b16 %v1483
        %v1647 = vunpack.c.l.b16 %v1484
        %v1648 = vunpack.c.h.b16 %v1484
        %v1649 = vpack.c.b16 %v1629, %v1627
        %v1650 = vpack.c.b16 %v1630, %v1628
        %v1651 = vpack.c.b16 %v1633, %v1631
        %v1652 = vpack.c.b16 %v1634, %v1632
        %v1653 = vpack.c.b16 %v1637, %v1635
        %v1654 = vpack.c.b16 %v1638, %v1636
        %v1655 = vpack.c.b16 %v1641, %v1639
        %v1656 = vpack.c.b16 %v1642, %v1640
        %v1657 = vpack.c.b16 %v1645, %v1643
        %v1658 = vpack.c.b16 %v1646, %v1644
        %v1659 = vpack.c.b16 %v1647, %v1647
        %v1660 = vpack.c.b16 %v1648, %v1648
        %v1672 = vsel %vm1564, %v1451, 0
        %v1675 = vsel %vm1568, %v1659, 0
        %v1678 = vsel %vm1568, %v1660, 0
        %1680 = vmatprep.subr.bf16.mxu0 0
        %1681 = vmatpush1.bf16.msra.mxu0 0
        %1682 = vmatprep.subr.bf16.mxu0 0
        %1683 = vmatpush1.bf16.msra.mxu0 0
        %1684 = vmatprep.subr.bf16.mxu0 %v1678
        %1685 = vmatpush1.bf16.msra.mxu0 %v1675
        %1686 = vmatprep.subr.bf16.mxu0 %v1658
        %1687 = vmatpush1.bf16.msra.mxu0 %v1657
        %1688 = vmatprep.subr.bf16.mxu0 %v1656
        %1689 = vmatpush1.bf16.msra.mxu0 %v1655
        %1690 = vmatprep.subr.bf16.mxu0 %v1654
        %1691 = vmatpush1.bf16.msra.mxu0 %v1653
        %1692 = vmatprep.subr.bf16.mxu0 %v1652
        %1693 = vmatpush1.bf16.msra.mxu0 %v1651
        %1694 = vmatprep.subr.bf16.mxu0 %v1650
        %1695 = vmatpush1.bf16.msra.mxu0 %v1649
        %1696 = vmatprep.subr.bf16.mxu0 0
        %1697 = vmatpush2.bf16.msra.mxu0 0
        %1698 = vmatprep.subr.bf16.mxu0 0
        %1699 = vmatpush2.bf16.msra.mxu0 0
        %1700 = vmatprep.subr.bf16.mxu0 0
        %1701 = vmatpush2.bf16.msra.mxu0 0
        %1702 = vmatprep.subr.bf16.mxu0 0
        %1703 = vmatpush2.bf16.msra.mxu0 0
        %1704 = vmatprep.subr.bf16.mxu0 0
        %1705 = vmatpush2.bf16.msra.mxu0 0
        %1706 = vmatprep.subr.bf16.mxu0 0
        %1707 = vmatpush2.bf16.msra.mxu0 0
        %1708 = vmatprep.subr.bf16.mxu0 0
        %1709 = vmatpush2.bf16.msra.mxu0 0
        %1710 = vmatprep.subr.bf16.mxu0 0
        %1711 = vmatpush2.bf16.msra.mxu0 0
        %1712 = vmatprep.mubr.bf16.mxu0 0
        %1713 = vmatmul.mubr.bf16.gmra.mxu0 %v1672
        %v1714 = vpop.f32.mrf.mxu0
        %v1715 = vadd.f32 %v1610, %v1714
        %v1716 = vpop.f32.mrf.mxu0
        %v1717 = vadd.f32 %v1612, %v1716
        %v1718 = vpop.f32.mrf.mxu0
        %v1719 = vpop.f32.mrf.mxu0
        %1720 = vdwg.mxu0
        %v1721 = vshrl.u32 %v1451, 16
        %v1723 = vshll.u32 %v1451, 16
        %v1725 = vrot.slane %v1723, 1
        %v1726 = vor.u32 %v1721, %v1725
        %v1738 = vunpack.c.l.b16 %v1498
        %v1739 = vunpack.c.h.b16 %v1498
        %v1740 = vunpack.c.l.b16 %v1499
        %v1741 = vunpack.c.h.b16 %v1499
        %v1742 = vunpack.c.l.b16 %v1500
        %v1743 = vunpack.c.h.b16 %v1500
        %v1744 = vunpack.c.l.b16 %v1501
        %v1745 = vunpack.c.h.b16 %v1501
        %v1746 = vunpack.c.l.b16 %v1502
        %v1747 = vunpack.c.h.b16 %v1502
        %v1748 = vunpack.c.l.b16 %v1503
        %v1749 = vunpack.c.h.b16 %v1503
        %v1750 = vunpack.c.l.b16 %v1504
        %v1751 = vunpack.c.h.b16 %v1504
        %v1752 = vunpack.c.l.b16 %v1505
        %v1753 = vunpack.c.h.b16 %v1505
        %v1754 = vunpack.c.l.b16 %v1506
        %v1755 = vunpack.c.h.b16 %v1506
        %v1756 = vunpack.c.l.b16 %v1507
        %v1757 = vunpack.c.h.b16 %v1507
        %v1758 = vunpack.c.l.b16 %v1508
        %v1759 = vunpack.c.h.b16 %v1508
        %v1760 = vpack.c.b16 %v1740, %v1738
        %v1761 = vpack.c.b16 %v1741, %v1739
        %v1762 = vpack.c.b16 %v1744, %v1742
        %v1763 = vpack.c.b16 %v1745, %v1743
        %v1764 = vpack.c.b16 %v1748, %v1746
        %v1765 = vpack.c.b16 %v1749, %v1747
        %v1766 = vpack.c.b16 %v1752, %v1750
        %v1767 = vpack.c.b16 %v1753, %v1751
        %v1768 = vpack.c.b16 %v1756, %v1754
        %v1769 = vpack.c.b16 %v1757, %v1755
        %v1770 = vpack.c.b16 %v1758, %v1758
        %v1771 = vpack.c.b16 %v1759, %v1759
        %v1783 = vsel %vm1564, %v1726, 0
        %v1786 = vsel %vm1568, %v1770, 0
        %v1789 = vsel %vm1568, %v1771, 0
        %1791 = vmatprep.subr.bf16.mxu0 0
        %1792 = vmatpush1.bf16.msra.mxu0 0
        %1793 = vmatprep.subr.bf16.mxu0 0
        %1794 = vmatpush1.bf16.msra.mxu0 0
        %1795 = vmatprep.subr.bf16.mxu0 %v1789
        %1796 = vmatpush1.bf16.msra.mxu0 %v1786
        %1797 = vmatprep.subr.bf16.mxu0 %v1769
        %1798 = vmatpush1.bf16.msra.mxu0 %v1768
        %1799 = vmatprep.subr.bf16.mxu0 %v1767
        %1800 = vmatpush1.bf16.msra.mxu0 %v1766
        %1801 = vmatprep.subr.bf16.mxu0 %v1765
        %1802 = vmatpush1.bf16.msra.mxu0 %v1764
        %1803 = vmatprep.subr.bf16.mxu0 %v1763
        %1804 = vmatpush1.bf16.msra.mxu0 %v1762
        %1805 = vmatprep.subr.bf16.mxu0 %v1761
        %1806 = vmatpush1.bf16.msra.mxu0 %v1760
        %1807 = vmatprep.subr.bf16.mxu0 0
        %1808 = vmatpush2.bf16.msra.mxu0 0
        %1809 = vmatprep.subr.bf16.mxu0 0
        %1810 = vmatpush2.bf16.msra.mxu0 0
        %1811 = vmatprep.subr.bf16.mxu0 0
        %1812 = vmatpush2.bf16.msra.mxu0 0
        %1813 = vmatprep.subr.bf16.mxu0 0
        %1814 = vmatpush2.bf16.msra.mxu0 0
        %1815 = vmatprep.subr.bf16.mxu0 0
        %1816 = vmatpush2.bf16.msra.mxu0 0
        %1817 = vmatprep.subr.bf16.mxu0 0
        %1818 = vmatpush2.bf16.msra.mxu0 0
        %1819 = vmatprep.subr.bf16.mxu0 0
        %1820 = vmatpush2.bf16.msra.mxu0 0
        %1821 = vmatprep.subr.bf16.mxu0 0
        %1822 = vmatpush2.bf16.msra.mxu0 0
        %1823 = vmatprep.mubr.bf16.mxu0 0
        %1824 = vmatmul.mubr.bf16.gmra.mxu0 %v1783
        %v1825 = vpop.f32.mrf.mxu0
        %v1826 = vadd.f32 0.0, %v1825
        %v1827 = vpop.f32.mrf.mxu0
        %v1828 = vadd.f32 0.0, %v1827
        %v1829 = vpop.f32.mrf.mxu0
        %v1830 = vpop.f32.mrf.mxu0
        %1831 = vdwg.mxu0
        %v1832 = vadd.f32 %v1715, %v1826
        %v1833 = vadd.f32 %v1717, %v1828
        %1834 = vmatprep.subr.bf16.mxu0 0
        %1835 = vmatpush1.bf16.msra.mxu0 0
        %1836 = vmatprep.subr.bf16.mxu0 0
        %1837 = vmatpush1.bf16.msra.mxu0 0
        %1838 = vmatprep.subr.bf16.mxu0 %v1573
        %1839 = vmatpush1.bf16.msra.mxu0 %v1570
        %1840 = vmatprep.subr.bf16.mxu0 %v1551
        %1841 = vmatpush1.bf16.msra.mxu0 %v1550
        %1842 = vmatprep.subr.bf16.mxu0 %v1549
        %1843 = vmatpush1.bf16.msra.mxu0 %v1548
        %1844 = vmatprep.subr.bf16.mxu0 %v1547
        %1845 = vmatpush1.bf16.msra.mxu0 %v1546
        %1846 = vmatprep.subr.bf16.mxu0 %v1545
        %1847 = vmatpush1.bf16.msra.mxu0 %v1544
        %1848 = vmatprep.subr.bf16.mxu0 %v1543
        %1849 = vmatpush1.bf16.msra.mxu0 %v1542
        %1850 = vmatprep.subr.bf16.mxu0 0
        %1851 = vmatpush2.bf16.msra.mxu0 0
        %1852 = vmatprep.subr.bf16.mxu0 0
        %1853 = vmatpush2.bf16.msra.mxu0 0
        %1854 = vmatprep.subr.bf16.mxu0 0
        %1855 = vmatpush2.bf16.msra.mxu0 0
        %1856 = vmatprep.subr.bf16.mxu0 0
        %1857 = vmatpush2.bf16.msra.mxu0 0
        %1858 = vmatprep.subr.bf16.mxu0 0
        %1859 = vmatpush2.bf16.msra.mxu0 0
        %1860 = vmatprep.subr.bf16.mxu0 0
        %1861 = vmatpush2.bf16.msra.mxu0 0
        %1862 = vmatprep.subr.bf16.mxu0 0
        %1863 = vmatpush2.bf16.msra.mxu0 0
        %1864 = vmatprep.subr.bf16.mxu0 0
        %1865 = vmatpush2.bf16.msra.mxu0 0
        %1866 = vmatprep.mubr.bf16.mxu0 0
        %1867 = vmatmul.mubr.bf16.gmra.mxu0 %v1783
        %v1868 = vpop.f32.mrf.mxu0
        %v1869 = vadd.f32 0.0, %v1868
        %v1870 = vpop.f32.mrf.mxu0
        %v1871 = vadd.f32 0.0, %v1870
        %v1872 = vpop.f32.mrf.mxu0
        %v1873 = vpop.f32.mrf.mxu0
        %1874 = vdwg.mxu0
        %1875 = vmatprep.subr.bf16.mxu0 0
        %1876 = vmatpush1.bf16.msra.mxu0 0
        %1877 = vmatprep.subr.bf16.mxu0 0
        %1878 = vmatpush1.bf16.msra.mxu0 0
        %1879 = vmatprep.subr.bf16.mxu0 %v1678
        %1880 = vmatpush1.bf16.msra.mxu0 %v1675
        %1881 = vmatprep.subr.bf16.mxu0 %v1658
        %1882 = vmatpush1.bf16.msra.mxu0 %v1657
        %1883 = vmatprep.subr.bf16.mxu0 %v1656
        %1884 = vmatpush1.bf16.msra.mxu0 %v1655
        %1885 = vmatprep.subr.bf16.mxu0 %v1654
        %1886 = vmatpush1.bf16.msra.mxu0 %v1653
        %1887 = vmatprep.subr.bf16.mxu0 %v1652
        %1888 = vmatpush1.bf16.msra.mxu0 %v1651
        %1889 = vmatprep.subr.bf16.mxu0 %v1650
        %1890 = vmatpush1.bf16.msra.mxu0 %v1649
        %1891 = vmatprep.subr.bf16.mxu0 0
        %1892 = vmatpush2.bf16.msra.mxu0 0
        %1893 = vmatprep.subr.bf16.mxu0 0
        %1894 = vmatpush2.bf16.msra.mxu0 0
        %1895 = vmatprep.subr.bf16.mxu0 0
        %1896 = vmatpush2.bf16.msra.mxu0 0
        %1897 = vmatprep.subr.bf16.mxu0 0
        %1898 = vmatpush2.bf16.msra.mxu0 0
        %1899 = vmatprep.subr.bf16.mxu0 0
        %1900 = vmatpush2.bf16.msra.mxu0 0
        %1901 = vmatprep.subr.bf16.mxu0 0
        %1902 = vmatpush2.bf16.msra.mxu0 0
        %1903 = vmatprep.subr.bf16.mxu0 0
        %1904 = vmatpush2.bf16.msra.mxu0 0
        %1905 = vmatprep.subr.bf16.mxu0 0
        %1906 = vmatpush2.bf16.msra.mxu0 0
        %1907 = vmatprep.mubr.bf16.mxu0 0
        %1908 = vmatmul.mubr.bf16.gmra.mxu0 %v1566
        %v1909 = vpop.f32.mrf.mxu0
        %v1910 = vadd.f32 %v1869, %v1909
        %v1911 = vpop.f32.mrf.mxu0
        %v1912 = vadd.f32 %v1871, %v1911
        %v1913 = vpop.f32.mrf.mxu0
        %v1914 = vpop.f32.mrf.mxu0
        %1915 = vdwg.mxu0
        %v1916 = vshrl.u32 %v1473, 16
        %v1918 = vshll.u32 %v1473, 16
        %v1920 = vrot.slane %v1918, 1
        %v1921 = vor.u32 %v1916, %v1920
        %v1923 = vsel %vm1564, %v1921, 0
        %1925 = vmatprep.subr.bf16.mxu0 0
        %1926 = vmatpush1.bf16.msra.mxu0 0
        %1927 = vmatprep.subr.bf16.mxu0 0
        %1928 = vmatpush1.bf16.msra.mxu0 0
        %1929 = vmatprep.subr.bf16.mxu0 %v1789
        %1930 = vmatpush1.bf16.msra.mxu0 %v1786
        %1931 = vmatprep.subr.bf16.mxu0 %v1769
        %1932 = vmatpush1.bf16.msra.mxu0 %v1768
        %1933 = vmatprep.subr.bf16.mxu0 %v1767
        %1934 = vmatpush1.bf16.msra.mxu0 %v1766
        %1935 = vmatprep.subr.bf16.mxu0 %v1765
        %1936 = vmatpush1.bf16.msra.mxu0 %v1764
        %1937 = vmatprep.subr.bf16.mxu0 %v1763
        %1938 = vmatpush1.bf16.msra.mxu0 %v1762
        %1939 = vmatprep.subr.bf16.mxu0 %v1761
        %1940 = vmatpush1.bf16.msra.mxu0 %v1760
        %1941 = vmatprep.subr.bf16.mxu0 0
        %1942 = vmatpush2.bf16.msra.mxu0 0
        %1943 = vmatprep.subr.bf16.mxu0 0
        %1944 = vmatpush2.bf16.msra.mxu0 0
        %1945 = vmatprep.subr.bf16.mxu0 0
        %1946 = vmatpush2.bf16.msra.mxu0 0
        %1947 = vmatprep.subr.bf16.mxu0 0
        %1948 = vmatpush2.bf16.msra.mxu0 0
        %1949 = vmatprep.subr.bf16.mxu0 0
        %1950 = vmatpush2.bf16.msra.mxu0 0
        %1951 = vmatprep.subr.bf16.mxu0 0
        %1952 = vmatpush2.bf16.msra.mxu0 0
        %1953 = vmatprep.subr.bf16.mxu0 0
        %1954 = vmatpush2.bf16.msra.mxu0 0
        %1955 = vmatprep.subr.bf16.mxu0 0
        %1956 = vmatpush2.bf16.msra.mxu0 0
        %1957 = vmatprep.mubr.bf16.mxu0 0
        %1958 = vmatmul.mubr.bf16.gmra.mxu0 %v1923
        %v1959 = vpop.f32.mrf.mxu0
        %v1960 = vadd.f32 0.0, %v1959
        %v1961 = vpop.f32.mrf.mxu0
        %v1962 = vadd.f32 0.0, %v1961
        %v1963 = vpop.f32.mrf.mxu0
        %v1964 = vpop.f32.mrf.mxu0
        %1965 = vdwg.mxu0
        %v1966 = vadd.f32 %v1910, %v1960
        %v1967 = vadd.f32 %v1912, %v1962
        %1970 = vrot.lane.b32.xlu0 %v1832, 32
        %v1971 = vpop.permute.xlu0 %1970
        %1972 = vrot.lane.b32.xlu0 %v1833, 32
        %v1973 = vpop.permute.xlu0 %1972
        %v1974 = vsel %vm418, %v1971, %v1973
        %v1976 = vmax.f32 %v1832, %v1974
        %1979 = vrot.lane.b32.xlu0 %v1966, 32
        %v1980 = vpop.permute.xlu0 %1979
        %1981 = vrot.lane.b32.xlu0 %v1967, 32
        %v1982 = vpop.permute.xlu0 %1981
        %v1983 = vsel %vm418, %v1980, %v1982
        %v1985 = vmax.f32 %v1966, %v1983
        %v1986 = vmax.f32 %v1976, %v1985
        %v1987 = vld [vmem:[%s4] sm:$0x1]
        %v1989 = vlaneseq
        %v1990 = vshrl.u32 %v1989, 7
        %v1991 = vsub.s32 0, %v1990
        %v1992 = vrot.slane %v1987, %v1991
        %v1994 = vadd.f32 %v1986, %v1992
        %v1995 = vmax.f32 %v1994, 0.0
        %v1996 = vpack.c.bf16 %v1995, %v1995
        %v1997 = vld [vmem:[%s5] sm:$0xf]
        %v1998 = vld [vmem:[%s5 + $0x4] sm:$0xf]
        %v1999 = vld [vmem:[%s5 + $0x8] sm:$0xf]
        %v2000 = vld [vmem:[%s5 + $0xc] sm:$0xf]
        %v2001 = vld [vmem:[%s5 + $0x10] sm:$0xf]
        %v2002 = vld [vmem:[%s5 + $0x14] sm:$0xf]
        %v2003 = vld [vmem:[%s5 + $0x18] sm:$0xf]
        %v2004 = vld [vmem:[%s5 + $0x1c] sm:$0xf]
        %v2005 = vld [vmem:[%s5 + $0x20] sm:$0xf]
        %v2006 = vld [vmem:[%s5 + $0x24] sm:$0xf]
        %v2007 = vld [vmem:[%s5 + $0x28] sm:$0xf]
        %v2008 = vld [vmem:[%s5 + $0x2c] sm:$0xf]
        %v2009 = vld [vmem:[%s5 + $0x30] sm:$0xf]
        %v2010 = vld [vmem:[%s5 + $0x34] sm:$0xf]
        %v2011 = vld [vmem:[%s5 + $0x38] sm:$0xf]
        %v2012 = vld [vmem:[%s5 + $0x3c] sm:$0xf]
        %v2013 = vld [vmem:[%s5 + $0x40] sm:$0xf]
        %v2014 = vld [vmem:[%s5 + $0x44] sm:$0xf]
        %v2015 = vld [vmem:[%s5 + $0x48] sm:$0xf]
        %v2016 = vld [vmem:[%s5 + $0x4c] sm:$0xf]
        %v2017 = vld [vmem:[%s5 + $0x50] sm:$0xf]
        %v2018 = vld [vmem:[%s5 + $0x54] sm:$0xf]
        %v2019 = vld [vmem:[%s5 + $0x58] sm:$0xf]
        %v2020 = vld [vmem:[%s5 + $0x5c] sm:$0xf]
        %v2022 = vshrl.u32 %v1996, 16
        %v2036 = vunpack.c.l.b16 %v2009
        %v2037 = vunpack.c.l.b16 %v2010
        %v2038 = vunpack.c.l.b16 %v2011
        %v2039 = vunpack.c.l.b16 %v2012
        %v2040 = vunpack.c.l.b16 %v2013
        %v2041 = vunpack.c.l.b16 %v2014
        %v2042 = vunpack.c.l.b16 %v2015
        %v2043 = vunpack.c.l.b16 %v2016
        %v2044 = vunpack.c.l.b16 %v2017
        %v2045 = vunpack.c.l.b16 %v2018
        %v2046 = vunpack.c.l.b16 %v2019
        %v2047 = vunpack.c.l.b16 %v2020
        %v2048 = vpack.c.b16 %v2037, %v2036
        %v2049 = vpack.c.b16 %v2039, %v2038
        %v2050 = vpack.c.b16 %v2041, %v2040
        %v2051 = vpack.c.b16 %v2043, %v2042
        %v2052 = vpack.c.b16 %v2045, %v2044
        %v2053 = vpack.c.b16 %v2047, %v2046
        %vm2060 = vcmask 785408
        %v2062 = vsel %vm2060, %v2022, 0
        %2064 = vmatprep.subr.bf16.mxu0 0
        %2065 = vmatpush1.bf16.msra.mxu0 0
        %2066 = vmatprep.subr.bf16.mxu0 0
        %2067 = vmatpush1.bf16.msra.mxu0 0
        %2068 = vmatprep.subr.bf16.mxu0 0
        %2069 = vmatpush1.bf16.msra.mxu0 %v2053
        %2070 = vmatprep.subr.bf16.mxu0 0
        %2071 = vmatpush1.bf16.msra.mxu0 %v2052
        %2072 = vmatprep.subr.bf16.mxu0 0
        %2073 = vmatpush1.bf16.msra.mxu0 %v2051
        %2074 = vmatprep.subr.bf16.mxu0 0
        %2075 = vmatpush1.bf16.msra.mxu0 %v2050
        %2076 = vmatprep.subr.bf16.mxu0 0
        %2077 = vmatpush1.bf16.msra.mxu0 %v2049
        %2078 = vmatprep.subr.bf16.mxu0 0
        %2079 = vmatpush1.bf16.msra.mxu0 %v2048
        %2080 = vmatprep.subr.bf16.mxu0 0
        %2081 = vmatpush2.bf16.msra.mxu0 0
        %2082 = vmatprep.subr.bf16.mxu0 0
        %2083 = vmatpush2.bf16.msra.mxu0 0
        %2084 = vmatprep.subr.bf16.mxu0 0
        %2085 = vmatpush2.bf16.msra.mxu0 0
        %2086 = vmatprep.subr.bf16.mxu0 0
        %2087 = vmatpush2.bf16.msra.mxu0 0
        %2088 = vmatprep.subr.bf16.mxu0 0
        %2089 = vmatpush2.bf16.msra.mxu0 0
        %2090 = vmatprep.subr.bf16.mxu0 0
        %2091 = vmatpush2.bf16.msra.mxu0 0
        %2092 = vmatprep.subr.bf16.mxu0 0
        %2093 = vmatpush2.bf16.msra.mxu0 0
        %2094 = vmatprep.subr.bf16.mxu0 0
        %2095 = vmatpush2.bf16.msra.mxu0 0
        %2096 = vmatprep.mubr.bf16.mxu0 0
        %2097 = vmatmul.mubr.bf16.gmra.mxu0 %v2062
        %v2098 = vpop.f32.mrf.mxu0
        %v2099 = vadd.f32 0.0, %v2098
        %v2100 = vpop.f32.mrf.mxu0
        %v2101 = vpop.f32.mrf.mxu0
        %v2102 = vpop.f32.mrf.mxu0
        %2103 = vdwg.mxu0
        %v2116 = vunpack.c.l.b16 %v1997
        %v2117 = vunpack.c.l.b16 %v1998
        %v2118 = vunpack.c.l.b16 %v1999
        %v2119 = vunpack.c.l.b16 %v2000
        %v2120 = vunpack.c.l.b16 %v2001
        %v2121 = vunpack.c.l.b16 %v2002
        %v2122 = vunpack.c.l.b16 %v2003
        %v2123 = vunpack.c.l.b16 %v2004
        %v2124 = vunpack.c.l.b16 %v2005
        %v2125 = vunpack.c.l.b16 %v2006
        %v2126 = vunpack.c.l.b16 %v2007
        %v2127 = vunpack.c.l.b16 %v2008
        %v2128 = vpack.c.b16 %v2117, %v2116
        %v2129 = vpack.c.b16 %v2119, %v2118
        %v2130 = vpack.c.b16 %v2121, %v2120
        %v2131 = vpack.c.b16 %v2123, %v2122
        %v2132 = vpack.c.b16 %v2125, %v2124
        %v2133 = vpack.c.b16 %v2127, %v2126
        %v2140 = vsel %vm2060, %v1996, 0
        %2142 = vmatprep.subr.bf16.mxu0 0
        %2143 = vmatpush1.bf16.msra.mxu0 0
        %2144 = vmatprep.subr.bf16.mxu0 0
        %2145 = vmatpush1.bf16.msra.mxu0 0
        %2146 = vmatprep.subr.bf16.mxu0 0
        %2147 = vmatpush1.bf16.msra.mxu0 %v2133
        %2148 = vmatprep.subr.bf16.mxu0 0
        %2149 = vmatpush1.bf16.msra.mxu0 %v2132
        %2150 = vmatprep.subr.bf16.mxu0 0
        %2151 = vmatpush1.bf16.msra.mxu0 %v2131
        %2152 = vmatprep.subr.bf16.mxu0 0
        %2153 = vmatpush1.bf16.msra.mxu0 %v2130
        %2154 = vmatprep.subr.bf16.mxu0 0
        %2155 = vmatpush1.bf16.msra.mxu0 %v2129
        %2156 = vmatprep.subr.bf16.mxu0 0
        %2157 = vmatpush1.bf16.msra.mxu0 %v2128
        %2158 = vmatprep.subr.bf16.mxu0 0
        %2159 = vmatpush2.bf16.msra.mxu0 0
        %2160 = vmatprep.subr.bf16.mxu0 0
        %2161 = vmatpush2.bf16.msra.mxu0 0
        %2162 = vmatprep.subr.bf16.mxu0 0
        %2163 = vmatpush2.bf16.msra.mxu0 0
        %2164 = vmatprep.subr.bf16.mxu0 0
        %2165 = vmatpush2.bf16.msra.mxu0 0
        %2166 = vmatprep.subr.bf16.mxu0 0
        %2167 = vmatpush2.bf16.msra.mxu0 0
        %2168 = vmatprep.subr.bf16.mxu0 0
        %2169 = vmatpush2.bf16.msra.mxu0 0
        %2170 = vmatprep.subr.bf16.mxu0 0
        %2171 = vmatpush2.bf16.msra.mxu0 0
        %2172 = vmatprep.subr.bf16.mxu0 0
        %2173 = vmatpush2.bf16.msra.mxu0 0
        %2174 = vmatprep.mubr.bf16.mxu0 0
        %2175 = vmatmul.mubr.bf16.gmra.mxu0 %v2140
        %v2176 = vpop.f32.mrf.mxu0
        %v2177 = vadd.f32 %v2099, %v2176
        %v2178 = vpop.f32.mrf.mxu0
        %v2179 = vpop.f32.mrf.mxu0
        %v2180 = vpop.f32.mrf.mxu0
        %2181 = vdwg.mxu0
        %v2182 = vld [vmem:[%s5 + $0x60] sm:$0xf]
        %v2183 = vld [vmem:[%s5 + $0x64] sm:$0xf]
        %v2184 = vld [vmem:[%s5 + $0x68] sm:$0xf]
        %v2185 = vld [vmem:[%s5 + $0x6c] sm:$0xf]
        %v2186 = vld [vmem:[%s5 + $0x70] sm:$0xf]
        %v2187 = vld [vmem:[%s5 + $0x74] sm:$0xf]
        %v2188 = vld [vmem:[%s5 + $0x78] sm:$0xf]
        %v2189 = vld [vmem:[%s5 + $0x7c] sm:$0xf]
        %v2190 = vld [vmem:[%s5 + $0x80] sm:$0xf]
        %v2191 = vld [vmem:[%s5 + $0x84] sm:$0xf]
        %v2192 = vld [vmem:[%s5 + $0x88] sm:$0xf]
        %v2193 = vld [vmem:[%s5 + $0x8c] sm:$0xf]
        %v2195 = vrot.slane %v1996, 1
        %v2208 = vunpack.c.l.b16 %v2182
        %v2209 = vunpack.c.l.b16 %v2183
        %v2210 = vunpack.c.l.b16 %v2184
        %v2211 = vunpack.c.l.b16 %v2185
        %v2212 = vunpack.c.l.b16 %v2186
        %v2213 = vunpack.c.l.b16 %v2187
        %v2214 = vunpack.c.l.b16 %v2188
        %v2215 = vunpack.c.l.b16 %v2189
        %v2216 = vunpack.c.l.b16 %v2190
        %v2217 = vunpack.c.l.b16 %v2191
        %v2218 = vunpack.c.l.b16 %v2192
        %v2219 = vunpack.c.l.b16 %v2193
        %v2220 = vpack.c.b16 %v2209, %v2208
        %v2221 = vpack.c.b16 %v2211, %v2210
        %v2222 = vpack.c.b16 %v2213, %v2212
        %v2223 = vpack.c.b16 %v2215, %v2214
        %v2224 = vpack.c.b16 %v2217, %v2216
        %v2225 = vpack.c.b16 %v2219, %v2218
        %v2233 = vsel %vm2060, %v2195, 0
        %2235 = vmatprep.subr.bf16.mxu0 0
        %2236 = vmatpush1.bf16.msra.mxu0 0
        %2237 = vmatprep.subr.bf16.mxu0 0
        %2238 = vmatpush1.bf16.msra.mxu0 0
        %2239 = vmatprep.subr.bf16.mxu0 0
        %2240 = vmatpush1.bf16.msra.mxu0 %v2225
        %2241 = vmatprep.subr.bf16.mxu0 0
        %2242 = vmatpush1.bf16.msra.mxu0 %v2224
        %2243 = vmatprep.subr.bf16.mxu0 0
        %2244 = vmatpush1.bf16.msra.mxu0 %v2223
        %2245 = vmatprep.subr.bf16.mxu0 0
        %2246 = vmatpush1.bf16.msra.mxu0 %v2222
        %2247 = vmatprep.subr.bf16.mxu0 0
        %2248 = vmatpush1.bf16.msra.mxu0 %v2221
        %2249 = vmatprep.subr.bf16.mxu0 0
        %2250 = vmatpush1.bf16.msra.mxu0 %v2220
        %2251 = vmatprep.subr.bf16.mxu0 0
        %2252 = vmatpush2.bf16.msra.mxu0 0
        %2253 = vmatprep.subr.bf16.mxu0 0
        %2254 = vmatpush2.bf16.msra.mxu0 0
        %2255 = vmatprep.subr.bf16.mxu0 0
        %2256 = vmatpush2.bf16.msra.mxu0 0
        %2257 = vmatprep.subr.bf16.mxu0 0
        %2258 = vmatpush2.bf16.msra.mxu0 0
        %2259 = vmatprep.subr.bf16.mxu0 0
        %2260 = vmatpush2.bf16.msra.mxu0 0
        %2261 = vmatprep.subr.bf16.mxu0 0
        %2262 = vmatpush2.bf16.msra.mxu0 0
        %2263 = vmatprep.subr.bf16.mxu0 0
        %2264 = vmatpush2.bf16.msra.mxu0 0
        %2265 = vmatprep.subr.bf16.mxu0 0
        %2266 = vmatpush2.bf16.msra.mxu0 0
        %2267 = vmatprep.mubr.bf16.mxu0 0
        %2268 = vmatmul.mubr.bf16.gmra.mxu0 %v2233
        %v2269 = vpop.f32.mrf.mxu0
        %v2270 = vadd.f32 0.0, %v2269
        %v2271 = vpop.f32.mrf.mxu0
        %v2272 = vpop.f32.mrf.mxu0
        %v2273 = vpop.f32.mrf.mxu0
        %2274 = vdwg.mxu0
        %v2275 = vadd.f32 %v2177, %v2270
        %v2276 = vld [vmem:[%s5 + $0x90] sm:$0xf]
        %v2277 = vld [vmem:[%s5 + $0x94] sm:$0xf]
        %v2278 = vld [vmem:[%s5 + $0x98] sm:$0xf]
        %v2279 = vld [vmem:[%s5 + $0x9c] sm:$0xf]
        %v2280 = vld [vmem:[%s5 + $0xa0] sm:$0xf]
        %v2281 = vld [vmem:[%s5 + $0xa4] sm:$0xf]
        %v2282 = vld [vmem:[%s5 + $0xa8] sm:$0xf]
        %v2283 = vld [vmem:[%s5 + $0xac] sm:$0xf]
        %v2284 = vld [vmem:[%s5 + $0xb0] sm:$0xf]
        %v2285 = vld [vmem:[%s5 + $0xb4] sm:$0xf]
        %v2286 = vld [vmem:[%s5 + $0xb8] sm:$0xf]
        %v2287 = vld [vmem:[%s5 + $0xbc] sm:$0xf]
        %v2288 = vrot.slane %v2022, 1
        %v2301 = vunpack.c.l.b16 %v2276
        %v2302 = vunpack.c.l.b16 %v2277
        %v2303 = vunpack.c.l.b16 %v2278
        %v2304 = vunpack.c.l.b16 %v2279
        %v2305 = vunpack.c.l.b16 %v2280
        %v2306 = vunpack.c.l.b16 %v2281
        %v2307 = vunpack.c.l.b16 %v2282
        %v2308 = vunpack.c.l.b16 %v2283
        %v2309 = vunpack.c.l.b16 %v2284
        %v2310 = vunpack.c.l.b16 %v2285
        %v2311 = vunpack.c.l.b16 %v2286
        %v2312 = vunpack.c.l.b16 %v2287
        %v2313 = vpack.c.b16 %v2302, %v2301
        %v2314 = vpack.c.b16 %v2304, %v2303
        %v2315 = vpack.c.b16 %v2306, %v2305
        %v2316 = vpack.c.b16 %v2308, %v2307
        %v2317 = vpack.c.b16 %v2310, %v2309
        %v2318 = vpack.c.b16 %v2312, %v2311
        %v2326 = vsel %vm2060, %v2288, 0
        %2328 = vmatprep.subr.bf16.mxu0 0
        %2329 = vmatpush1.bf16.msra.mxu0 0
        %2330 = vmatprep.subr.bf16.mxu0 0
        %2331 = vmatpush1.bf16.msra.mxu0 0
        %2332 = vmatprep.subr.bf16.mxu0 0
        %2333 = vmatpush1.bf16.msra.mxu0 %v2318
        %2334 = vmatprep.subr.bf16.mxu0 0
        %2335 = vmatpush1.bf16.msra.mxu0 %v2317
        %2336 = vmatprep.subr.bf16.mxu0 0
        %2337 = vmatpush1.bf16.msra.mxu0 %v2316
        %2338 = vmatprep.subr.bf16.mxu0 0
        %2339 = vmatpush1.bf16.msra.mxu0 %v2315
        %2340 = vmatprep.subr.bf16.mxu0 0
        %2341 = vmatpush1.bf16.msra.mxu0 %v2314
        %2342 = vmatprep.subr.bf16.mxu0 0
        %2343 = vmatpush1.bf16.msra.mxu0 %v2313
        %2344 = vmatprep.subr.bf16.mxu0 0
        %2345 = vmatpush2.bf16.msra.mxu0 0
        %2346 = vmatprep.subr.bf16.mxu0 0
        %2347 = vmatpush2.bf16.msra.mxu0 0
        %2348 = vmatprep.subr.bf16.mxu0 0
        %2349 = vmatpush2.bf16.msra.mxu0 0
        %2350 = vmatprep.subr.bf16.mxu0 0
        %2351 = vmatpush2.bf16.msra.mxu0 0
        %2352 = vmatprep.subr.bf16.mxu0 0
        %2353 = vmatpush2.bf16.msra.mxu0 0
        %2354 = vmatprep.subr.bf16.mxu0 0
        %2355 = vmatpush2.bf16.msra.mxu0 0
        %2356 = vmatprep.subr.bf16.mxu0 0
        %2357 = vmatpush2.bf16.msra.mxu0 0
        %2358 = vmatprep.subr.bf16.mxu0 0
        %2359 = vmatpush2.bf16.msra.mxu0 0
        %2360 = vmatprep.mubr.bf16.mxu0 0
        %2361 = vmatmul.mubr.bf16.gmra.mxu0 %v2326
        %v2362 = vpop.f32.mrf.mxu0
        %v2363 = vadd.f32 0.0, %v2362
        %v2364 = vpop.f32.mrf.mxu0
        %v2365 = vpop.f32.mrf.mxu0
        %v2366 = vpop.f32.mrf.mxu0
        %2367 = vdwg.mxu0
        %v2368 = vadd.f32 %v2275, %v2363
        %v2369 = vld [vmem:[%s5 + $0xc0] sm:$0xf]
        %v2370 = vld [vmem:[%s5 + $0xc4] sm:$0xf]
        %v2371 = vld [vmem:[%s5 + $0xc8] sm:$0xf]
        %v2372 = vld [vmem:[%s5 + $0xcc] sm:$0xf]
        %v2373 = vld [vmem:[%s5 + $0xd0] sm:$0xf]
        %v2374 = vld [vmem:[%s5 + $0xd4] sm:$0xf]
        %v2375 = vld [vmem:[%s5 + $0xd8] sm:$0xf]
        %v2376 = vld [vmem:[%s5 + $0xdc] sm:$0xf]
        %v2377 = vld [vmem:[%s5 + $0xe0] sm:$0xf]
        %v2378 = vld [vmem:[%s5 + $0xe4] sm:$0xf]
        %v2379 = vld [vmem:[%s5 + $0xe8] sm:$0xf]
        %v2380 = vld [vmem:[%s5 + $0xec] sm:$0xf]
        %v2381 = vrot.slane %v1996, 2
        %v2394 = vunpack.c.l.b16 %v2369
        %v2395 = vunpack.c.l.b16 %v2370
        %v2396 = vunpack.c.l.b16 %v2371
        %v2397 = vunpack.c.l.b16 %v2372
        %v2398 = vunpack.c.l.b16 %v2373
        %v2399 = vunpack.c.l.b16 %v2374
        %v2400 = vunpack.c.l.b16 %v2375
        %v2401 = vunpack.c.l.b16 %v2376
        %v2402 = vunpack.c.l.b16 %v2377
        %v2403 = vunpack.c.l.b16 %v2378
        %v2404 = vunpack.c.l.b16 %v2379
        %v2405 = vunpack.c.l.b16 %v2380
        %v2406 = vpack.c.b16 %v2395, %v2394
        %v2407 = vpack.c.b16 %v2397, %v2396
        %v2408 = vpack.c.b16 %v2399, %v2398
        %v2409 = vpack.c.b16 %v2401, %v2400
        %v2410 = vpack.c.b16 %v2403, %v2402
        %v2411 = vpack.c.b16 %v2405, %v2404
        %v2419 = vsel %vm2060, %v2381, 0
        %2421 = vmatprep.subr.bf16.mxu0 0
        %2422 = vmatpush1.bf16.msra.mxu0 0
        %2423 = vmatprep.subr.bf16.mxu0 0
        %2424 = vmatpush1.bf16.msra.mxu0 0
        %2425 = vmatprep.subr.bf16.mxu0 0
        %2426 = vmatpush1.bf16.msra.mxu0 %v2411
        %2427 = vmatprep.subr.bf16.mxu0 0
        %2428 = vmatpush1.bf16.msra.mxu0 %v2410
        %2429 = vmatprep.subr.bf16.mxu0 0
        %2430 = vmatpush1.bf16.msra.mxu0 %v2409
        %2431 = vmatprep.subr.bf16.mxu0 0
        %2432 = vmatpush1.bf16.msra.mxu0 %v2408
        %2433 = vmatprep.subr.bf16.mxu0 0
        %2434 = vmatpush1.bf16.msra.mxu0 %v2407
        %2435 = vmatprep.subr.bf16.mxu0 0
        %2436 = vmatpush1.bf16.msra.mxu0 %v2406
        %2437 = vmatprep.subr.bf16.mxu0 0
        %2438 = vmatpush2.bf16.msra.mxu0 0
        %2439 = vmatprep.subr.bf16.mxu0 0
        %2440 = vmatpush2.bf16.msra.mxu0 0
        %2441 = vmatprep.subr.bf16.mxu0 0
        %2442 = vmatpush2.bf16.msra.mxu0 0
        %2443 = vmatprep.subr.bf16.mxu0 0
        %2444 = vmatpush2.bf16.msra.mxu0 0
        %2445 = vmatprep.subr.bf16.mxu0 0
        %2446 = vmatpush2.bf16.msra.mxu0 0
        %2447 = vmatprep.subr.bf16.mxu0 0
        %2448 = vmatpush2.bf16.msra.mxu0 0
        %2449 = vmatprep.subr.bf16.mxu0 0
        %2450 = vmatpush2.bf16.msra.mxu0 0
        %2451 = vmatprep.subr.bf16.mxu0 0
        %2452 = vmatpush2.bf16.msra.mxu0 0
        %2453 = vmatprep.mubr.bf16.mxu0 0
        %2454 = vmatmul.mubr.bf16.gmra.mxu0 %v2419
        %v2455 = vpop.f32.mrf.mxu0
        %v2456 = vadd.f32 0.0, %v2455
        %v2457 = vpop.f32.mrf.mxu0
        %v2458 = vpop.f32.mrf.mxu0
        %v2459 = vpop.f32.mrf.mxu0
        %2460 = vdwg.mxu0
        %v2461 = vadd.f32 %v2368, %v2456
        %v2462 = vld [vmem:[%s5 + $0xf0] sm:$0xf]
        %v2463 = vld [vmem:[%s5 + $0xf4] sm:$0xf]
        %v2464 = vld [vmem:[%s5 + $0xf8] sm:$0xf]
        %v2465 = vld [vmem:[%s5 + $0xfc] sm:$0xf]
        %v2466 = vld [vmem:[%s5 + $0x100] sm:$0xf]
        %v2467 = vld [vmem:[%s5 + $0x104] sm:$0xf]
        %v2468 = vld [vmem:[%s5 + $0x108] sm:$0xf]
        %v2469 = vld [vmem:[%s5 + $0x10c] sm:$0xf]
        %v2470 = vld [vmem:[%s5 + $0x110] sm:$0xf]
        %v2471 = vld [vmem:[%s5 + $0x114] sm:$0xf]
        %v2472 = vld [vmem:[%s5 + $0x118] sm:$0xf]
        %v2473 = vld [vmem:[%s5 + $0x11c] sm:$0xf]
        %v2474 = vrot.slane %v2022, 2
        %v2487 = vunpack.c.l.b16 %v2462
        %v2488 = vunpack.c.l.b16 %v2463
        %v2489 = vunpack.c.l.b16 %v2464
        %v2490 = vunpack.c.l.b16 %v2465
        %v2491 = vunpack.c.l.b16 %v2466
        %v2492 = vunpack.c.l.b16 %v2467
        %v2493 = vunpack.c.l.b16 %v2468
        %v2494 = vunpack.c.l.b16 %v2469
        %v2495 = vunpack.c.l.b16 %v2470
        %v2496 = vunpack.c.l.b16 %v2471
        %v2497 = vunpack.c.l.b16 %v2472
        %v2498 = vunpack.c.l.b16 %v2473
        %v2499 = vpack.c.b16 %v2488, %v2487
        %v2500 = vpack.c.b16 %v2490, %v2489
        %v2501 = vpack.c.b16 %v2492, %v2491
        %v2502 = vpack.c.b16 %v2494, %v2493
        %v2503 = vpack.c.b16 %v2496, %v2495
        %v2504 = vpack.c.b16 %v2498, %v2497
        %v2512 = vsel %vm2060, %v2474, 0
        %2514 = vmatprep.subr.bf16.mxu0 0
        %2515 = vmatpush1.bf16.msra.mxu0 0
        %2516 = vmatprep.subr.bf16.mxu0 0
        %2517 = vmatpush1.bf16.msra.mxu0 0
        %2518 = vmatprep.subr.bf16.mxu0 0
        %2519 = vmatpush1.bf16.msra.mxu0 %v2504
        %2520 = vmatprep.subr.bf16.mxu0 0
        %2521 = vmatpush1.bf16.msra.mxu0 %v2503
        %2522 = vmatprep.subr.bf16.mxu0 0
        %2523 = vmatpush1.bf16.msra.mxu0 %v2502
        %2524 = vmatprep.subr.bf16.mxu0 0
        %2525 = vmatpush1.bf16.msra.mxu0 %v2501
        %2526 = vmatprep.subr.bf16.mxu0 0
        %2527 = vmatpush1.bf16.msra.mxu0 %v2500
        %2528 = vmatprep.subr.bf16.mxu0 0
        %2529 = vmatpush1.bf16.msra.mxu0 %v2499
        %2530 = vmatprep.subr.bf16.mxu0 0
        %2531 = vmatpush2.bf16.msra.mxu0 0
        %2532 = vmatprep.subr.bf16.mxu0 0
        %2533 = vmatpush2.bf16.msra.mxu0 0
        %2534 = vmatprep.subr.bf16.mxu0 0
        %2535 = vmatpush2.bf16.msra.mxu0 0
        %2536 = vmatprep.subr.bf16.mxu0 0
        %2537 = vmatpush2.bf16.msra.mxu0 0
        %2538 = vmatprep.subr.bf16.mxu0 0
        %2539 = vmatpush2.bf16.msra.mxu0 0
        %2540 = vmatprep.subr.bf16.mxu0 0
        %2541 = vmatpush2.bf16.msra.mxu0 0
        %2542 = vmatprep.subr.bf16.mxu0 0
        %2543 = vmatpush2.bf16.msra.mxu0 0
        %2544 = vmatprep.subr.bf16.mxu0 0
        %2545 = vmatpush2.bf16.msra.mxu0 0
        %2546 = vmatprep.mubr.bf16.mxu0 0
        %2547 = vmatmul.mubr.bf16.gmra.mxu0 %v2512
        %v2548 = vpop.f32.mrf.mxu0
        %v2549 = vadd.f32 0.0, %v2548
        %v2550 = vpop.f32.mrf.mxu0
        %v2551 = vpop.f32.mrf.mxu0
        %v2552 = vpop.f32.mrf.mxu0
        %2553 = vdwg.mxu0
        %v2554 = vadd.f32 %v2461, %v2549
        %v2555 = vld [vmem:[%s6] sm:$0x1]
        %v2556 = vadd.f32 %v2554, %v2555
        %v2557 = vmax.f32 %v2556, 0.0
        %v2558 = vpack.c.bf16 %v2557, %v2557
        %v2559 = vld [vmem:[%s7] sm:$0xf]
        %v2560 = vld [vmem:[%s7 + $0x4] sm:$0xf]
        %v2561 = vld [vmem:[%s7 + $0x8] sm:$0xf]
        %v2562 = vld [vmem:[%s7 + $0xc] sm:$0xf]
        %v2563 = vld [vmem:[%s7 + $0x10] sm:$0xf]
        %v2564 = vld [vmem:[%s7 + $0x14] sm:$0xf]
        %v2565 = vld [vmem:[%s7 + $0x18] sm:$0xf]
        %v2566 = vld [vmem:[%s7 + $0x1c] sm:$0xf]
        %v2567 = vld [vmem:[%s7 + $0x20] sm:$0xf]
        %v2568 = vld [vmem:[%s7 + $0x24] sm:$0xf]
        %v2569 = vld [vmem:[%s7 + $0x28] sm:$0xf]
        %v2570 = vld [vmem:[%s7 + $0x2c] sm:$0xf]
        %v2571 = vld [vmem:[%s7 + $0x30] sm:$0xf]
        %v2572 = vld [vmem:[%s7 + $0x34] sm:$0xf]
        %v2573 = vld [vmem:[%s7 + $0x38] sm:$0xf]
        %v2574 = vld [vmem:[%s8] sm:$0x1]
        %v2590 = vunpack.c.l.b16 %v2559
        %v2591 = vunpack.c.l.b16 %v2560
        %v2592 = vunpack.c.l.b16 %v2561
        %v2593 = vunpack.c.l.b16 %v2562
        %v2594 = vunpack.c.l.b16 %v2563
        %v2595 = vunpack.c.l.b16 %v2564
        %v2596 = vunpack.c.l.b16 %v2565
        %v2597 = vunpack.c.l.b16 %v2566
        %v2598 = vunpack.c.l.b16 %v2567
        %v2599 = vunpack.c.l.b16 %v2568
        %v2600 = vunpack.c.l.b16 %v2569
        %v2601 = vunpack.c.l.b16 %v2570
        %v2602 = vunpack.c.l.b16 %v2571
        %v2603 = vunpack.c.l.b16 %v2572
        %v2604 = vunpack.c.l.b16 %v2573
        %v2605 = vpack.c.b16 %v2591, %v2590
        %v2606 = vpack.c.b16 %v2593, %v2592
        %v2607 = vpack.c.b16 %v2595, %v2594
        %v2608 = vpack.c.b16 %v2597, %v2596
        %v2609 = vpack.c.b16 %v2599, %v2598
        %v2610 = vpack.c.b16 %v2601, %v2600
        %v2611 = vpack.c.b16 %v2603, %v2602
        %v2612 = vpack.c.b16 %v2604, %v2604
        %vm2620 = vcmask 982016
        %v2622 = vsel %vm2620, %v2558, 0
        %vm2624 = vcmask 1043456
        %v2626 = vsel %vm2624, %v2612, 0
        %2628 = vmatprep.subr.bf16.mxu0 0
        %2629 = vmatpush1.bf16.msra.mxu0 %v2626
        %2630 = vmatprep.subr.bf16.mxu0 0
        %2631 = vmatpush1.bf16.msra.mxu0 %v2611
        %2632 = vmatprep.subr.bf16.mxu0 0
        %2633 = vmatpush1.bf16.msra.mxu0 %v2610
        %2634 = vmatprep.subr.bf16.mxu0 0
        %2635 = vmatpush1.bf16.msra.mxu0 %v2609
        %2636 = vmatprep.subr.bf16.mxu0 0
        %2637 = vmatpush1.bf16.msra.mxu0 %v2608
        %2638 = vmatprep.subr.bf16.mxu0 0
        %2639 = vmatpush1.bf16.msra.mxu0 %v2607
        %2640 = vmatprep.subr.bf16.mxu0 0
        %2641 = vmatpush1.bf16.msra.mxu0 %v2606
        %2642 = vmatprep.subr.bf16.mxu0 0
        %2643 = vmatpush1.bf16.msra.mxu0 %v2605
        %2644 = vmatprep.subr.bf16.mxu0 0
        %2645 = vmatpush2.bf16.msra.mxu0 0
        %2646 = vmatprep.subr.bf16.mxu0 0
        %2647 = vmatpush2.bf16.msra.mxu0 0
        %2648 = vmatprep.subr.bf16.mxu0 0
        %2649 = vmatpush2.bf16.msra.mxu0 0
        %2650 = vmatprep.subr.bf16.mxu0 0
        %2651 = vmatpush2.bf16.msra.mxu0 0
        %2652 = vmatprep.subr.bf16.mxu0 0
        %2653 = vmatpush2.bf16.msra.mxu0 0
        %2654 = vmatprep.subr.bf16.mxu0 0
        %2655 = vmatpush2.bf16.msra.mxu0 0
        %2656 = vmatprep.subr.bf16.mxu0 0
        %2657 = vmatpush2.bf16.msra.mxu0 0
        %2658 = vmatprep.subr.bf16.mxu0 0
        %2659 = vmatpush2.bf16.msra.mxu0 0
        %2660 = vmatprep.mubr.bf16.mxu0 0
        %2661 = vmatmul.mubr.bf16.gmra.mxu0 %v2622
        %v2662 = vpop.f32.mrf.mxu0
        %v2663 = vadd.f32 %v2574, %v2662
        %v2664 = vpop.f32.mrf.mxu0
        %v2665 = vpop.f32.mrf.mxu0
        %v2666 = vpop.f32.mrf.mxu0
        %2667 = vdwg.mxu0
        %v2668 = vmax.f32 %v2663, 0.0
        %v2669 = vpack.c.bf16 %v2668, %v2668
        %v2670 = vld [vmem:[%s9] sm:$0xf]
        %v2671 = vld [vmem:[%s9 + $0x4] sm:$0xf]
        %v2672 = vld [vmem:[%s9 + $0x8] sm:$0xf]
        %v2673 = vld [vmem:[%s9 + $0xc] sm:$0xf]
        %v2674 = vld [vmem:[%s9 + $0x10] sm:$0xf]
        %v2675 = vld [vmem:[%s9 + $0x14] sm:$0xf]
        %v2676 = vld [vmem:[%s9 + $0x18] sm:$0xf]
        %v2677 = vld [vmem:[%s9 + $0x1c] sm:$0xf]
        %v2678 = vld [vmem:[%s9 + $0x20] sm:$0xf]
        %v2679 = vld [vmem:[%s9 + $0x24] sm:$0xf]
        %v2680 = vld [vmem:[%s9 + $0x28] sm:$0x3]
        %v2681 = vld [vmem:[%s10] sm:$0x1]
        %v2693 = vunpack.c.l.b16 %v2670
        %v2694 = vunpack.c.l.b16 %v2671
        %v2695 = vunpack.c.l.b16 %v2672
        %v2696 = vunpack.c.l.b16 %v2673
        %v2697 = vunpack.c.l.b16 %v2674
        %v2698 = vunpack.c.l.b16 %v2675
        %v2699 = vunpack.c.l.b16 %v2676
        %v2700 = vunpack.c.l.b16 %v2677
        %v2701 = vunpack.c.l.b16 %v2678
        %v2702 = vunpack.c.l.b16 %v2679
        %v2703 = vunpack.c.l.b16 %v2680
        %v2704 = vpack.c.b16 %v2694, %v2693
        %v2705 = vpack.c.b16 %v2696, %v2695
        %v2706 = vpack.c.b16 %v2698, %v2697
        %v2707 = vpack.c.b16 %v2700, %v2699
        %v2708 = vpack.c.b16 %v2702, %v2701
        %v2709 = vpack.c.b16 %v2703, %v2703
        %v2716 = vsel %vm1564, %v2669, 0
        %v2719 = vsel %vm1568, %v2709, 0
        %2721 = vmatprep.subr.bf16.mxu0 0
        %2722 = vmatpush1.bf16.msra.mxu0 0
        %2723 = vmatprep.subr.bf16.mxu0 0
        %2724 = vmatpush1.bf16.msra.mxu0 0
        %2725 = vmatprep.subr.bf16.mxu0 0
        %2726 = vmatpush1.bf16.msra.mxu0 %v2719
        %2727 = vmatprep.subr.bf16.mxu0 0
        %2728 = vmatpush1.bf16.msra.mxu0 %v2708
        %2729 = vmatprep.subr.bf16.mxu0 0
        %2730 = vmatpush1.bf16.msra.mxu0 %v2707
        %2731 = vmatprep.subr.bf16.mxu0 0
        %2732 = vmatpush1.bf16.msra.mxu0 %v2706
        %2733 = vmatprep.subr.bf16.mxu0 0
        %2734 = vmatpush1.bf16.msra.mxu0 %v2705
        %2735 = vmatprep.subr.bf16.mxu0 0
        %2736 = vmatpush1.bf16.msra.mxu0 %v2704
        %2737 = vmatprep.subr.bf16.mxu0 0
        %2738 = vmatpush2.bf16.msra.mxu0 0
        %2739 = vmatprep.subr.bf16.mxu0 0
        %2740 = vmatpush2.bf16.msra.mxu0 0
        %2741 = vmatprep.subr.bf16.mxu0 0
        %2742 = vmatpush2.bf16.msra.mxu0 0
        %2743 = vmatprep.subr.bf16.mxu0 0
        %2744 = vmatpush2.bf16.msra.mxu0 0
        %2745 = vmatprep.subr.bf16.mxu0 0
        %2746 = vmatpush2.bf16.msra.mxu0 0
        %2747 = vmatprep.subr.bf16.mxu0 0
        %2748 = vmatpush2.bf16.msra.mxu0 0
        %2749 = vmatprep.subr.bf16.mxu0 0
        %2750 = vmatpush2.bf16.msra.mxu0 0
        %2751 = vmatprep.subr.bf16.mxu0 0
        %2752 = vmatpush2.bf16.msra.mxu0 0
        %2753 = vmatprep.mubr.bf16.mxu0 0
        %2754 = vmatmul.mubr.bf16.gmra.mxu0 %v2716
        %v2755 = vpop.f32.mrf.mxu0
        %v2756 = vadd.f32 %v2681, %v2755
        %v2757 = vpop.f32.mrf.mxu0
        %v2758 = vpop.f32.mrf.mxu0
        %v2759 = vpop.f32.mrf.mxu0
        %2760 = vdwg.mxu0
        %vm2761 = vcmask 73728
        %v2762 = vsel %vm2761, %v2756, -inf
        %2763 = vmax.xlane.f32.xlu0 %v2762
        %v2764 = vpop.xlane.xlu0 %2763
        %v2765 = vsub.f32 %v2756, %v2764
        %v2766 = vmul.f32 %v2765, 1.442695
        %v2767 = vpow.pop %v2766
        %v2768 = vsel %vm2761, %v2767, 0.0
        %2769 = vadd.xlane.f32.xlu0 %v2768
        %v2770 = vpop.xlane.xlu0 %2769
        %v2771 = vrcp.pop %v2770
        %v2772 = vmul.f32 %v2770, %v2771
        %v2773 = vsub.f32 2.0, %v2772
        %v2774 = vmul.f32 %v2771, %v2773
        %v2775 = vmul.f32 %v2767, %v2774
        %2776 = vst.msk [vmem:[%s378] sm:$0x1] %vm2761, %v2775
        %s2777 = sand.u32 %s269, 1
        %s2778 = scalar_lea.sflag [#allocation3], %s2777
        %s2779 = sand.u32 %s269, 1
        %s2780 = scalar_lea.vmem [#allocation2], %s2779
        // Predicated region
        $region65: #{lucida_forward.1} parent=63 // pred_check
          %p2781 = pneg %p279
        $region66: #{lucida_forward.1} parent=63 // pred_check_branch
          %2783 = sbr.rel (%p2781) target = $region68
        $region67: #{lucida_forward.1} parent=63 // pred_region
          %s2785 = ssub.s32 16, 16
          %2786 = vsyncadd %s2778, %s2785
          %s2787 = smul.addr %s25, 16
          %s2788 = scalar_lea.hbm %s11, %s2787
          %s2790 = sshll.u32 %s2780, 4
          %s2791 = int_to_ptr.vmem [resolvable:$true] %s2790
          %2793 = dma.vmem_to_hbm [thread:$0]  %s2791, 16, %s2788, %s2778
        $region68: #{lucida_forward.1} parent=63 // pred_fallthru
          _
      $region64: #{lucida_forward.1} parent=5 // pred_fallthru
        _
      %p2794 = scmp.le.s32.totalorder 2, %s20
      // Predicated region
      $region69: #{lucida_forward.1} parent=5 // pred_check
        %p2795 = pneg %p2794
      $region70: #{lucida_forward.1} parent=5 // pred_check_branch
        %2797 = sbr.rel (%p2795) target = $region72
      $region71: #{lucida_forward.1} parent=5 // pred_region
        %s2798 = ssub.s32 %s20, 2
        // Predicated region
        $region73: #{lucida_forward.1} parent=71 // pred_check
          %p2799 = pneg %p285
        $region74: #{lucida_forward.1} parent=71 // pred_check_branch
          %2801 = sbr.rel (%p2799) target = $region76
        $region75: #{lucida_forward.1} parent=71 // pred_region
          %s2802 = sand.u32 %s270, 1
          %s2803 = scalar_lea.sflag [#allocation3], %s2802
          %s2804 = sand.u32 %s270, 1
          %s2805 = scalar_lea.vmem [#allocation2], %s2804
          %2806 = dma.done %s2803, 16
        $region76: #{lucida_forward.1} parent=71 // pred_fallthru
          _
      $region72: #{lucida_forward.1} parent=5 // pred_fallthru
        _
    $region6: #{lucida_forward.1} parent=1 // loop_footer
      %s24 = sadd.s32 1, %s20
    $region7: #{lucida_forward.1} parent=1 // loop_footer_branch
      %19 = sbr.rel target = $region3
    $region8: #{lucida_forward.1} parent=1 // loop_exit
      _
    %2807 = vsyncpa [#allocation3], 1
    %s2808 = scalar_lea.sflag [#allocation3], 1
    %2809 = vsyncpa %s2808, 1

</llo_original>
